<compile_context>
chip_gen: v7x
topology: tpu7x:2x2x1
jax: 0.10.0
libtpu: 0.0.40
codegen_flags: <defaults>
</compile_context>

<pallas_src>
import jax
import jax.numpy as jnp
import numpy as np
from jax import lax
from jax.experimental import pallas as pl
from jax.experimental.pallas import tpu as pltpu

# ---------------- configuration (small, consistent with the module) ----------------
VOCAB = 40
EMBED = 16
HIDDEN = 32
LAYERS = 2          # kernel below is written for 2 GRU layers
BATCH = 4
DEC_SEQ = 8
ENC_SEQ = 10


# ---------------------------------- Pallas kernel ----------------------------------
def _gru_decoder_kernel(
    ids_ref,        # (T*B, 1)   int32  token ids, time-major
    ch0_ref,        # (3, B, H)  f32    [h0_l0, h0_l1, context c]
    emb_proj_ref,   # (V, 3H)    f32    embedding @ wih0_e  (gate cols already in (n,r,z) order)
    w_pack_ref,     # (5, H, 3H) f32    [wih0_c, whh0, wih1, whh1, wd_pad]
    b_pack_ref,     # (5, 3H)    f32    [bih0, bhh0, bih1, bhh1, bd_pad]
    logits_ref,     # out: (T*B, V) f32
    hout_ref,       # out: (L, B, H) f32
):
    TB = ids_ref.shape[0]
    _, B, H = ch0_ref.shape
    V = logits_ref.shape[1]
    T = TB // B

    # ---- load weights / biases once (stay resident across the fully-unrolled loop) ----
    wih0_c = w_pack_ref[0]
    whh0 = w_pack_ref[1]
    wih1 = w_pack_ref[2]
    whh1 = w_pack_ref[3]
    wd_pad = w_pack_ref[4]
    bih0 = b_pack_ref[0:1, :]
    bhh0 = b_pack_ref[1:2, :]
    bih1 = b_pack_ref[2:3, :]
    bhh1 = b_pack_ref[3:4, :]
    bd_pad = b_pack_ref[4:5, :]

    h0 = ch0_ref[0]
    h1 = ch0_ref[1]
    c = ch0_ref[2]

    # ---- fused embedding lookup: one-hot (TB,V) @ precomputed (V,3H) table ----
    onehot = (ids_ref[...] ==
              lax.broadcasted_iota(jnp.int32, (TB, V), 1)).astype(jnp.float32)
    gi0_all = jnp.dot(onehot, emb_proj_ref[...], preferred_element_type=jnp.float32)

    # time-invariant layer-0 term (context + input bias), folded into per-step slices
    # OUTSIDE the recurrence loop — nothing here is on the critical path.
    gicb = jnp.dot(c, wih0_c, preferred_element_type=jnp.float32) + bih0   # (B, 3H)
    gi0_steps = [gi0_all[t * B:(t + 1) * B, :] + gicb for t in range(T)]

    def gru_gates(gi, gh, h_prev):
        # Gate column order is (n, r, z) (reordered at pack time so the combines below
        # share lane offset 0). r/z sigmoids fused into one EUP call on the contiguous
        # [:, H:3H] slice.
        rz = jax.nn.sigmoid(gi[:, H:] + gh[:, H:])
        r = rz[:, :H]
        z = rz[:, H:]
        n = jnp.tanh(gi[:, :H] + r * gh[:, :H])
        # (1-z)*n + z*h_prev  ==  n + z*(h_prev - n)   (one fewer dependent multiply)
        return n + z * (h_prev - n)

    # Hidden states carried in registers across the fully-unrolled time loop; per-step h1
    # also kept in registers and concatenated once after the loop (no VMEM round trip).
    h1_steps = []
    for t in range(T):                                   # T static -> full unroll
        # gh1 depends only on h1_prev: issue its MXU push before layer-0 gate math.
        gh1 = jnp.dot(h1, whh1, preferred_element_type=jnp.float32) + bhh1

        # ---- layer 0 ----
        gh0 = jnp.dot(h0, whh0, preferred_element_type=jnp.float32) + bhh0
        h0 = gru_gates(gi0_steps[t], gh0, h0)

        # ---- layer 1 ----
        gi1 = jnp.dot(h0, wih1, preferred_element_type=jnp.float32) + bih1
        h1 = gru_gates(gi1, gh1, h1)

        h1_steps.append(h1)

    hout_ref[0] = h0
    hout_ref[1] = h1

    # Deferred vocab projection: single (T*B,H) @ (H,3H-padded) matmul in the epilogue.
    hseq = jnp.concatenate(h1_steps, axis=0)                               # (T*B, H)
    logits_full = jnp.dot(hseq, wd_pad, preferred_element_type=jnp.float32) + bd_pad
    logits_ref[...] = logits_full[:, :V]


# ----------------------------- X-independent weight packing --------------------------
def prepare_decoder_params(params):
    """Pack/transpose/reorder weights once; cache the result across decoder calls."""
    V, E = params["embedding"].shape
    H = params["w_hh0"].shape[-1]
    H3 = 3 * H
    assert V <= H3, "vocab must fit in the 3H-padded dense pack"

    # gate-column permutation: PyTorch order (r, z, n) -> kernel order (n, r, z)
    perm = np.concatenate([np.arange(2 * H, 3 * H), np.arange(0, H), np.arange(H, 2 * H)])

    w_ih0 = params["w_ih0"]                              # (3H, E+H)
    wih0_e = jnp.transpose(w_ih0[:, :E])[:, perm]        # (E, 3H)  embedding part
    wih0_c = jnp.transpose(w_ih0[:, E:])[:, perm]        # (H, 3H)  context part
    emb_proj = params["embedding"] @ wih0_e              # (V, 3H)  fused-lookup table

    def reord_t(w):                                      # (3H, H) -> (H, 3H) reordered
        return jnp.transpose(w)[:, perm]

    wd_pad = jnp.zeros((H, H3), jnp.float32).at[:, :V].set(jnp.transpose(params["w_dense"]))
    w_pack = jnp.stack([wih0_c,
                        reord_t(params["w_hh0"]),
                        reord_t(params["w_ih1"]),
                        reord_t(params["w_hh1"]),
                        wd_pad])                          # (5, H, 3H)

    bd_pad = jnp.zeros((H3,), jnp.float32).at[:V].set(params["b_dense"])
    b_pack = jnp.stack([params["b_ih0"][perm], params["b_hh0"][perm],
                        params["b_ih1"][perm], params["b_hh1"][perm], bd_pad])  # (5, 3H)

    return {"emb_proj": emb_proj, "w_pack": w_pack, "b_pack": b_pack}


# ------------------------------------ wrapper ---------------------------------------
def seq2seq_decoder_forward(X, state, packed):
    """X: (B, T) int32 token ids.  state = (enc_outputs, h0).  packed: prepare_decoder_params."""
    enc_outputs, h0 = state
    B, T = X.shape
    L, _, H = h0.shape
    V = packed["emb_proj"].shape[0]

    # minimal per-call glue (all tiny): time-major ids, context, stacked state
    ids2d = X.T.astype(jnp.int32).reshape(T * B, 1)
    c = enc_outputs[-1]                                       # (B, H)
    ch0 = jnp.concatenate([h0, c[None]], axis=0)              # (L+1, B, H)

    vmem = pl.BlockSpec(memory_space=pltpu.MemorySpace.VMEM)
    logits2d, h_out = pl.pallas_call(
        _gru_decoder_kernel,
        out_shape=(
            jax.ShapeDtypeStruct((T * B, V), jnp.float32),
            jax.ShapeDtypeStruct((L, B, H), jnp.float32),
        ),
        in_specs=[vmem] * 5,
        out_specs=(vmem, vmem),
    )(ids2d, ch0, packed["emb_proj"], packed["w_pack"], packed["b_pack"])

    final_output = jnp.swapaxes(logits2d.reshape(T, B, V), 0, 1)   # (B, T, V)
    return final_output, [enc_outputs, h_out]


# ---------------------------- pure-JAX reference (check) ----------------------------
def _reference_forward(X, state, params):
    enc_outputs, h0 = state
    embs = params["embedding"][X.T.astype(jnp.int32)]
    c = enc_outputs[-1]
    T, B, E = embs.shape
    H = h0.shape[-1]
    inputs = jnp.concatenate([embs, jnp.broadcast_to(c, (T, B, H))], axis=-1)

    def cell(x, h, wih, whh, bih, bhh):
        gi = x @ wih.T + bih
        gh = h @ whh.T + bhh
        ir, iz, inn = jnp.split(gi, 3, axis=-1)
        hr, hz, hn = jnp.split(gh, 3, axis=-1)
        r = jax.nn.sigmoid(ir + hr)
        z = jax.nn.sigmoid(iz + hz)
        n = jnp.tanh(inn + r * hn)
        return (1.0 - z) * n + z * h

    h = [h0[0], h0[1]]
    outs = []
    for t in range(T):
        h[0] = cell(inputs[t], h[0], params["w_ih0"], params["w_hh0"],
                    params["b_ih0"], params["b_hh0"])
        h[1] = cell(h[0], h[1], params["w_ih1"], params["w_hh1"],
                    params["b_ih1"], params["b_hh1"])
        outs.append(h[1])
    outputs = jnp.stack(outs)                                  # (T, B, H)
    logits = outputs @ params["w_dense"].T + params["b_dense"]
    return jnp.swapaxes(logits, 0, 1), jnp.stack(h)


# --------------------------------- parameter init -----------------------------------
def _xavier(key, shape):
    fan_out, fan_in = shape
    bound = float(np.sqrt(6.0 / (fan_in + fan_out)))
    return jax.random.uniform(key, shape, jnp.float32, -bound, bound)


def make_params(key):
    ks = jax.random.split(key, 16)
    inv_sqrt_h = 1.0 / float(np.sqrt(HIDDEN))
    u = lambda k, shape: jax.random.uniform(k, shape, jnp.float32, -inv_sqrt_h, inv_sqrt_h)
    return {
        "embedding": jax.random.normal(ks[0], (VOCAB, EMBED), jnp.float32),
        # GRU layer 0 (input size = EMBED + HIDDEN), xavier_uniform per init_seq2seq
        "w_ih0": _xavier(ks[1], (3 * HIDDEN, EMBED + HIDDEN)),
        "w_hh0": _xavier(ks[2], (3 * HIDDEN, HIDDEN)),
        "b_ih0": u(ks[3], (3 * HIDDEN,)),
        "b_hh0": u(ks[4], (3 * HIDDEN,)),
        # GRU layer 1 (input size = HIDDEN)
        "w_ih1": _xavier(ks[5], (3 * HIDDEN, HIDDEN)),
        "w_hh1": _xavier(ks[6], (3 * HIDDEN, HIDDEN)),
        "b_ih1": u(ks[7], (3 * HIDDEN,)),
        "b_hh1": u(ks[8], (3 * HIDDEN,)),
        # dense (LazyLinear -> (VOCAB, HIDDEN)), xavier_uniform
        "w_dense": _xavier(ks[9], (VOCAB, HIDDEN)),
        "b_dense": u(ks[10], (VOCAB,)),
    }


# -------------------------------------- main -----------------------------------------
if __name__ == "__main__":
    key = jax.random.PRNGKey(0)
    k_par, k_x, k_enc, k_h = jax.random.split(key, 4)

    params = make_params(k_par)
    packed = prepare_decoder_params(params)     # cached: does not depend on X / state

    X = jax.random.randint(k_x, (BATCH, DEC_SEQ), 0, VOCAB, dtype=jnp.int32)
    enc_outputs = jax.random.normal(k_enc, (ENC_SEQ, BATCH, HIDDEN), jnp.float32)
    h0 = jax.random.normal(k_h, (LAYERS, BATCH, HIDDEN), jnp.float32)
    state = (enc_outputs, h0)

    fwd = jax.jit(seq2seq_decoder_forward)      # single dispatch around the kernel
    final_output, (enc_out_ret, h_out) = fwd(X, state, packed)
    jax.block_until_ready(final_output)
    jax.block_until_ready(h_out)

    ref_logits, ref_h = _reference_forward(X, state, params)
    np.testing.assert_allclose(np.asarray(final_output), np.asarray(ref_logits),
                               rtol=1e-4, atol=1e-4)
    np.testing.assert_allclose(np.asarray(h_out), np.asarray(ref_h),
                               rtol=1e-4, atol=1e-4)

    assert final_output.shape == (BATCH, DEC_SEQ, VOCAB)
    assert h_out.shape == (LAYERS, BATCH, HIDDEN)
    print("KERNEL_OK")
</pallas_src>

<mosaic_0001>
module attributes {stable_mosaic.version = 11 : i64} {
  func.func @_gru_decoder_kernel(%arg0: memref<32x1xi32, #tpu.memory_space<vmem>>, %arg1: memref<3x4x32xf32, #tpu.memory_space<vmem>>, %arg2: memref<40x96xf32, #tpu.memory_space<vmem>>, %arg3: memref<5x32x96xf32, #tpu.memory_space<vmem>>, %arg4: memref<5x96xf32, #tpu.memory_space<vmem>>, %arg5: memref<32x40xf32, #tpu.memory_space<vmem>>, %arg6: memref<2x4x32xf32, #tpu.memory_space<vmem>>) attributes {dimension_semantics = [], scalar_prefetch = 0 : i64, scratch_operands = 0 : i64, tpu.core_type = #tpu.core_type<tc>} {
    %c0 = arith.constant 0 : index
    %c0_0 = arith.constant 0 : index
    %c0_1 = arith.constant 0 : index
    %0 = vector.load %arg3[%c0, %c0_0, %c0_1] : memref<5x32x96xf32, #tpu.memory_space<vmem>>, vector<1x32x96xf32>
    %1 = vector.shape_cast %0 : vector<1x32x96xf32> to vector<32x96xf32>
    %c1 = arith.constant 1 : index
    %c0_2 = arith.constant 0 : index
    %c0_3 = arith.constant 0 : index
    %2 = vector.load %arg3[%c1, %c0_2, %c0_3] : memref<5x32x96xf32, #tpu.memory_space<vmem>>, vector<1x32x96xf32>
    %3 = vector.shape_cast %2 : vector<1x32x96xf32> to vector<32x96xf32>
    %c2 = arith.constant 2 : index
    %c0_4 = arith.constant 0 : index
    %c0_5 = arith.constant 0 : index
    %4 = vector.load %arg3[%c2, %c0_4, %c0_5] : memref<5x32x96xf32, #tpu.memory_space<vmem>>, vector<1x32x96xf32>
    %5 = vector.shape_cast %4 : vector<1x32x96xf32> to vector<32x96xf32>
    %c3 = arith.constant 3 : index
    %c0_6 = arith.constant 0 : index
    %c0_7 = arith.constant 0 : index
    %6 = vector.load %arg3[%c3, %c0_6, %c0_7] : memref<5x32x96xf32, #tpu.memory_space<vmem>>, vector<1x32x96xf32>
    %7 = vector.shape_cast %6 : vector<1x32x96xf32> to vector<32x96xf32>
    %c4 = arith.constant 4 : index
    %c0_8 = arith.constant 0 : index
    %c0_9 = arith.constant 0 : index
    %8 = vector.load %arg3[%c4, %c0_8, %c0_9] : memref<5x32x96xf32, #tpu.memory_space<vmem>>, vector<1x32x96xf32>
    %9 = vector.shape_cast %8 : vector<1x32x96xf32> to vector<32x96xf32>
    %c0_10 = arith.constant 0 : index
    %c0_11 = arith.constant 0 : index
    %10 = vector.load %arg4[%c0_10, %c0_11] : memref<5x96xf32, #tpu.memory_space<vmem>>, vector<1x96xf32>
    %c1_12 = arith.constant 1 : index
    %c0_13 = arith.constant 0 : index
    %11 = vector.load %arg4[%c1_12, %c0_13] : memref<5x96xf32, #tpu.memory_space<vmem>>, vector<1x96xf32>
    %c2_14 = arith.constant 2 : index
    %c0_15 = arith.constant 0 : index
    %12 = vector.load %arg4[%c2_14, %c0_15] : memref<5x96xf32, #tpu.memory_space<vmem>>, vector<1x96xf32>
    %c3_16 = arith.constant 3 : index
    %c0_17 = arith.constant 0 : index
    %13 = vector.load %arg4[%c3_16, %c0_17] : memref<5x96xf32, #tpu.memory_space<vmem>>, vector<1x96xf32>
    %c4_18 = arith.constant 4 : index
    %c0_19 = arith.constant 0 : index
    %14 = vector.load %arg4[%c4_18, %c0_19] : memref<5x96xf32, #tpu.memory_space<vmem>>, vector<1x96xf32>
    %c0_20 = arith.constant 0 : index
    %c0_21 = arith.constant 0 : index
    %c0_22 = arith.constant 0 : index
    %15 = vector.load %arg1[%c0_20, %c0_21, %c0_22] : memref<3x4x32xf32, #tpu.memory_space<vmem>>, vector<1x4x32xf32>
    %16 = vector.shape_cast %15 : vector<1x4x32xf32> to vector<4x32xf32>
    %c1_23 = arith.constant 1 : index
    %c0_24 = arith.constant 0 : index
    %c0_25 = arith.constant 0 : index
    %17 = vector.load %arg1[%c1_23, %c0_24, %c0_25] : memref<3x4x32xf32, #tpu.memory_space<vmem>>, vector<1x4x32xf32>
    %18 = vector.shape_cast %17 : vector<1x4x32xf32> to vector<4x32xf32>
    %c2_26 = arith.constant 2 : index
    %c0_27 = arith.constant 0 : index
    %c0_28 = arith.constant 0 : index
    %19 = vector.load %arg1[%c2_26, %c0_27, %c0_28] : memref<3x4x32xf32, #tpu.memory_space<vmem>>, vector<1x4x32xf32>
    %20 = vector.shape_cast %19 : vector<1x4x32xf32> to vector<4x32xf32>
    %c0_29 = arith.constant 0 : index
    %c0_30 = arith.constant 0 : index
    %21 = vector.load %arg0[%c0_29, %c0_30] : memref<32x1xi32, #tpu.memory_space<vmem>>, vector<32x1xi32>
    %22 = tpu.iota {dimensions = array<i32: 1>} : vector<32x40xi32>
    %23 = vector.broadcast %21 : vector<32x1xi32> to vector<32x40xi32>
    %24 = arith.cmpi eq, %23, %22 : vector<32x40xi32>
    %25 = arith.extui %24 : vector<32x40xi1> to vector<32x40xi32>
    %26 = arith.sitofp %25 : vector<32x40xi32> to vector<32x40xf32>
    %c0_31 = arith.constant 0 : index
    %c0_32 = arith.constant 0 : index
    %27 = vector.load %arg2[%c0_31, %c0_32] : memref<40x96xf32, #tpu.memory_space<vmem>>, vector<40x96xf32>
    %cst = arith.constant dense<0.000000e+00> : vector<32x96xf32>
    %28 = tpu.matmul %26, %27, %cst {dimension_numbers = #tpu.dot_dimension_numbers<[1], [0], [0], [1], [0, 0, 1, 1], [], []>} : vector<32x40xf32>, vector<40x96xf32>, vector<32x96xf32> -> vector<32x96xf32>
    %cst_33 = arith.constant dense<0.000000e+00> : vector<4x96xf32>
    %29 = tpu.matmul %20, %1, %cst_33 {dimension_numbers = #tpu.dot_dimension_numbers<[1], [0], [0], [1], [0, 0, 1, 1], [], []>} : vector<4x32xf32>, vector<32x96xf32>, vector<4x96xf32> -> vector<4x96xf32>
    %30 = vector.broadcast %10 : vector<1x96xf32> to vector<4x96xf32>
    %31 = arith.addf %29, %30 : vector<4x96xf32>
    %32 = vector.extract_strided_slice %28 {offsets = [0, 0], sizes = [4, 96], strides = [1, 1]} : vector<32x96xf32> to vector<4x96xf32>
    %33 = arith.addf %32, %31 : vector<4x96xf32>
    %34 = vector.extract_strided_slice %28 {offsets = [4, 0], sizes = [4, 96], strides = [1, 1]} : vector<32x96xf32> to vector<4x96xf32>
    %35 = arith.addf %34, %31 : vector<4x96xf32>
    %36 = vector.extract_strided_slice %28 {offsets = [8, 0], sizes = [4, 96], strides = [1, 1]} : vector<32x96xf32> to vector<4x96xf32>
    %37 = arith.addf %36, %31 : vector<4x96xf32>
    %38 = vector.extract_strided_slice %28 {offsets = [12, 0], sizes = [4, 96], strides = [1, 1]} : vector<32x96xf32> to vector<4x96xf32>
    %39 = arith.addf %38, %31 : vector<4x96xf32>
    %40 = vector.extract_strided_slice %28 {offsets = [16, 0], sizes = [4, 96], strides = [1, 1]} : vector<32x96xf32> to vector<4x96xf32>
    %41 = arith.addf %40, %31 : vector<4x96xf32>
    %42 = vector.extract_strided_slice %28 {offsets = [20, 0], sizes = [4, 96], strides = [1, 1]} : vector<32x96xf32> to vector<4x96xf32>
    %43 = arith.addf %42, %31 : vector<4x96xf32>
    %44 = vector.extract_strided_slice %28 {offsets = [24, 0], sizes = [4, 96], strides = [1, 1]} : vector<32x96xf32> to vector<4x96xf32>
    %45 = arith.addf %44, %31 : vector<4x96xf32>
    %46 = vector.extract_strided_slice %28 {offsets = [28, 0], sizes = [4, 96], strides = [1, 1]} : vector<32x96xf32> to vector<4x96xf32>
    %47 = arith.addf %46, %31 : vector<4x96xf32>
    %cst_34 = arith.constant dense<0.000000e+00> : vector<4x96xf32>
    %48 = tpu.matmul %18, %7, %cst_34 {dimension_numbers = #tpu.dot_dimension_numbers<[1], [0], [0], [1], [0, 0, 1, 1], [], []>} : vector<4x32xf32>, vector<32x96xf32>, vector<4x96xf32> -> vector<4x96xf32>
    %49 = vector.broadcast %13 : vector<1x96xf32> to vector<4x96xf32>
    %50 = arith.addf %48, %49 : vector<4x96xf32>
    %cst_35 = arith.constant dense<0.000000e+00> : vector<4x96xf32>
    %51 = tpu.matmul %16, %3, %cst_35 {dimension_numbers = #tpu.dot_dimension_numbers<[1], [0], [0], [1], [0, 0, 1, 1], [], []>} : vector<4x32xf32>, vector<32x96xf32>, vector<4x96xf32> -> vector<4x96xf32>
    %52 = vector.broadcast %11 : vector<1x96xf32> to vector<4x96xf32>
    %53 = arith.addf %51, %52 : vector<4x96xf32>
    %54 = vector.extract_strided_slice %33 {offsets = [0, 32], sizes = [4, 64], strides = [1, 1]} : vector<4x96xf32> to vector<4x64xf32>
    %55 = vector.extract_strided_slice %53 {offsets = [0, 32], sizes = [4, 64], strides = [1, 1]} : vector<4x96xf32> to vector<4x64xf32>
    %56 = arith.addf %54, %55 : vector<4x64xf32>
    %57 = arith.negf %56 : vector<4x64xf32>
    %58 = math.exp %57 : vector<4x64xf32>
    %cst_36 = arith.constant 1.000000e+00 : f32
    %59 = vector.broadcast %cst_36 : f32 to vector<4x64xf32>
    %60 = arith.addf %59, %58 : vector<4x64xf32>
    %61 = arith.divf %59, %60 : vector<4x64xf32>
    %62 = vector.extract_strided_slice %61 {offsets = [0, 0], sizes = [4, 32], strides = [1, 1]} : vector<4x64xf32> to vector<4x32xf32>
    %63 = vector.extract_strided_slice %61 {offsets = [0, 32], sizes = [4, 32], strides = [1, 1]} : vector<4x64xf32> to vector<4x32xf32>
    %64 = vector.extract_strided_slice %33 {offsets = [0, 0], sizes = [4, 32], strides = [1, 1]} : vector<4x96xf32> to vector<4x32xf32>
    %65 = vector.extract_strided_slice %53 {offsets = [0, 0], sizes = [4, 32], strides = [1, 1]} : vector<4x96xf32> to vector<4x32xf32>
    %66 = arith.mulf %62, %65 : vector<4x32xf32>
    %67 = arith.addf %64, %66 : vector<4x32xf32>
    %68 = math.tanh %67 : vector<4x32xf32>
    %69 = arith.subf %16, %68 : vector<4x32xf32>
    %70 = arith.mulf %63, %69 : vector<4x32xf32>
    %71 = arith.addf %68, %70 : vector<4x32xf32>
    %cst_37 = arith.constant dense<0.000000e+00> : vector<4x96xf32>
    %72 = tpu.matmul %71, %5, %cst_37 {dimension_numbers = #tpu.dot_dimension_numbers<[1], [0], [0], [1], [0, 0, 1, 1], [], []>} : vector<4x32xf32>, vector<32x96xf32>, vector<4x96xf32> -> vector<4x96xf32>
    %73 = vector.broadcast %12 : vector<1x96xf32> to vector<4x96xf32>
    %74 = arith.addf %72, %73 : vector<4x96xf32>
    %75 = vector.extract_strided_slice %74 {offsets = [0, 32], sizes = [4, 64], strides = [1, 1]} : vector<4x96xf32> to vector<4x64xf32>
    %76 = vector.extract_strided_slice %50 {offsets = [0, 32], sizes = [4, 64], strides = [1, 1]} : vector<4x96xf32> to vector<4x64xf32>
    %77 = arith.addf %75, %76 : vector<4x64xf32>
    %78 = arith.negf %77 : vector<4x64xf32>
    %79 = math.exp %78 : vector<4x64xf32>
    %cst_38 = arith.constant 1.000000e+00 : f32
    %80 = vector.broadcast %cst_38 : f32 to vector<4x64xf32>
    %81 = arith.addf %80, %79 : vector<4x64xf32>
    %82 = arith.divf %80, %81 : vector<4x64xf32>
    %83 = vector.extract_strided_slice %82 {offsets = [0, 0], sizes = [4, 32], strides = [1, 1]} : vector<4x64xf32> to vector<4x32xf32>
    %84 = vector.extract_strided_slice %82 {offsets = [0, 32], sizes = [4, 32], strides = [1, 1]} : vector<4x64xf32> to vector<4x32xf32>
    %85 = vector.extract_strided_slice %74 {offsets = [0, 0], sizes = [4, 32], strides = [1, 1]} : vector<4x96xf32> to vector<4x32xf32>
    %86 = vector.extract_strided_slice %50 {offsets = [0, 0], sizes = [4, 32], strides = [1, 1]} : vector<4x96xf32> to vector<4x32xf32>
    %87 = arith.mulf %83, %86 : vector<4x32xf32>
    %88 = arith.addf %85, %87 : vector<4x32xf32>
    %89 = math.tanh %88 : vector<4x32xf32>
    %90 = arith.subf %18, %89 : vector<4x32xf32>
    %91 = arith.mulf %84, %90 : vector<4x32xf32>
    %92 = arith.addf %89, %91 : vector<4x32xf32>
    %cst_39 = arith.constant dense<0.000000e+00> : vector<4x96xf32>
    %93 = tpu.matmul %92, %7, %cst_39 {dimension_numbers = #tpu.dot_dimension_numbers<[1], [0], [0], [1], [0, 0, 1, 1], [], []>} : vector<4x32xf32>, vector<32x96xf32>, vector<4x96xf32> -> vector<4x96xf32>
    %94 = vector.broadcast %13 : vector<1x96xf32> to vector<4x96xf32>
    %95 = arith.addf %93, %94 : vector<4x96xf32>
    %cst_40 = arith.constant dense<0.000000e+00> : vector<4x96xf32>
    %96 = tpu.matmul %71, %3, %cst_40 {dimension_numbers = #tpu.dot_dimension_numbers<[1], [0], [0], [1], [0, 0, 1, 1], [], []>} : vector<4x32xf32>, vector<32x96xf32>, vector<4x96xf32> -> vector<4x96xf32>
    %97 = vector.broadcast %11 : vector<1x96xf32> to vector<4x96xf32>
    %98 = arith.addf %96, %97 : vector<4x96xf32>
    %99 = vector.extract_strided_slice %35 {offsets = [0, 32], sizes = [4, 64], strides = [1, 1]} : vector<4x96xf32> to vector<4x64xf32>
    %100 = vector.extract_strided_slice %98 {offsets = [0, 32], sizes = [4, 64], strides = [1, 1]} : vector<4x96xf32> to vector<4x64xf32>
    %101 = arith.addf %99, %100 : vector<4x64xf32>
    %102 = arith.negf %101 : vector<4x64xf32>
    %103 = math.exp %102 : vector<4x64xf32>
    %cst_41 = arith.constant 1.000000e+00 : f32
    %104 = vector.broadcast %cst_41 : f32 to vector<4x64xf32>
    %105 = arith.addf %104, %103 : vector<4x64xf32>
    %106 = arith.divf %104, %105 : vector<4x64xf32>
    %107 = vector.extract_strided_slice %106 {offsets = [0, 0], sizes = [4, 32], strides = [1, 1]} : vector<4x64xf32> to vector<4x32xf32>
    %108 = vector.extract_strided_slice %106 {offsets = [0, 32], sizes = [4, 32], strides = [1, 1]} : vector<4x64xf32> to vector<4x32xf32>
    %109 = vector.extract_strided_slice %35 {offsets = [0, 0], sizes = [4, 32], strides = [1, 1]} : vector<4x96xf32> to vector<4x32xf32>
    %110 = vector.extract_strided_slice %98 {offsets = [0, 0], sizes = [4, 32], strides = [1, 1]} : vector<4x96xf32> to vector<4x32xf32>
    %111 = arith.mulf %107, %110 : vector<4x32xf32>
    %112 = arith.addf %109, %111 : vector<4x32xf32>
    %113 = math.tanh %112 : vector<4x32xf32>
    %114 = arith.subf %71, %113 : vector<4x32xf32>
    %115 = arith.mulf %108, %114 : vector<4x32xf32>
    %116 = arith.addf %113, %115 : vector<4x32xf32>
    %cst_42 = arith.constant dense<0.000000e+00> : vector<4x96xf32>
    %117 = tpu.matmul %116, %5, %cst_42 {dimension_numbers = #tpu.dot_dimension_numbers<[1], [0], [0], [1], [0, 0, 1, 1], [], []>} : vector<4x32xf32>, vector<32x96xf32>, vector<4x96xf32> -> vector<4x96xf32>
    %118 = vector.broadcast %12 : vector<1x96xf32> to vector<4x96xf32>
    %119 = arith.addf %117, %118 : vector<4x96xf32>
    %120 = vector.extract_strided_slice %119 {offsets = [0, 32], sizes = [4, 64], strides = [1, 1]} : vector<4x96xf32> to vector<4x64xf32>
    %121 = vector.extract_strided_slice %95 {offsets = [0, 32], sizes = [4, 64], strides = [1, 1]} : vector<4x96xf32> to vector<4x64xf32>
    %122 = arith.addf %120, %121 : vector<4x64xf32>
    %123 = arith.negf %122 : vector<4x64xf32>
    %124 = math.exp %123 : vector<4x64xf32>
    %cst_43 = arith.constant 1.000000e+00 : f32
    %125 = vector.broadcast %cst_43 : f32 to vector<4x64xf32>
    %126 = arith.addf %125, %124 : vector<4x64xf32>
    %127 = arith.divf %125, %126 : vector<4x64xf32>
    %128 = vector.extract_strided_slice %127 {offsets = [0, 0], sizes = [4, 32], strides = [1, 1]} : vector<4x64xf32> to vector<4x32xf32>
    %129 = vector.extract_strided_slice %127 {offsets = [0, 32], sizes = [4, 32], strides = [1, 1]} : vector<4x64xf32> to vector<4x32xf32>
    %130 = vector.extract_strided_slice %119 {offsets = [0, 0], sizes = [4, 32], strides = [1, 1]} : vector<4x96xf32> to vector<4x32xf32>
    %131 = vector.extract_strided_slice %95 {offsets = [0, 0], sizes = [4, 32], strides = [1, 1]} : vector<4x96xf32> to vector<4x32xf32>
    %132 = arith.mulf %128, %131 : vector<4x32xf32>
    %133 = arith.addf %130, %132 : vector<4x32xf32>
    %134 = math.tanh %133 : vector<4x32xf32>
    %135 = arith.subf %92, %134 : vector<4x32xf32>
    %136 = arith.mulf %129, %135 : vector<4x32xf32>
    %137 = arith.addf %134, %136 : vector<4x32xf32>
    %cst_44 = arith.constant dense<0.000000e+00> : vector<4x96xf32>
    %138 = tpu.matmul %137, %7, %cst_44 {dimension_numbers = #tpu.dot_dimension_numbers<[1], [0], [0], [1], [0, 0, 1, 1], [], []>} : vector<4x32xf32>, vector<32x96xf32>, vector<4x96xf32> -> vector<4x96xf32>
    %139 = vector.broadcast %13 : vector<1x96xf32> to vector<4x96xf32>
    %140 = arith.addf %138, %139 : vector<4x96xf32>
    %cst_45 = arith.constant dense<0.000000e+00> : vector<4x96xf32>
    %141 = tpu.matmul %116, %3, %cst_45 {dimension_numbers = #tpu.dot_dimension_numbers<[1], [0], [0], [1], [0, 0, 1, 1], [], []>} : vector<4x32xf32>, vector<32x96xf32>, vector<4x96xf32> -> vector<4x96xf32>
    %142 = vector.broadcast %11 : vector<1x96xf32> to vector<4x96xf32>
    %143 = arith.addf %141, %142 : vector<4x96xf32>
    %144 = vector.extract_strided_slice %37 {offsets = [0, 32], sizes = [4, 64], strides = [1, 1]} : vector<4x96xf32> to vector<4x64xf32>
    %145 = vector.extract_strided_slice %143 {offsets = [0, 32], sizes = [4, 64], strides = [1, 1]} : vector<4x96xf32> to vector<4x64xf32>
    %146 = arith.addf %144, %145 : vector<4x64xf32>
    %147 = arith.negf %146 : vector<4x64xf32>
    %148 = math.exp %147 : vector<4x64xf32>
    %cst_46 = arith.constant 1.000000e+00 : f32
    %149 = vector.broadcast %cst_46 : f32 to vector<4x64xf32>
    %150 = arith.addf %149, %148 : vector<4x64xf32>
    %151 = arith.divf %149, %150 : vector<4x64xf32>
    %152 = vector.extract_strided_slice %151 {offsets = [0, 0], sizes = [4, 32], strides = [1, 1]} : vector<4x64xf32> to vector<4x32xf32>
    %153 = vector.extract_strided_slice %151 {offsets = [0, 32], sizes = [4, 32], strides = [1, 1]} : vector<4x64xf32> to vector<4x32xf32>
    %154 = vector.extract_strided_slice %37 {offsets = [0, 0], sizes = [4, 32], strides = [1, 1]} : vector<4x96xf32> to vector<4x32xf32>
    %155 = vector.extract_strided_slice %143 {offsets = [0, 0], sizes = [4, 32], strides = [1, 1]} : vector<4x96xf32> to vector<4x32xf32>
    %156 = arith.mulf %152, %155 : vector<4x32xf32>
    %157 = arith.addf %154, %156 : vector<4x32xf32>
    %158 = math.tanh %157 : vector<4x32xf32>
    %159 = arith.subf %116, %158 : vector<4x32xf32>
    %160 = arith.mulf %153, %159 : vector<4x32xf32>
    %161 = arith.addf %158, %160 : vector<4x32xf32>
    %cst_47 = arith.constant dense<0.000000e+00> : vector<4x96xf32>
    %162 = tpu.matmul %161, %5, %cst_47 {dimension_numbers = #tpu.dot_dimension_numbers<[1], [0], [0], [1], [0, 0, 1, 1], [], []>} : vector<4x32xf32>, vector<32x96xf32>, vector<4x96xf32> -> vector<4x96xf32>
    %163 = vector.broadcast %12 : vector<1x96xf32> to vector<4x96xf32>
    %164 = arith.addf %162, %163 : vector<4x96xf32>
    %165 = vector.extract_strided_slice %164 {offsets = [0, 32], sizes = [4, 64], strides = [1, 1]} : vector<4x96xf32> to vector<4x64xf32>
    %166 = vector.extract_strided_slice %140 {offsets = [0, 32], sizes = [4, 64], strides = [1, 1]} : vector<4x96xf32> to vector<4x64xf32>
    %167 = arith.addf %165, %166 : vector<4x64xf32>
    %168 = arith.negf %167 : vector<4x64xf32>
    %169 = math.exp %168 : vector<4x64xf32>
    %cst_48 = arith.constant 1.000000e+00 : f32
    %170 = vector.broadcast %cst_48 : f32 to vector<4x64xf32>
    %171 = arith.addf %170, %169 : vector<4x64xf32>
    %172 = arith.divf %170, %171 : vector<4x64xf32>
    %173 = vector.extract_strided_slice %172 {offsets = [0, 0], sizes = [4, 32], strides = [1, 1]} : vector<4x64xf32> to vector<4x32xf32>
    %174 = vector.extract_strided_slice %172 {offsets = [0, 32], sizes = [4, 32], strides = [1, 1]} : vector<4x64xf32> to vector<4x32xf32>
    %175 = vector.extract_strided_slice %164 {offsets = [0, 0], sizes = [4, 32], strides = [1, 1]} : vector<4x96xf32> to vector<4x32xf32>
    %176 = vector.extract_strided_slice %140 {offsets = [0, 0], sizes = [4, 32], strides = [1, 1]} : vector<4x96xf32> to vector<4x32xf32>
    %177 = arith.mulf %173, %176 : vector<4x32xf32>
    %178 = arith.addf %175, %177 : vector<4x32xf32>
    %179 = math.tanh %178 : vector<4x32xf32>
    %180 = arith.subf %137, %179 : vector<4x32xf32>
    %181 = arith.mulf %174, %180 : vector<4x32xf32>
    %182 = arith.addf %179, %181 : vector<4x32xf32>
    %cst_49 = arith.constant dense<0.000000e+00> : vector<4x96xf32>
    %183 = tpu.matmul %182, %7, %cst_49 {dimension_numbers = #tpu.dot_dimension_numbers<[1], [0], [0], [1], [0, 0, 1, 1], [], []>} : vector<4x32xf32>, vector<32x96xf32>, vector<4x96xf32> -> vector<4x96xf32>
    %184 = vector.broadcast %13 : vector<1x96xf32> to vector<4x96xf32>
    %185 = arith.addf %183, %184 : vector<4x96xf32>
    %cst_50 = arith.constant dense<0.000000e+00> : vector<4x96xf32>
    %186 = tpu.matmul %161, %3, %cst_50 {dimension_numbers = #tpu.dot_dimension_numbers<[1], [0], [0], [1], [0, 0, 1, 1], [], []>} : vector<4x32xf32>, vector<32x96xf32>, vector<4x96xf32> -> vector<4x96xf32>
    %187 = vector.broadcast %11 : vector<1x96xf32> to vector<4x96xf32>
    %188 = arith.addf %186, %187 : vector<4x96xf32>
    %189 = vector.extract_strided_slice %39 {offsets = [0, 32], sizes = [4, 64], strides = [1, 1]} : vector<4x96xf32> to vector<4x64xf32>
    %190 = vector.extract_strided_slice %188 {offsets = [0, 32], sizes = [4, 64], strides = [1, 1]} : vector<4x96xf32> to vector<4x64xf32>
    %191 = arith.addf %189, %190 : vector<4x64xf32>
    %192 = arith.negf %191 : vector<4x64xf32>
    %193 = math.exp %192 : vector<4x64xf32>
    %cst_51 = arith.constant 1.000000e+00 : f32
    %194 = vector.broadcast %cst_51 : f32 to vector<4x64xf32>
    %195 = arith.addf %194, %193 : vector<4x64xf32>
    %196 = arith.divf %194, %195 : vector<4x64xf32>
    %197 = vector.extract_strided_slice %196 {offsets = [0, 0], sizes = [4, 32], strides = [1, 1]} : vector<4x64xf32> to vector<4x32xf32>
    %198 = vector.extract_strided_slice %196 {offsets = [0, 32], sizes = [4, 32], strides = [1, 1]} : vector<4x64xf32> to vector<4x32xf32>
    %199 = vector.extract_strided_slice %39 {offsets = [0, 0], sizes = [4, 32], strides = [1, 1]} : vector<4x96xf32> to vector<4x32xf32>
    %200 = vector.extract_strided_slice %188 {offsets = [0, 0], sizes = [4, 32], strides = [1, 1]} : vector<4x96xf32> to vector<4x32xf32>
    %201 = arith.mulf %197, %200 : vector<4x32xf32>
    %202 = arith.addf %199, %201 : vector<4x32xf32>
    %203 = math.tanh %202 : vector<4x32xf32>
    %204 = arith.subf %161, %203 : vector<4x32xf32>
    %205 = arith.mulf %198, %204 : vector<4x32xf32>
    %206 = arith.addf %203, %205 : vector<4x32xf32>
    %cst_52 = arith.constant dense<0.000000e+00> : vector<4x96xf32>
    %207 = tpu.matmul %206, %5, %cst_52 {dimension_numbers = #tpu.dot_dimension_numbers<[1], [0], [0], [1], [0, 0, 1, 1], [], []>} : vector<4x32xf32>, vector<32x96xf32>, vector<4x96xf32> -> vector<4x96xf32>
    %208 = vector.broadcast %12 : vector<1x96xf32> to vector<4x96xf32>
    %209 = arith.addf %207, %208 : vector<4x96xf32>
    %210 = vector.extract_strided_slice %209 {offsets = [0, 32], sizes = [4, 64], strides = [1, 1]} : vector<4x96xf32> to vector<4x64xf32>
    %211 = vector.extract_strided_slice %185 {offsets = [0, 32], sizes = [4, 64], strides = [1, 1]} : vector<4x96xf32> to vector<4x64xf32>
    %212 = arith.addf %210, %211 : vector<4x64xf32>
    %213 = arith.negf %212 : vector<4x64xf32>
    %214 = math.exp %213 : vector<4x64xf32>
    %cst_53 = arith.constant 1.000000e+00 : f32
    %215 = vector.broadcast %cst_53 : f32 to vector<4x64xf32>
    %216 = arith.addf %215, %214 : vector<4x64xf32>
    %217 = arith.divf %215, %216 : vector<4x64xf32>
    %218 = vector.extract_strided_slice %217 {offsets = [0, 0], sizes = [4, 32], strides = [1, 1]} : vector<4x64xf32> to vector<4x32xf32>
    %219 = vector.extract_strided_slice %217 {offsets = [0, 32], sizes = [4, 32], strides = [1, 1]} : vector<4x64xf32> to vector<4x32xf32>
    %220 = vector.extract_strided_slice %209 {offsets = [0, 0], sizes = [4, 32], strides = [1, 1]} : vector<4x96xf32> to vector<4x32xf32>
    %221 = vector.extract_strided_slice %185 {offsets = [0, 0], sizes = [4, 32], strides = [1, 1]} : vector<4x96xf32> to vector<4x32xf32>
    %222 = arith.mulf %218, %221 : vector<4x32xf32>
    %223 = arith.addf %220, %222 : vector<4x32xf32>
    %224 = math.tanh %223 : vector<4x32xf32>
    %225 = arith.subf %182, %224 : vector<4x32xf32>
    %226 = arith.mulf %219, %225 : vector<4x32xf32>
    %227 = arith.addf %224, %226 : vector<4x32xf32>
    %cst_54 = arith.constant dense<0.000000e+00> : vector<4x96xf32>
    %228 = tpu.matmul %227, %7, %cst_54 {dimension_numbers = #tpu.dot_dimension_numbers<[1], [0], [0], [1], [0, 0, 1, 1], [], []>} : vector<4x32xf32>, vector<32x96xf32>, vector<4x96xf32> -> vector<4x96xf32>
    %229 = vector.broadcast %13 : vector<1x96xf32> to vector<4x96xf32>
    %230 = arith.addf %228, %229 : vector<4x96xf32>
    %cst_55 = arith.constant dense<0.000000e+00> : vector<4x96xf32>
    %231 = tpu.matmul %206, %3, %cst_55 {dimension_numbers = #tpu.dot_dimension_numbers<[1], [0], [0], [1], [0, 0, 1, 1], [], []>} : vector<4x32xf32>, vector<32x96xf32>, vector<4x96xf32> -> vector<4x96xf32>
    %232 = vector.broadcast %11 : vector<1x96xf32> to vector<4x96xf32>
    %233 = arith.addf %231, %232 : vector<4x96xf32>
    %234 = vector.extract_strided_slice %41 {offsets = [0, 32], sizes = [4, 64], strides = [1, 1]} : vector<4x96xf32> to vector<4x64xf32>
    %235 = vector.extract_strided_slice %233 {offsets = [0, 32], sizes = [4, 64], strides = [1, 1]} : vector<4x96xf32> to vector<4x64xf32>
    %236 = arith.addf %234, %235 : vector<4x64xf32>
    %237 = arith.negf %236 : vector<4x64xf32>
    %238 = math.exp %237 : vector<4x64xf32>
    %cst_56 = arith.constant 1.000000e+00 : f32
    %239 = vector.broadcast %cst_56 : f32 to vector<4x64xf32>
    %240 = arith.addf %239, %238 : vector<4x64xf32>
    %241 = arith.divf %239, %240 : vector<4x64xf32>
    %242 = vector.extract_strided_slice %241 {offsets = [0, 0], sizes = [4, 32], strides = [1, 1]} : vector<4x64xf32> to vector<4x32xf32>
    %243 = vector.extract_strided_slice %241 {offsets = [0, 32], sizes = [4, 32], strides = [1, 1]} : vector<4x64xf32> to vector<4x32xf32>
    %244 = vector.extract_strided_slice %41 {offsets = [0, 0], sizes = [4, 32], strides = [1, 1]} : vector<4x96xf32> to vector<4x32xf32>
    %245 = vector.extract_strided_slice %233 {offsets = [0, 0], sizes = [4, 32], strides = [1, 1]} : vector<4x96xf32> to vector<4x32xf32>
    %246 = arith.mulf %242, %245 : vector<4x32xf32>
    %247 = arith.addf %244, %246 : vector<4x32xf32>
    %248 = math.tanh %247 : vector<4x32xf32>
    %249 = arith.subf %206, %248 : vector<4x32xf32>
    %250 = arith.mulf %243, %249 : vector<4x32xf32>
    %251 = arith.addf %248, %250 : vector<4x32xf32>
    %cst_57 = arith.constant dense<0.000000e+00> : vector<4x96xf32>
    %252 = tpu.matmul %251, %5, %cst_57 {dimension_numbers = #tpu.dot_dimension_numbers<[1], [0], [0], [1], [0, 0, 1, 1], [], []>} : vector<4x32xf32>, vector<32x96xf32>, vector<4x96xf32> -> vector<4x96xf32>
    %253 = vector.broadcast %12 : vector<1x96xf32> to vector<4x96xf32>
    %254 = arith.addf %252, %253 : vector<4x96xf32>
    %255 = vector.extract_strided_slice %254 {offsets = [0, 32], sizes = [4, 64], strides = [1, 1]} : vector<4x96xf32> to vector<4x64xf32>
    %256 = vector.extract_strided_slice %230 {offsets = [0, 32], sizes = [4, 64], strides = [1, 1]} : vector<4x96xf32> to vector<4x64xf32>
    %257 = arith.addf %255, %256 : vector<4x64xf32>
    %258 = arith.negf %257 : vector<4x64xf32>
    %259 = math.exp %258 : vector<4x64xf32>
    %cst_58 = arith.constant 1.000000e+00 : f32
    %260 = vector.broadcast %cst_58 : f32 to vector<4x64xf32>
    %261 = arith.addf %260, %259 : vector<4x64xf32>
    %262 = arith.divf %260, %261 : vector<4x64xf32>
    %263 = vector.extract_strided_slice %262 {offsets = [0, 0], sizes = [4, 32], strides = [1, 1]} : vector<4x64xf32> to vector<4x32xf32>
    %264 = vector.extract_strided_slice %262 {offsets = [0, 32], sizes = [4, 32], strides = [1, 1]} : vector<4x64xf32> to vector<4x32xf32>
    %265 = vector.extract_strided_slice %254 {offsets = [0, 0], sizes = [4, 32], strides = [1, 1]} : vector<4x96xf32> to vector<4x32xf32>
    %266 = vector.extract_strided_slice %230 {offsets = [0, 0], sizes = [4, 32], strides = [1, 1]} : vector<4x96xf32> to vector<4x32xf32>
    %267 = arith.mulf %263, %266 : vector<4x32xf32>
    %268 = arith.addf %265, %267 : vector<4x32xf32>
    %269 = math.tanh %268 : vector<4x32xf32>
    %270 = arith.subf %227, %269 : vector<4x32xf32>
    %271 = arith.mulf %264, %270 : vector<4x32xf32>
    %272 = arith.addf %269, %271 : vector<4x32xf32>
    %cst_59 = arith.constant dense<0.000000e+00> : vector<4x96xf32>
    %273 = tpu.matmul %272, %7, %cst_59 {dimension_numbers = #tpu.dot_dimension_numbers<[1], [0], [0], [1], [0, 0, 1, 1], [], []>} : vector<4x32xf32>, vector<32x96xf32>, vector<4x96xf32> -> vector<4x96xf32>
    %274 = vector.broadcast %13 : vector<1x96xf32> to vector<4x96xf32>
    %275 = arith.addf %273, %274 : vector<4x96xf32>
    %cst_60 = arith.constant dense<0.000000e+00> : vector<4x96xf32>
    %276 = tpu.matmul %251, %3, %cst_60 {dimension_numbers = #tpu.dot_dimension_numbers<[1], [0], [0], [1], [0, 0, 1, 1], [], []>} : vector<4x32xf32>, vector<32x96xf32>, vector<4x96xf32> -> vector<4x96xf32>
    %277 = vector.broadcast %11 : vector<1x96xf32> to vector<4x96xf32>
    %278 = arith.addf %276, %277 : vector<4x96xf32>
    %279 = vector.extract_strided_slice %43 {offsets = [0, 32], sizes = [4, 64], strides = [1, 1]} : vector<4x96xf32> to vector<4x64xf32>
    %280 = vector.extract_strided_slice %278 {offsets = [0, 32], sizes = [4, 64], strides = [1, 1]} : vector<4x96xf32> to vector<4x64xf32>
    %281 = arith.addf %279, %280 : vector<4x64xf32>
    %282 = arith.negf %281 : vector<4x64xf32>
    %283 = math.exp %282 : vector<4x64xf32>
    %cst_61 = arith.constant 1.000000e+00 : f32
    %284 = vector.broadcast %cst_61 : f32 to vector<4x64xf32>
    %285 = arith.addf %284, %283 : vector<4x64xf32>
    %286 = arith.divf %284, %285 : vector<4x64xf32>
    %287 = vector.extract_strided_slice %286 {offsets = [0, 0], sizes = [4, 32], strides = [1, 1]} : vector<4x64xf32> to vector<4x32xf32>
    %288 = vector.extract_strided_slice %286 {offsets = [0, 32], sizes = [4, 32], strides = [1, 1]} : vector<4x64xf32> to vector<4x32xf32>
    %289 = vector.extract_strided_slice %43 {offsets = [0, 0], sizes = [4, 32], strides = [1, 1]} : vector<4x96xf32> to vector<4x32xf32>
    %290 = vector.extract_strided_slice %278 {offsets = [0, 0], sizes = [4, 32], strides = [1, 1]} : vector<4x96xf32> to vector<4x32xf32>
    %291 = arith.mulf %287, %290 : vector<4x32xf32>
    %292 = arith.addf %289, %291 : vector<4x32xf32>
    %293 = math.tanh %292 : vector<4x32xf32>
    %294 = arith.subf %251, %293 : vector<4x32xf32>
    %295 = arith.mulf %288, %294 : vector<4x32xf32>
    %296 = arith.addf %293, %295 : vector<4x32xf32>
    %cst_62 = arith.constant dense<0.000000e+00> : vector<4x96xf32>
    %297 = tpu.matmul %296, %5, %cst_62 {dimension_numbers = #tpu.dot_dimension_numbers<[1], [0], [0], [1], [0, 0, 1, 1], [], []>} : vector<4x32xf32>, vector<32x96xf32>, vector<4x96xf32> -> vector<4x96xf32>
    %298 = vector.broadcast %12 : vector<1x96xf32> to vector<4x96xf32>
    %299 = arith.addf %297, %298 : vector<4x96xf32>
    %300 = vector.extract_strided_slice %299 {offsets = [0, 32], sizes = [4, 64], strides = [1, 1]} : vector<4x96xf32> to vector<4x64xf32>
    %301 = vector.extract_strided_slice %275 {offsets = [0, 32], sizes = [4, 64], strides = [1, 1]} : vector<4x96xf32> to vector<4x64xf32>
    %302 = arith.addf %300, %301 : vector<4x64xf32>
    %303 = arith.negf %302 : vector<4x64xf32>
    %304 = math.exp %303 : vector<4x64xf32>
    %cst_63 = arith.constant 1.000000e+00 : f32
    %305 = vector.broadcast %cst_63 : f32 to vector<4x64xf32>
    %306 = arith.addf %305, %304 : vector<4x64xf32>
    %307 = arith.divf %305, %306 : vector<4x64xf32>
    %308 = vector.extract_strided_slice %307 {offsets = [0, 0], sizes = [4, 32], strides = [1, 1]} : vector<4x64xf32> to vector<4x32xf32>
    %309 = vector.extract_strided_slice %307 {offsets = [0, 32], sizes = [4, 32], strides = [1, 1]} : vector<4x64xf32> to vector<4x32xf32>
    %310 = vector.extract_strided_slice %299 {offsets = [0, 0], sizes = [4, 32], strides = [1, 1]} : vector<4x96xf32> to vector<4x32xf32>
    %311 = vector.extract_strided_slice %275 {offsets = [0, 0], sizes = [4, 32], strides = [1, 1]} : vector<4x96xf32> to vector<4x32xf32>
    %312 = arith.mulf %308, %311 : vector<4x32xf32>
    %313 = arith.addf %310, %312 : vector<4x32xf32>
    %314 = math.tanh %313 : vector<4x32xf32>
    %315 = arith.subf %272, %314 : vector<4x32xf32>
    %316 = arith.mulf %309, %315 : vector<4x32xf32>
    %317 = arith.addf %314, %316 : vector<4x32xf32>
    %cst_64 = arith.constant dense<0.000000e+00> : vector<4x96xf32>
    %318 = tpu.matmul %317, %7, %cst_64 {dimension_numbers = #tpu.dot_dimension_numbers<[1], [0], [0], [1], [0, 0, 1, 1], [], []>} : vector<4x32xf32>, vector<32x96xf32>, vector<4x96xf32> -> vector<4x96xf32>
    %319 = vector.broadcast %13 : vector<1x96xf32> to vector<4x96xf32>
    %320 = arith.addf %318, %319 : vector<4x96xf32>
    %cst_65 = arith.constant dense<0.000000e+00> : vector<4x96xf32>
    %321 = tpu.matmul %296, %3, %cst_65 {dimension_numbers = #tpu.dot_dimension_numbers<[1], [0], [0], [1], [0, 0, 1, 1], [], []>} : vector<4x32xf32>, vector<32x96xf32>, vector<4x96xf32> -> vector<4x96xf32>
    %322 = vector.broadcast %11 : vector<1x96xf32> to vector<4x96xf32>
    %323 = arith.addf %321, %322 : vector<4x96xf32>
    %324 = vector.extract_strided_slice %45 {offsets = [0, 32], sizes = [4, 64], strides = [1, 1]} : vector<4x96xf32> to vector<4x64xf32>
    %325 = vector.extract_strided_slice %323 {offsets = [0, 32], sizes = [4, 64], strides = [1, 1]} : vector<4x96xf32> to vector<4x64xf32>
    %326 = arith.addf %324, %325 : vector<4x64xf32>
    %327 = arith.negf %326 : vector<4x64xf32>
    %328 = math.exp %327 : vector<4x64xf32>
    %cst_66 = arith.constant 1.000000e+00 : f32
    %329 = vector.broadcast %cst_66 : f32 to vector<4x64xf32>
    %330 = arith.addf %329, %328 : vector<4x64xf32>
    %331 = arith.divf %329, %330 : vector<4x64xf32>
    %332 = vector.extract_strided_slice %331 {offsets = [0, 0], sizes = [4, 32], strides = [1, 1]} : vector<4x64xf32> to vector<4x32xf32>
    %333 = vector.extract_strided_slice %331 {offsets = [0, 32], sizes = [4, 32], strides = [1, 1]} : vector<4x64xf32> to vector<4x32xf32>
    %334 = vector.extract_strided_slice %45 {offsets = [0, 0], sizes = [4, 32], strides = [1, 1]} : vector<4x96xf32> to vector<4x32xf32>
    %335 = vector.extract_strided_slice %323 {offsets = [0, 0], sizes = [4, 32], strides = [1, 1]} : vector<4x96xf32> to vector<4x32xf32>
    %336 = arith.mulf %332, %335 : vector<4x32xf32>
    %337 = arith.addf %334, %336 : vector<4x32xf32>
    %338 = math.tanh %337 : vector<4x32xf32>
    %339 = arith.subf %296, %338 : vector<4x32xf32>
    %340 = arith.mulf %333, %339 : vector<4x32xf32>
    %341 = arith.addf %338, %340 : vector<4x32xf32>
    %cst_67 = arith.constant dense<0.000000e+00> : vector<4x96xf32>
    %342 = tpu.matmul %341, %5, %cst_67 {dimension_numbers = #tpu.dot_dimension_numbers<[1], [0], [0], [1], [0, 0, 1, 1], [], []>} : vector<4x32xf32>, vector<32x96xf32>, vector<4x96xf32> -> vector<4x96xf32>
    %343 = vector.broadcast %12 : vector<1x96xf32> to vector<4x96xf32>
    %344 = arith.addf %342, %343 : vector<4x96xf32>
    %345 = vector.extract_strided_slice %344 {offsets = [0, 32], sizes = [4, 64], strides = [1, 1]} : vector<4x96xf32> to vector<4x64xf32>
    %346 = vector.extract_strided_slice %320 {offsets = [0, 32], sizes = [4, 64], strides = [1, 1]} : vector<4x96xf32> to vector<4x64xf32>
    %347 = arith.addf %345, %346 : vector<4x64xf32>
    %348 = arith.negf %347 : vector<4x64xf32>
    %349 = math.exp %348 : vector<4x64xf32>
    %cst_68 = arith.constant 1.000000e+00 : f32
    %350 = vector.broadcast %cst_68 : f32 to vector<4x64xf32>
    %351 = arith.addf %350, %349 : vector<4x64xf32>
    %352 = arith.divf %350, %351 : vector<4x64xf32>
    %353 = vector.extract_strided_slice %352 {offsets = [0, 0], sizes = [4, 32], strides = [1, 1]} : vector<4x64xf32> to vector<4x32xf32>
    %354 = vector.extract_strided_slice %352 {offsets = [0, 32], sizes = [4, 32], strides = [1, 1]} : vector<4x64xf32> to vector<4x32xf32>
    %355 = vector.extract_strided_slice %344 {offsets = [0, 0], sizes = [4, 32], strides = [1, 1]} : vector<4x96xf32> to vector<4x32xf32>
    %356 = vector.extract_strided_slice %320 {offsets = [0, 0], sizes = [4, 32], strides = [1, 1]} : vector<4x96xf32> to vector<4x32xf32>
    %357 = arith.mulf %353, %356 : vector<4x32xf32>
    %358 = arith.addf %355, %357 : vector<4x32xf32>
    %359 = math.tanh %358 : vector<4x32xf32>
    %360 = arith.subf %317, %359 : vector<4x32xf32>
    %361 = arith.mulf %354, %360 : vector<4x32xf32>
    %362 = arith.addf %359, %361 : vector<4x32xf32>
    %cst_69 = arith.constant dense<0.000000e+00> : vector<4x96xf32>
    %363 = tpu.matmul %362, %7, %cst_69 {dimension_numbers = #tpu.dot_dimension_numbers<[1], [0], [0], [1], [0, 0, 1, 1], [], []>} : vector<4x32xf32>, vector<32x96xf32>, vector<4x96xf32> -> vector<4x96xf32>
    %364 = vector.broadcast %13 : vector<1x96xf32> to vector<4x96xf32>
    %365 = arith.addf %363, %364 : vector<4x96xf32>
    %cst_70 = arith.constant dense<0.000000e+00> : vector<4x96xf32>
    %366 = tpu.matmul %341, %3, %cst_70 {dimension_numbers = #tpu.dot_dimension_numbers<[1], [0], [0], [1], [0, 0, 1, 1], [], []>} : vector<4x32xf32>, vector<32x96xf32>, vector<4x96xf32> -> vector<4x96xf32>
    %367 = vector.broadcast %11 : vector<1x96xf32> to vector<4x96xf32>
    %368 = arith.addf %366, %367 : vector<4x96xf32>
    %369 = vector.extract_strided_slice %47 {offsets = [0, 32], sizes = [4, 64], strides = [1, 1]} : vector<4x96xf32> to vector<4x64xf32>
    %370 = vector.extract_strided_slice %368 {offsets = [0, 32], sizes = [4, 64], strides = [1, 1]} : vector<4x96xf32> to vector<4x64xf32>
    %371 = arith.addf %369, %370 : vector<4x64xf32>
    %372 = arith.negf %371 : vector<4x64xf32>
    %373 = math.exp %372 : vector<4x64xf32>
    %cst_71 = arith.constant 1.000000e+00 : f32
    %374 = vector.broadcast %cst_71 : f32 to vector<4x64xf32>
    %375 = arith.addf %374, %373 : vector<4x64xf32>
    %376 = arith.divf %374, %375 : vector<4x64xf32>
    %377 = vector.extract_strided_slice %376 {offsets = [0, 0], sizes = [4, 32], strides = [1, 1]} : vector<4x64xf32> to vector<4x32xf32>
    %378 = vector.extract_strided_slice %376 {offsets = [0, 32], sizes = [4, 32], strides = [1, 1]} : vector<4x64xf32> to vector<4x32xf32>
    %379 = vector.extract_strided_slice %47 {offsets = [0, 0], sizes = [4, 32], strides = [1, 1]} : vector<4x96xf32> to vector<4x32xf32>
    %380 = vector.extract_strided_slice %368 {offsets = [0, 0], sizes = [4, 32], strides = [1, 1]} : vector<4x96xf32> to vector<4x32xf32>
    %381 = arith.mulf %377, %380 : vector<4x32xf32>
    %382 = arith.addf %379, %381 : vector<4x32xf32>
    %383 = math.tanh %382 : vector<4x32xf32>
    %384 = arith.subf %341, %383 : vector<4x32xf32>
    %385 = arith.mulf %378, %384 : vector<4x32xf32>
    %386 = arith.addf %383, %385 : vector<4x32xf32>
    %cst_72 = arith.constant dense<0.000000e+00> : vector<4x96xf32>
    %387 = tpu.matmul %386, %5, %cst_72 {dimension_numbers = #tpu.dot_dimension_numbers<[1], [0], [0], [1], [0, 0, 1, 1], [], []>} : vector<4x32xf32>, vector<32x96xf32>, vector<4x96xf32> -> vector<4x96xf32>
    %388 = vector.broadcast %12 : vector<1x96xf32> to vector<4x96xf32>
    %389 = arith.addf %387, %388 : vector<4x96xf32>
    %390 = vector.extract_strided_slice %389 {offsets = [0, 32], sizes = [4, 64], strides = [1, 1]} : vector<4x96xf32> to vector<4x64xf32>
    %391 = vector.extract_strided_slice %365 {offsets = [0, 32], sizes = [4, 64], strides = [1, 1]} : vector<4x96xf32> to vector<4x64xf32>
    %392 = arith.addf %390, %391 : vector<4x64xf32>
    %393 = arith.negf %392 : vector<4x64xf32>
    %394 = math.exp %393 : vector<4x64xf32>
    %cst_73 = arith.constant 1.000000e+00 : f32
    %395 = vector.broadcast %cst_73 : f32 to vector<4x64xf32>
    %396 = arith.addf %395, %394 : vector<4x64xf32>
    %397 = arith.divf %395, %396 : vector<4x64xf32>
    %398 = vector.extract_strided_slice %397 {offsets = [0, 0], sizes = [4, 32], strides = [1, 1]} : vector<4x64xf32> to vector<4x32xf32>
    %399 = vector.extract_strided_slice %397 {offsets = [0, 32], sizes = [4, 32], strides = [1, 1]} : vector<4x64xf32> to vector<4x32xf32>
    %400 = vector.extract_strided_slice %389 {offsets = [0, 0], sizes = [4, 32], strides = [1, 1]} : vector<4x96xf32> to vector<4x32xf32>
    %401 = vector.extract_strided_slice %365 {offsets = [0, 0], sizes = [4, 32], strides = [1, 1]} : vector<4x96xf32> to vector<4x32xf32>
    %402 = arith.mulf %398, %401 : vector<4x32xf32>
    %403 = arith.addf %400, %402 : vector<4x32xf32>
    %404 = math.tanh %403 : vector<4x32xf32>
    %405 = arith.subf %362, %404 : vector<4x32xf32>
    %406 = arith.mulf %399, %405 : vector<4x32xf32>
    %407 = arith.addf %404, %406 : vector<4x32xf32>
    %c0_74 = arith.constant 0 : index
    %c0_75 = arith.constant 0 : index
    %c0_76 = arith.constant 0 : index
    %408 = vector.load %arg6[%c0_74, %c0_75, %c0_76] : memref<2x4x32xf32, #tpu.memory_space<vmem>>, vector<1x4x32xf32>
    %409 = vector.shape_cast %408 : vector<1x4x32xf32> to vector<4x32xf32>
    %410 = vector.shape_cast %386 : vector<4x32xf32> to vector<1x4x32xf32>
    tpu.vector_store %arg6[%c0_74, %c0_75, %c0_76], %410 {strides = array<i32>} : memref<2x4x32xf32, #tpu.memory_space<vmem>>, vector<1x4x32xf32>,
    %c1_77 = arith.constant 1 : index
    %c0_78 = arith.constant 0 : index
    %c0_79 = arith.constant 0 : index
    %411 = vector.load %arg6[%c1_77, %c0_78, %c0_79] : memref<2x4x32xf32, #tpu.memory_space<vmem>>, vector<1x4x32xf32>
    %412 = vector.shape_cast %411 : vector<1x4x32xf32> to vector<4x32xf32>
    %413 = vector.shape_cast %407 : vector<4x32xf32> to vector<1x4x32xf32>
    tpu.vector_store %arg6[%c1_77, %c0_78, %c0_79], %413 {strides = array<i32>} : memref<2x4x32xf32, #tpu.memory_space<vmem>>, vector<1x4x32xf32>,
    %414 = tpu.concatenate %92, %137, %182, %227, %272, %317, %362, %407 in 0 : vector<4x32xf32>, vector<4x32xf32>, vector<4x32xf32>, vector<4x32xf32>, vector<4x32xf32>, vector<4x32xf32>, vector<4x32xf32>, vector<4x32xf32> -> vector<32x32xf32>
    %cst_80 = arith.constant dense<0.000000e+00> : vector<32x96xf32>
    %415 = tpu.matmul %414, %9, %cst_80 {dimension_numbers = #tpu.dot_dimension_numbers<[1], [0], [0], [1], [0, 0, 1, 1], [], []>} : vector<32x32xf32>, vector<32x96xf32>, vector<32x96xf32> -> vector<32x96xf32>
    %416 = vector.broadcast %14 : vector<1x96xf32> to vector<32x96xf32>
    %417 = arith.addf %415, %416 : vector<32x96xf32>
    %418 = vector.extract_strided_slice %417 {offsets = [0, 0], sizes = [32, 40], strides = [1, 1]} : vector<32x96xf32> to vector<32x40xf32>
    %c0_81 = arith.constant 0 : index
    %c0_82 = arith.constant 0 : index
    %419 = vector.load %arg5[%c0_81, %c0_82] : memref<32x40xf32, #tpu.memory_space<vmem>>, vector<32x40xf32>
    tpu.vector_store %arg5[%c0_81, %c0_82], %418 {strides = array<i32>} : memref<32x40xf32, #tpu.memory_space<vmem>>, vector<32x40xf32>,
    return
  }
}

</mosaic_0001>

<llo_original>
// kernel: seq2seq_decoder_forward.1
$region0: #{seq2seq_decoder_forward.1}
  #allocation0 [shape = 'u32[]', space=smem, size = 0x4, offset = 0x4, fixed_abs, tag = 'smem constant byte address 0x4 - core index']
  #allocation1 [shape = 'u32[144,128]{1,0:T(1,128)}', space=vmem, size = 0x12000, scoped, tag = 'internal scratch']
  %s0 = inlined_call_operand.vmem [shape: s32[32,1], index: 0, kind: input, shape index: {}]
  %s1 = inlined_call_operand.vmem [shape: f32[3,4,32], index: 1, kind: input, shape index: {}]
  %s2 = inlined_call_operand.vmem [shape: f32[40,96], index: 2, kind: input, shape index: {}]
  %s3 = inlined_call_operand.hbm [shape: f32[5,32,96], index: 3, kind: input, shape index: {}]
  %s4 = inlined_call_operand.vmem [shape: f32[5,96], index: 4, kind: input, shape index: {}]
  %s5 = inlined_call_operand.vmem [shape: f32[32,40], index: 5, kind: output, shape index: {0}]
  %s6 = inlined_call_operand.hbm [shape: f32[2,4,32], index: 6, kind: output, shape index: {1}]
  %7 = xla_tuple %s5, %s6
  %s8 = sld [smem:[#allocation0]]
  $region42: #{seq2seq_decoder_forward.1} parent=0
    _
  %s10 = ssub.s32 1, %s8
  %s11 = scalar_select 0, %s10, %s8
  $region1: #{seq2seq_decoder_forward.1} parent=0
    #allocation2 [shape = 'u8[81920]{0}', space=vmem, size = 0x14000, scoped, tag = 'input window, operand 3, single buffered']
    #allocation3 [shape = 's32[1]{0}', space=sflag, size = 0x4, scoped, tag = 'scoped memory for seq2seq_decoder_forward.1']
    #allocation4 [shape = 's32[1]{0}', space=sflag, size = 0x4, scoped, tag = 'scoped memory for seq2seq_decoder_forward.1']
    #allocation5 [shape = 'u8[4096]{0}', space=vmem, size = 0x1000, scoped, tag = 'output window, operand 1, single buffered']
    %12 = vsyncpa [#allocation3], 0
    %13 = vsyncpa [#allocation4], 0
    // Predicated region
    $region2: #{seq2seq_decoder_forward.1} parent=1 // pred_check
      _
    $region3: #{seq2seq_decoder_forward.1} parent=1 // pred_check_branch
      %15 = sbr.rel (0) target = $region5
    $region4: #{seq2seq_decoder_forward.1} parent=1 // pred_region
      _
    $region5: #{seq2seq_decoder_forward.1} parent=1 // pred_fallthru
      _
    // Predicated region
    $region6: #{seq2seq_decoder_forward.1} parent=1 // pred_check
      _
    $region7: #{seq2seq_decoder_forward.1} parent=1 // pred_check_branch
      %17 = sbr.rel (0) target = $region9
    $region8: #{seq2seq_decoder_forward.1} parent=1 // pred_region
      _
    $region9: #{seq2seq_decoder_forward.1} parent=1 // pred_fallthru
      _
    // Predicated region
    $region10: #{seq2seq_decoder_forward.1} parent=1 // pred_check
      _
    $region11: #{seq2seq_decoder_forward.1} parent=1 // pred_check_branch
      %19 = sbr.rel (0) target = $region13
    $region12: #{seq2seq_decoder_forward.1} parent=1 // pred_region
      _
    $region13: #{seq2seq_decoder_forward.1} parent=1 // pred_fallthru
      _
    // Predicated region
    $region14: #{seq2seq_decoder_forward.1} parent=1 // pred_check
      _
    $region15: #{seq2seq_decoder_forward.1} parent=1 // pred_check_branch
      %21 = sbr.rel (0) target = $region17
    $region16: #{seq2seq_decoder_forward.1} parent=1 // pred_region
      %s23 = ssub.s32 2560, 2560
      %24 = vsyncadd [#allocation3], %s23
      %s25 = sshll.u32 [#allocation2], 4
      %s26 = int_to_ptr.vmem [resolvable:$true] %s25
      %31 = dma.hbm_to_vmem [thread:$0]  %s3, 2560, %s26, [#allocation3], 128, 128, 8
    $region17: #{seq2seq_decoder_forward.1} parent=1 // pred_fallthru
      _
    // Predicated region
    $region18: #{seq2seq_decoder_forward.1} parent=1 // pred_check
      _
    $region19: #{seq2seq_decoder_forward.1} parent=1 // pred_check_branch
      %33 = sbr.rel (0) target = $region21
    $region20: #{seq2seq_decoder_forward.1} parent=1 // pred_region
      _
    $region21: #{seq2seq_decoder_forward.1} parent=1 // pred_fallthru
      _
    // Predicated region
    $region22: #{seq2seq_decoder_forward.1} parent=1 // pred_check
      _
    $region23: #{seq2seq_decoder_forward.1} parent=1 // pred_check_branch
      %35 = sbr.rel (0) target = $region25
    $region24: #{seq2seq_decoder_forward.1} parent=1 // pred_region
      %36 = dma.done [#allocation3], 2560
    $region25: #{seq2seq_decoder_forward.1} parent=1 // pred_fallthru
      _
    %v37 = vld [vmem:[#allocation2] sm:$0xff]
    %v38 = vld [vmem:[#allocation2 + $0x8] sm:$0xff]
    %v39 = vld [vmem:[#allocation2 + $0x10] sm:$0xff]
    %v40 = vld [vmem:[#allocation2 + $0x18] sm:$0xff]
    %s41 = scalar_lea.vmem [#allocation2], 32
    %v42 = vld [vmem:[%s41] sm:$0xff]
    %v43 = vld [vmem:[%s41 + $0x8] sm:$0xff]
    %v44 = vld [vmem:[%s41 + $0x10] sm:$0xff]
    %v45 = vld [vmem:[%s41 + $0x18] sm:$0xff]
    %s46 = scalar_lea.vmem [#allocation2], 64
    %v47 = vld [vmem:[%s46] sm:$0xff]
    %v48 = vld [vmem:[%s46 + $0x8] sm:$0xff]
    %v49 = vld [vmem:[%s46 + $0x10] sm:$0xff]
    %v50 = vld [vmem:[%s46 + $0x18] sm:$0xff]
    %s51 = scalar_lea.vmem [#allocation2], 96
    %v52 = vld [vmem:[%s51] sm:$0xff]
    %v53 = vld [vmem:[%s51 + $0x8] sm:$0xff]
    %v54 = vld [vmem:[%s51 + $0x10] sm:$0xff]
    %v55 = vld [vmem:[%s51 + $0x18] sm:$0xff]
    %s56 = scalar_lea.vmem [#allocation2], 128
    %v57 = vld [vmem:[%s56] sm:$0xff]
    %v58 = vld [vmem:[%s56 + $0x8] sm:$0xff]
    %v59 = vld [vmem:[%s56 + $0x10] sm:$0xff]
    %v60 = vld [vmem:[%s56 + $0x18] sm:$0xff]
    %v61 = vld [vmem:[%s4] sm:$0x1]
    %v62 = vld [vmem:[%s4 + $0x1] sm:$0x1]
    %v63 = vld [vmem:[%s4 + $0x2] sm:$0x1]
    %v64 = vld [vmem:[%s4 + $0x3] sm:$0x1]
    %v65 = vld [vmem:[%s4 + $0x4] sm:$0x1]
    %v66 = vld [vmem:[%s1] sm:$0xf]
    %s67 = scalar_lea.vmem %s1, 4
    %v68 = vld [vmem:[%s67] sm:$0xf]
    %s69 = scalar_lea.vmem %s1, 8
    %v70 = vld [vmem:[%s69] sm:$0xf]
    %v71 = vld [vmem:[%s0] sm:$0xff]
    %v72 = vld [vmem:[%s0 + $0x8] sm:$0xff]
    %v73 = vld [vmem:[%s0 + $0x10] sm:$0xff]
    %v74 = vld [vmem:[%s0 + $0x18] sm:$0xff]
    %v75 = vlaneseq
    %v76 = vand.u32 %v75, 127
    %77 = vset.pattern.permute.xlu0 0
    %78 = vperm.xlu0 %77, %v71
    %v79 = vpop.permute.xlu0 %78
    %80 = vset.pattern.permute.xlu0 0
    %81 = vperm.xlu0 %80, %v72
    %v82 = vpop.permute.xlu0 %81
    %83 = vset.pattern.permute.xlu0 0
    %84 = vperm.xlu0 %83, %v73
    %v85 = vpop.permute.xlu0 %84
    %86 = vset.pattern.permute.xlu0 0
    %87 = vperm.xlu0 %86, %v74
    %v88 = vpop.permute.xlu0 %87
    %vm89 = vcmp.eq.s32.totalorder %v79, %v76
    %vm90 = vcmp.eq.s32.totalorder %v82, %v76
    %vm91 = vcmp.eq.s32.totalorder %v85, %v76
    %vm92 = vcmp.eq.s32.totalorder %v88, %v76
    %v93 = vsel %vm89, 1, 0
    %v94 = vsel %vm90, 1, 0
    %v95 = vsel %vm91, 1, 0
    %v96 = vsel %vm92, 1, 0
    %v97 = vcvt.s32.f32 %v93
    %v98 = vcvt.s32.f32 %v94
    %v99 = vcvt.s32.f32 %v95
    %v100 = vcvt.s32.f32 %v96
    %v101 = vld [vmem:[%s2] sm:$0xff]
    %v102 = vld [vmem:[%s2 + $0x8] sm:$0xff]
    %v103 = vld [vmem:[%s2 + $0x10] sm:$0xff]
    %v104 = vld [vmem:[%s2 + $0x18] sm:$0xff]
    %v105 = vld [vmem:[%s2 + $0x20] sm:$0xff]
    %vm106 = vcmask 326656
    %v108 = vsel %vm106, %v97, 0
    %v111 = vsel %vm106, %v98, 0
    %v114 = vsel %vm106, %v99, 0
    %v117 = vsel %vm106, %v100, 0
    %119 = vmatprep.subr.mxu0 0.0
    %120 = vmatpush1.msra.mxu0 %v101
    %121 = vmatprep.subr.mxu0 0.0
    %122 = vmatpush1.msra.mxu0 %v102
    %123 = vmatprep.subr.mxu0 0.0
    %124 = vmatpush1.msra.mxu0 %v103
    %125 = vmatprep.subr.mxu0 0.0
    %126 = vmatpush1.msra.mxu0 %v104
    %127 = vmatprep.subr.mxu0 0.0
    %128 = vmatpush1.msra.mxu0 %v105
    %129 = vmatprep.subr.mxu0 0.0
    %130 = vmatpush1.msra.mxu0 0.0
    %131 = vmatprep.subr.mxu0 0.0
    %132 = vmatpush1.msra.mxu0 0.0
    %133 = vmatprep.subr.mxu0 0.0
    %134 = vmatpush1.msra.mxu0 0.0
    %135 = vmatprep.subr.mxu0 0.0
    %136 = vmatpush1.msra.mxu0 0.0
    %137 = vmatprep.subr.mxu0 0.0
    %138 = vmatpush1.msra.mxu0 0.0
    %139 = vmatprep.subr.mxu0 0.0
    %140 = vmatpush1.msra.mxu0 0.0
    %141 = vmatprep.subr.mxu0 0.0
    %142 = vmatpush1.msra.mxu0 0.0
    %143 = vmatprep.subr.mxu0 0.0
    %144 = vmatpush1.msra.mxu0 0.0
    %145 = vmatprep.subr.mxu0 0.0
    %146 = vmatpush1.msra.mxu0 0.0
    %147 = vmatprep.subr.mxu0 0.0
    %148 = vmatpush1.msra.mxu0 0.0
    %149 = vmatprep.subr.mxu0 0.0
    %150 = vmatpush1.msra.mxu0 0.0
    %151 = vmatprep.subr.mxu0 0.0
    %152 = vmatpush1.msra.mxu0 0.0
    %153 = vmatprep.subr.mxu0 0.0
    %154 = vmatpush1.msra.mxu0 0.0
    %155 = vmatprep.subr.mxu0 0.0
    %156 = vmatpush1.msra.mxu0 0.0
    %157 = vmatprep.subr.mxu0 0.0
    %158 = vmatpush1.msra.mxu0 0.0
    %159 = vmatprep.subr.mxu0 0.0
    %160 = vmatpush1.msra.mxu0 0.0
    %161 = vmatprep.subr.mxu0 0.0
    %162 = vmatpush1.msra.mxu0 0.0
    %163 = vmatprep.subr.mxu0 0.0
    %164 = vmatpush1.msra.mxu0 0.0
    %165 = vmatprep.subr.mxu0 0.0
    %166 = vmatpush1.msra.mxu0 0.0
    %167 = vmatprep.subr.mxu0 0.0
    %168 = vmatpush1.msra.mxu0 0.0
    %169 = vmatprep.subr.mxu0 0.0
    %170 = vmatpush1.msra.mxu0 0.0
    %171 = vmatprep.subr.mxu0 0.0
    %172 = vmatpush1.msra.mxu0 0.0
    %173 = vmatprep.subr.mxu0 0.0
    %174 = vmatpush1.msra.mxu0 0.0
    %175 = vmatprep.subr.mxu0 0.0
    %176 = vmatpush1.msra.mxu0 0.0
    %177 = vmatprep.subr.mxu0 0.0
    %178 = vmatpush1.msra.mxu0 0.0
    %179 = vmatprep.subr.mxu0 0.0
    %180 = vmatpush1.msra.mxu0 0.0
    %181 = vmatprep.subr.mxu0 0.0
    %182 = vmatpush1.msra.mxu0 0.0
    %183 = vmatprep.mubr.f32.mxu0 0.0
    %184 = vmatmul.mubr.f32.gmra.mrb[0].mxu0 %v108
    %v185 = vpop.f32.mrb[0].mxu0
    %v186 = vadd.f32 0.0, %v185
    %v187 = vpop.f32.mrb[0].mxu0
    %188 = vmatprep.mubr.f32.mxu0 0.0
    %189 = vmatmul.mubr.f32.gmra.mrb[0].mxu0 %v111
    %v190 = vpop.f32.mrb[0].mxu0
    %v191 = vadd.f32 0.0, %v190
    %v192 = vpop.f32.mrb[0].mxu0
    %193 = vmatprep.mubr.f32.mxu0 0.0
    %194 = vmatmul.mubr.f32.gmra.mrb[0].mxu0 %v114
    %v195 = vpop.f32.mrb[0].mxu0
    %v196 = vadd.f32 0.0, %v195
    %v197 = vpop.f32.mrb[0].mxu0
    %198 = vmatprep.mubr.f32.mxu0 0.0
    %199 = vmatmul.mubr.f32.gmra.mrb[0].mxu0 %v117
    %v200 = vpop.f32.mrb[0].mxu0
    %v201 = vadd.f32 0.0, %v200
    %v202 = vpop.f32.mrb[0].mxu0
    %203 = vdwg.mxu0
    %v204 = vlaneseq
    %v205 = vshrl.u32 %v204, 7
    %v206 = vsub.s32 0, %v205
    %v207 = vrot.slane %v61, %v206
    %vm208 = vcmask 261120
    %v210 = vsel %vm208, %v70, 0
    %212 = vmatprep.subr.mxu0 0.0
    %213 = vmatpush1.msra.mxu0 %v37
    %214 = vmatprep.subr.mxu0 0.0
    %215 = vmatpush1.msra.mxu0 %v38
    %216 = vmatprep.subr.mxu0 0.0
    %217 = vmatpush1.msra.mxu0 %v39
    %218 = vmatprep.subr.mxu0 0.0
    %219 = vmatpush1.msra.mxu0 %v40
    %220 = vmatprep.subr.mxu0 0.0
    %221 = vmatpush1.msra.mxu0 0.0
    %222 = vmatprep.subr.mxu0 0.0
    %223 = vmatpush1.msra.mxu0 0.0
    %224 = vmatprep.subr.mxu0 0.0
    %225 = vmatpush1.msra.mxu0 0.0
    %226 = vmatprep.subr.mxu0 0.0
    %227 = vmatpush1.msra.mxu0 0.0
    %228 = vmatprep.subr.mxu0 0.0
    %229 = vmatpush1.msra.mxu0 0.0
    %230 = vmatprep.subr.mxu0 0.0
    %231 = vmatpush1.msra.mxu0 0.0
    %232 = vmatprep.subr.mxu0 0.0
    %233 = vmatpush1.msra.mxu0 0.0
    %234 = vmatprep.subr.mxu0 0.0
    %235 = vmatpush1.msra.mxu0 0.0
    %236 = vmatprep.subr.mxu0 0.0
    %237 = vmatpush1.msra.mxu0 0.0
    %238 = vmatprep.subr.mxu0 0.0
    %239 = vmatpush1.msra.mxu0 0.0
    %240 = vmatprep.subr.mxu0 0.0
    %241 = vmatpush1.msra.mxu0 0.0
    %242 = vmatprep.subr.mxu0 0.0
    %243 = vmatpush1.msra.mxu0 0.0
    %244 = vmatprep.subr.mxu0 0.0
    %245 = vmatpush1.msra.mxu0 0.0
    %246 = vmatprep.subr.mxu0 0.0
    %247 = vmatpush1.msra.mxu0 0.0
    %248 = vmatprep.subr.mxu0 0.0
    %249 = vmatpush1.msra.mxu0 0.0
    %250 = vmatprep.subr.mxu0 0.0
    %251 = vmatpush1.msra.mxu0 0.0
    %252 = vmatprep.subr.mxu0 0.0
    %253 = vmatpush1.msra.mxu0 0.0
    %254 = vmatprep.subr.mxu0 0.0
    %255 = vmatpush1.msra.mxu0 0.0
    %256 = vmatprep.subr.mxu0 0.0
    %257 = vmatpush1.msra.mxu0 0.0
    %258 = vmatprep.subr.mxu0 0.0
    %259 = vmatpush1.msra.mxu0 0.0
    %260 = vmatprep.subr.mxu0 0.0
    %261 = vmatpush1.msra.mxu0 0.0
    %262 = vmatprep.subr.mxu0 0.0
    %263 = vmatpush1.msra.mxu0 0.0
    %264 = vmatprep.subr.mxu0 0.0
    %265 = vmatpush1.msra.mxu0 0.0
    %266 = vmatprep.subr.mxu0 0.0
    %267 = vmatpush1.msra.mxu0 0.0
    %268 = vmatprep.subr.mxu0 0.0
    %269 = vmatpush1.msra.mxu0 0.0
    %270 = vmatprep.subr.mxu0 0.0
    %271 = vmatpush1.msra.mxu0 0.0
    %272 = vmatprep.subr.mxu0 0.0
    %273 = vmatpush1.msra.mxu0 0.0
    %274 = vmatprep.subr.mxu0 0.0
    %275 = vmatpush1.msra.mxu0 0.0
    %276 = vmatprep.mubr.f32.mxu0 0.0
    %277 = vmatmul.mubr.f32.gmra.mrb[0].mxu0 %v210
    %v278 = vpop.f32.mrb[0].mxu0
    %v279 = vadd.f32 %v207, %v278
    %v280 = vpop.f32.mrb[0].mxu0
    %281 = vdwg.mxu0
    %v282 = vadd.f32 %v186, %v279
    %v284 = vrot.slane %v279, 4
    %v286 = vadd.f32 %v186, %v284
    %v287 = vadd.f32 %v191, %v279
    %v288 = vadd.f32 %v191, %v284
    %v289 = vadd.f32 %v196, %v279
    %v290 = vadd.f32 %v196, %v284
    %v291 = vadd.f32 %v201, %v279
    %v292 = vadd.f32 %v201, %v284
    %v293 = vlaneseq
    %v294 = vshrl.u32 %v293, 7
    %v295 = vsub.s32 0, %v294
    %v296 = vrot.slane %v64, %v295
    %v298 = vsel %vm208, %v68, 0
    %300 = vmatprep.subr.mxu0 0.0
    %301 = vmatpush1.msra.mxu0 %v52
    %302 = vmatprep.subr.mxu0 0.0
    %303 = vmatpush1.msra.mxu0 %v53
    %304 = vmatprep.subr.mxu0 0.0
    %305 = vmatpush1.msra.mxu0 %v54
    %306 = vmatprep.subr.mxu0 0.0
    %307 = vmatpush1.msra.mxu0 %v55
    %308 = vmatprep.subr.mxu0 0.0
    %309 = vmatpush1.msra.mxu0 0.0
    %310 = vmatprep.subr.mxu0 0.0
    %311 = vmatpush1.msra.mxu0 0.0
    %312 = vmatprep.subr.mxu0 0.0
    %313 = vmatpush1.msra.mxu0 0.0
    %314 = vmatprep.subr.mxu0 0.0
    %315 = vmatpush1.msra.mxu0 0.0
    %316 = vmatprep.subr.mxu0 0.0
    %317 = vmatpush1.msra.mxu0 0.0
    %318 = vmatprep.subr.mxu0 0.0
    %319 = vmatpush1.msra.mxu0 0.0
    %320 = vmatprep.subr.mxu0 0.0
    %321 = vmatpush1.msra.mxu0 0.0
    %322 = vmatprep.subr.mxu0 0.0
    %323 = vmatpush1.msra.mxu0 0.0
    %324 = vmatprep.subr.mxu0 0.0
    %325 = vmatpush1.msra.mxu0 0.0
    %326 = vmatprep.subr.mxu0 0.0
    %327 = vmatpush1.msra.mxu0 0.0
    %328 = vmatprep.subr.mxu0 0.0
    %329 = vmatpush1.msra.mxu0 0.0
    %330 = vmatprep.subr.mxu0 0.0
    %331 = vmatpush1.msra.mxu0 0.0
    %332 = vmatprep.subr.mxu0 0.0
    %333 = vmatpush1.msra.mxu0 0.0
    %334 = vmatprep.subr.mxu0 0.0
    %335 = vmatpush1.msra.mxu0 0.0
    %336 = vmatprep.subr.mxu0 0.0
    %337 = vmatpush1.msra.mxu0 0.0
    %338 = vmatprep.subr.mxu0 0.0
    %339 = vmatpush1.msra.mxu0 0.0
    %340 = vmatprep.subr.mxu0 0.0
    %341 = vmatpush1.msra.mxu0 0.0
    %342 = vmatprep.subr.mxu0 0.0
    %343 = vmatpush1.msra.mxu0 0.0
    %344 = vmatprep.subr.mxu0 0.0
    %345 = vmatpush1.msra.mxu0 0.0
    %346 = vmatprep.subr.mxu0 0.0
    %347 = vmatpush1.msra.mxu0 0.0
    %348 = vmatprep.subr.mxu0 0.0
    %349 = vmatpush1.msra.mxu0 0.0
    %350 = vmatprep.subr.mxu0 0.0
    %351 = vmatpush1.msra.mxu0 0.0
    %352 = vmatprep.subr.mxu0 0.0
    %353 = vmatpush1.msra.mxu0 0.0
    %354 = vmatprep.subr.mxu0 0.0
    %355 = vmatpush1.msra.mxu0 0.0
    %356 = vmatprep.subr.mxu0 0.0
    %357 = vmatpush1.msra.mxu0 0.0
    %358 = vmatprep.subr.mxu0 0.0
    %359 = vmatpush1.msra.mxu0 0.0
    %360 = vmatprep.subr.mxu0 0.0
    %361 = vmatpush1.msra.mxu0 0.0
    %362 = vmatprep.subr.mxu0 0.0
    %363 = vmatpush1.msra.mxu0 0.0
    %364 = vmatprep.mubr.f32.mxu0 0.0
    %365 = vmatmul.mubr.f32.gmra.mrb[0].mxu0 %v298
    %v366 = vpop.f32.mrb[0].mxu0
    %v367 = vadd.f32 %v296, %v366
    %v368 = vpop.f32.mrb[0].mxu0
    %369 = vdwg.mxu0
    %v370 = vlaneseq
    %v371 = vshrl.u32 %v370, 7
    %v372 = vsub.s32 0, %v371
    %v373 = vrot.slane %v62, %v372
    %v375 = vsel %vm208, %v66, 0
    %377 = vmatprep.subr.mxu0 0.0
    %378 = vmatpush1.msra.mxu0 %v42
    %379 = vmatprep.subr.mxu0 0.0
    %380 = vmatpush1.msra.mxu0 %v43
    %381 = vmatprep.subr.mxu0 0.0
    %382 = vmatpush1.msra.mxu0 %v44
    %383 = vmatprep.subr.mxu0 0.0
    %384 = vmatpush1.msra.mxu0 %v45
    %385 = vmatprep.subr.mxu0 0.0
    %386 = vmatpush1.msra.mxu0 0.0
    %387 = vmatprep.subr.mxu0 0.0
    %388 = vmatpush1.msra.mxu0 0.0
    %389 = vmatprep.subr.mxu0 0.0
    %390 = vmatpush1.msra.mxu0 0.0
    %391 = vmatprep.subr.mxu0 0.0
    %392 = vmatpush1.msra.mxu0 0.0
    %393 = vmatprep.subr.mxu0 0.0
    %394 = vmatpush1.msra.mxu0 0.0
    %395 = vmatprep.subr.mxu0 0.0
    %396 = vmatpush1.msra.mxu0 0.0
    %397 = vmatprep.subr.mxu0 0.0
    %398 = vmatpush1.msra.mxu0 0.0
    %399 = vmatprep.subr.mxu0 0.0
    %400 = vmatpush1.msra.mxu0 0.0
    %401 = vmatprep.subr.mxu0 0.0
    %402 = vmatpush1.msra.mxu0 0.0
    %403 = vmatprep.subr.mxu0 0.0
    %404 = vmatpush1.msra.mxu0 0.0
    %405 = vmatprep.subr.mxu0 0.0
    %406 = vmatpush1.msra.mxu0 0.0
    %407 = vmatprep.subr.mxu0 0.0
    %408 = vmatpush1.msra.mxu0 0.0
    %409 = vmatprep.subr.mxu0 0.0
    %410 = vmatpush1.msra.mxu0 0.0
    %411 = vmatprep.subr.mxu0 0.0
    %412 = vmatpush1.msra.mxu0 0.0
    %413 = vmatprep.subr.mxu0 0.0
    %414 = vmatpush1.msra.mxu0 0.0
    %415 = vmatprep.subr.mxu0 0.0
    %416 = vmatpush1.msra.mxu0 0.0
    %417 = vmatprep.subr.mxu0 0.0
    %418 = vmatpush1.msra.mxu0 0.0
    %419 = vmatprep.subr.mxu0 0.0
    %420 = vmatpush1.msra.mxu0 0.0
    %421 = vmatprep.subr.mxu0 0.0
    %422 = vmatpush1.msra.mxu0 0.0
    %423 = vmatprep.subr.mxu0 0.0
    %424 = vmatpush1.msra.mxu0 0.0
    %425 = vmatprep.subr.mxu0 0.0
    %426 = vmatpush1.msra.mxu0 0.0
    %427 = vmatprep.subr.mxu0 0.0
    %428 = vmatpush1.msra.mxu0 0.0
    %429 = vmatprep.subr.mxu0 0.0
    %430 = vmatpush1.msra.mxu0 0.0
    %431 = vmatprep.subr.mxu0 0.0
    %432 = vmatpush1.msra.mxu0 0.0
    %433 = vmatprep.subr.mxu0 0.0
    %434 = vmatpush1.msra.mxu0 0.0
    %435 = vmatprep.subr.mxu0 0.0
    %436 = vmatpush1.msra.mxu0 0.0
    %437 = vmatprep.subr.mxu0 0.0
    %438 = vmatpush1.msra.mxu0 0.0
    %439 = vmatprep.subr.mxu0 0.0
    %440 = vmatpush1.msra.mxu0 0.0
    %441 = vmatprep.mubr.f32.mxu0 0.0
    %442 = vmatmul.mubr.f32.gmra.mrb[0].mxu0 %v375
    %v443 = vpop.f32.mrb[0].mxu0
    %v444 = vadd.f32 %v373, %v443
    %v445 = vpop.f32.mrb[0].mxu0
    %446 = vdwg.mxu0
    %v447 = vadd.f32 %v282, %v444
    %v448 = vxor.u32 %v447, 2147483648
    %v449 = vmul.f32 %v448, 1.442695
    %v450 = vpow.pop %v449
    %v451 = vadd.f32 %v450, 1.0
    %v452 = vrcp.pop %v451
    %v453 = vmul.f32 1.0, %v452
    %455 = vrot.lane.b32.xlu0 %v444, 32
    %v456 = vpop.permute.xlu0 %455
    %v458 = vmul.f32 %v453, %v456
    %460 = vrot.lane.b32.xlu0 %v458, 96
    %v461 = vpop.permute.xlu0 %460
    %v463 = vadd.f32 %v282, %v461
    %v464 = vtanh.pop %v463
    %v465 = vsub.f32 %v66, %v464
    %467 = vrot.lane.b32.xlu0 %v465, 64
    %v468 = vpop.permute.xlu0 %467
    %v470 = vmul.f32 %v453, %v468
    %472 = vrot.lane.b32.xlu0 %v470, 64
    %v473 = vpop.permute.xlu0 %472
    %v475 = vadd.f32 %v464, %v473
    %v476 = vlaneseq
    %v477 = vshrl.u32 %v476, 7
    %v478 = vsub.s32 0, %v477
    %v479 = vrot.slane %v63, %v478
    %v481 = vsel %vm208, %v475, 0
    %483 = vmatprep.subr.mxu0 0.0
    %484 = vmatpush1.msra.mxu0 %v47
    %485 = vmatprep.subr.mxu0 0.0
    %486 = vmatpush1.msra.mxu0 %v48
    %487 = vmatprep.subr.mxu0 0.0
    %488 = vmatpush1.msra.mxu0 %v49
    %489 = vmatprep.subr.mxu0 0.0
    %490 = vmatpush1.msra.mxu0 %v50
    %491 = vmatprep.subr.mxu0 0.0
    %492 = vmatpush1.msra.mxu0 0.0
    %493 = vmatprep.subr.mxu0 0.0
    %494 = vmatpush1.msra.mxu0 0.0
    %495 = vmatprep.subr.mxu0 0.0
    %496 = vmatpush1.msra.mxu0 0.0
    %497 = vmatprep.subr.mxu0 0.0
    %498 = vmatpush1.msra.mxu0 0.0
    %499 = vmatprep.subr.mxu0 0.0
    %500 = vmatpush1.msra.mxu0 0.0
    %501 = vmatprep.subr.mxu0 0.0
    %502 = vmatpush1.msra.mxu0 0.0
    %503 = vmatprep.subr.mxu0 0.0
    %504 = vmatpush1.msra.mxu0 0.0
    %505 = vmatprep.subr.mxu0 0.0
    %506 = vmatpush1.msra.mxu0 0.0
    %507 = vmatprep.subr.mxu0 0.0
    %508 = vmatpush1.msra.mxu0 0.0
    %509 = vmatprep.subr.mxu0 0.0
    %510 = vmatpush1.msra.mxu0 0.0
    %511 = vmatprep.subr.mxu0 0.0
    %512 = vmatpush1.msra.mxu0 0.0
    %513 = vmatprep.subr.mxu0 0.0
    %514 = vmatpush1.msra.mxu0 0.0
    %515 = vmatprep.subr.mxu0 0.0
    %516 = vmatpush1.msra.mxu0 0.0
    %517 = vmatprep.subr.mxu0 0.0
    %518 = vmatpush1.msra.mxu0 0.0
    %519 = vmatprep.subr.mxu0 0.0
    %520 = vmatpush1.msra.mxu0 0.0
    %521 = vmatprep.subr.mxu0 0.0
    %522 = vmatpush1.msra.mxu0 0.0
    %523 = vmatprep.subr.mxu0 0.0
    %524 = vmatpush1.msra.mxu0 0.0
    %525 = vmatprep.subr.mxu0 0.0
    %526 = vmatpush1.msra.mxu0 0.0
    %527 = vmatprep.subr.mxu0 0.0
    %528 = vmatpush1.msra.mxu0 0.0
    %529 = vmatprep.subr.mxu0 0.0
    %530 = vmatpush1.msra.mxu0 0.0
    %531 = vmatprep.subr.mxu0 0.0
    %532 = vmatpush1.msra.mxu0 0.0
    %533 = vmatprep.subr.mxu0 0.0
    %534 = vmatpush1.msra.mxu0 0.0
    %535 = vmatprep.subr.mxu0 0.0
    %536 = vmatpush1.msra.mxu0 0.0
    %537 = vmatprep.subr.mxu0 0.0
    %538 = vmatpush1.msra.mxu0 0.0
    %539 = vmatprep.subr.mxu0 0.0
    %540 = vmatpush1.msra.mxu0 0.0
    %541 = vmatprep.subr.mxu0 0.0
    %542 = vmatpush1.msra.mxu0 0.0
    %543 = vmatprep.subr.mxu0 0.0
    %544 = vmatpush1.msra.mxu0 0.0
    %545 = vmatprep.subr.mxu0 0.0
    %546 = vmatpush1.msra.mxu0 0.0
    %547 = vmatprep.mubr.f32.mxu0 0.0
    %548 = vmatmul.mubr.f32.gmra.mrb[0].mxu0 %v481
    %v549 = vpop.f32.mrb[0].mxu0
    %v550 = vadd.f32 %v479, %v549
    %v551 = vpop.f32.mrb[0].mxu0
    %552 = vdwg.mxu0
    %v553 = vadd.f32 %v550, %v367
    %v554 = vxor.u32 %v553, 2147483648
    %v555 = vmul.f32 %v554, 1.442695
    %v556 = vpow.pop %v555
    %v557 = vadd.f32 %v556, 1.0
    %v558 = vrcp.pop %v557
    %v559 = vmul.f32 1.0, %v558
    %561 = vrot.lane.b32.xlu0 %v367, 32
    %v562 = vpop.permute.xlu0 %561
    %v564 = vmul.f32 %v559, %v562
    %566 = vrot.lane.b32.xlu0 %v564, 96
    %v567 = vpop.permute.xlu0 %566
    %v569 = vadd.f32 %v550, %v567
    %v570 = vtanh.pop %v569
    %v571 = vsub.f32 %v68, %v570
    %573 = vrot.lane.b32.xlu0 %v571, 64
    %v574 = vpop.permute.xlu0 %573
    %v576 = vmul.f32 %v559, %v574
    %578 = vrot.lane.b32.xlu0 %v576, 64
    %v579 = vpop.permute.xlu0 %578
    %v581 = vadd.f32 %v570, %v579
    %v583 = vsel %vm208, %v581, 0
    %585 = vmatprep.subr.mxu0 0.0
    %586 = vmatpush1.msra.mxu0 %v52
    %587 = vmatprep.subr.mxu0 0.0
    %588 = vmatpush1.msra.mxu0 %v53
    %589 = vmatprep.subr.mxu0 0.0
    %590 = vmatpush1.msra.mxu0 %v54
    %591 = vmatprep.subr.mxu0 0.0
    %592 = vmatpush1.msra.mxu0 %v55
    %593 = vmatprep.subr.mxu0 0.0
    %594 = vmatpush1.msra.mxu0 0.0
    %595 = vmatprep.subr.mxu0 0.0
    %596 = vmatpush1.msra.mxu0 0.0
    %597 = vmatprep.subr.mxu0 0.0
    %598 = vmatpush1.msra.mxu0 0.0
    %599 = vmatprep.subr.mxu0 0.0
    %600 = vmatpush1.msra.mxu0 0.0
    %601 = vmatprep.subr.mxu0 0.0
    %602 = vmatpush1.msra.mxu0 0.0
    %603 = vmatprep.subr.mxu0 0.0
    %604 = vmatpush1.msra.mxu0 0.0
    %605 = vmatprep.subr.mxu0 0.0
    %606 = vmatpush1.msra.mxu0 0.0
    %607 = vmatprep.subr.mxu0 0.0
    %608 = vmatpush1.msra.mxu0 0.0
    %609 = vmatprep.subr.mxu0 0.0
    %610 = vmatpush1.msra.mxu0 0.0
    %611 = vmatprep.subr.mxu0 0.0
    %612 = vmatpush1.msra.mxu0 0.0
    %613 = vmatprep.subr.mxu0 0.0
    %614 = vmatpush1.msra.mxu0 0.0
    %615 = vmatprep.subr.mxu0 0.0
    %616 = vmatpush1.msra.mxu0 0.0
    %617 = vmatprep.subr.mxu0 0.0
    %618 = vmatpush1.msra.mxu0 0.0
    %619 = vmatprep.subr.mxu0 0.0
    %620 = vmatpush1.msra.mxu0 0.0
    %621 = vmatprep.subr.mxu0 0.0
    %622 = vmatpush1.msra.mxu0 0.0
    %623 = vmatprep.subr.mxu0 0.0
    %624 = vmatpush1.msra.mxu0 0.0
    %625 = vmatprep.subr.mxu0 0.0
    %626 = vmatpush1.msra.mxu0 0.0
    %627 = vmatprep.subr.mxu0 0.0
    %628 = vmatpush1.msra.mxu0 0.0
    %629 = vmatprep.subr.mxu0 0.0
    %630 = vmatpush1.msra.mxu0 0.0
    %631 = vmatprep.subr.mxu0 0.0
    %632 = vmatpush1.msra.mxu0 0.0
    %633 = vmatprep.subr.mxu0 0.0
    %634 = vmatpush1.msra.mxu0 0.0
    %635 = vmatprep.subr.mxu0 0.0
    %636 = vmatpush1.msra.mxu0 0.0
    %637 = vmatprep.subr.mxu0 0.0
    %638 = vmatpush1.msra.mxu0 0.0
    %639 = vmatprep.subr.mxu0 0.0
    %640 = vmatpush1.msra.mxu0 0.0
    %641 = vmatprep.subr.mxu0 0.0
    %642 = vmatpush1.msra.mxu0 0.0
    %643 = vmatprep.subr.mxu0 0.0
    %644 = vmatpush1.msra.mxu0 0.0
    %645 = vmatprep.subr.mxu0 0.0
    %646 = vmatpush1.msra.mxu0 0.0
    %647 = vmatprep.subr.mxu0 0.0
    %648 = vmatpush1.msra.mxu0 0.0
    %649 = vmatprep.mubr.f32.mxu0 0.0
    %650 = vmatmul.mubr.f32.gmra.mrb[0].mxu0 %v583
    %v651 = vpop.f32.mrb[0].mxu0
    %v652 = vadd.f32 %v296, %v651
    %v653 = vpop.f32.mrb[0].mxu0
    %654 = vdwg.mxu0
    %655 = vmatprep.subr.mxu0 0.0
    %656 = vmatpush1.msra.mxu0 %v42
    %657 = vmatprep.subr.mxu0 0.0
    %658 = vmatpush1.msra.mxu0 %v43
    %659 = vmatprep.subr.mxu0 0.0
    %660 = vmatpush1.msra.mxu0 %v44
    %661 = vmatprep.subr.mxu0 0.0
    %662 = vmatpush1.msra.mxu0 %v45
    %663 = vmatprep.subr.mxu0 0.0
    %664 = vmatpush1.msra.mxu0 0.0
    %665 = vmatprep.subr.mxu0 0.0
    %666 = vmatpush1.msra.mxu0 0.0
    %667 = vmatprep.subr.mxu0 0.0
    %668 = vmatpush1.msra.mxu0 0.0
    %669 = vmatprep.subr.mxu0 0.0
    %670 = vmatpush1.msra.mxu0 0.0
    %671 = vmatprep.subr.mxu0 0.0
    %672 = vmatpush1.msra.mxu0 0.0
    %673 = vmatprep.subr.mxu0 0.0
    %674 = vmatpush1.msra.mxu0 0.0
    %675 = vmatprep.subr.mxu0 0.0
    %676 = vmatpush1.msra.mxu0 0.0
    %677 = vmatprep.subr.mxu0 0.0
    %678 = vmatpush1.msra.mxu0 0.0
    %679 = vmatprep.subr.mxu0 0.0
    %680 = vmatpush1.msra.mxu0 0.0
    %681 = vmatprep.subr.mxu0 0.0
    %682 = vmatpush1.msra.mxu0 0.0
    %683 = vmatprep.subr.mxu0 0.0
    %684 = vmatpush1.msra.mxu0 0.0
    %685 = vmatprep.subr.mxu0 0.0
    %686 = vmatpush1.msra.mxu0 0.0
    %687 = vmatprep.subr.mxu0 0.0
    %688 = vmatpush1.msra.mxu0 0.0
    %689 = vmatprep.subr.mxu0 0.0
    %690 = vmatpush1.msra.mxu0 0.0
    %691 = vmatprep.subr.mxu0 0.0
    %692 = vmatpush1.msra.mxu0 0.0
    %693 = vmatprep.subr.mxu0 0.0
    %694 = vmatpush1.msra.mxu0 0.0
    %695 = vmatprep.subr.mxu0 0.0
    %696 = vmatpush1.msra.mxu0 0.0
    %697 = vmatprep.subr.mxu0 0.0
    %698 = vmatpush1.msra.mxu0 0.0
    %699 = vmatprep.subr.mxu0 0.0
    %700 = vmatpush1.msra.mxu0 0.0
    %701 = vmatprep.subr.mxu0 0.0
    %702 = vmatpush1.msra.mxu0 0.0
    %703 = vmatprep.subr.mxu0 0.0
    %704 = vmatpush1.msra.mxu0 0.0
    %705 = vmatprep.subr.mxu0 0.0
    %706 = vmatpush1.msra.mxu0 0.0
    %707 = vmatprep.subr.mxu0 0.0
    %708 = vmatpush1.msra.mxu0 0.0
    %709 = vmatprep.subr.mxu0 0.0
    %710 = vmatpush1.msra.mxu0 0.0
    %711 = vmatprep.subr.mxu0 0.0
    %712 = vmatpush1.msra.mxu0 0.0
    %713 = vmatprep.subr.mxu0 0.0
    %714 = vmatpush1.msra.mxu0 0.0
    %715 = vmatprep.subr.mxu0 0.0
    %716 = vmatpush1.msra.mxu0 0.0
    %717 = vmatprep.subr.mxu0 0.0
    %718 = vmatpush1.msra.mxu0 0.0
    %719 = vmatprep.mubr.f32.mxu0 0.0
    %720 = vmatmul.mubr.f32.gmra.mrb[0].mxu0 %v481
    %v721 = vpop.f32.mrb[0].mxu0
    %v722 = vadd.f32 %v373, %v721
    %v723 = vpop.f32.mrb[0].mxu0
    %724 = vdwg.mxu0
    %v726 = vrot.slane %v722, 4
    %v728 = vadd.f32 %v286, %v726
    %v729 = vxor.u32 %v728, 2147483648
    %v730 = vmul.f32 %v729, 1.442695
    %v731 = vpow.pop %v730
    %v732 = vadd.f32 %v731, 1.0
    %v733 = vrcp.pop %v732
    %v734 = vmul.f32 1.0, %v733
    %735 = vrot.lane.b32.xlu0 %v726, 32
    %v736 = vpop.permute.xlu0 %735
    %v738 = vmul.f32 %v734, %v736
    %740 = vrot.lane.b32.xlu0 %v738, 96
    %v741 = vpop.permute.xlu0 %740
    %v743 = vadd.f32 %v286, %v741
    %v744 = vtanh.pop %v743
    %v746 = vrot.slane %v744, 4
    %v748 = vsub.f32 %v475, %v746
    %v750 = vrot.slane %v748, 4
    %751 = vrot.lane.b32.xlu0 %v750, 64
    %v752 = vpop.permute.xlu0 %751
    %v754 = vmul.f32 %v734, %v752
    %756 = vrot.lane.b32.xlu0 %v754, 64
    %v757 = vpop.permute.xlu0 %756
    %v759 = vadd.f32 %v744, %v757
    %v761 = vrot.slane %v759, 4
    %v762 = vsel %vm208, %v761, 0
    %764 = vmatprep.subr.mxu0 0.0
    %765 = vmatpush1.msra.mxu0 %v47
    %766 = vmatprep.subr.mxu0 0.0
    %767 = vmatpush1.msra.mxu0 %v48
    %768 = vmatprep.subr.mxu0 0.0
    %769 = vmatpush1.msra.mxu0 %v49
    %770 = vmatprep.subr.mxu0 0.0
    %771 = vmatpush1.msra.mxu0 %v50
    %772 = vmatprep.subr.mxu0 0.0
    %773 = vmatpush1.msra.mxu0 0.0
    %774 = vmatprep.subr.mxu0 0.0
    %775 = vmatpush1.msra.mxu0 0.0
    %776 = vmatprep.subr.mxu0 0.0
    %777 = vmatpush1.msra.mxu0 0.0
    %778 = vmatprep.subr.mxu0 0.0
    %779 = vmatpush1.msra.mxu0 0.0
    %780 = vmatprep.subr.mxu0 0.0
    %781 = vmatpush1.msra.mxu0 0.0
    %782 = vmatprep.subr.mxu0 0.0
    %783 = vmatpush1.msra.mxu0 0.0
    %784 = vmatprep.subr.mxu0 0.0
    %785 = vmatpush1.msra.mxu0 0.0
    %786 = vmatprep.subr.mxu0 0.0
    %787 = vmatpush1.msra.mxu0 0.0
    %788 = vmatprep.subr.mxu0 0.0
    %789 = vmatpush1.msra.mxu0 0.0
    %790 = vmatprep.subr.mxu0 0.0
    %791 = vmatpush1.msra.mxu0 0.0
    %792 = vmatprep.subr.mxu0 0.0
    %793 = vmatpush1.msra.mxu0 0.0
    %794 = vmatprep.subr.mxu0 0.0
    %795 = vmatpush1.msra.mxu0 0.0
    %796 = vmatprep.subr.mxu0 0.0
    %797 = vmatpush1.msra.mxu0 0.0
    %798 = vmatprep.subr.mxu0 0.0
    %799 = vmatpush1.msra.mxu0 0.0
    %800 = vmatprep.subr.mxu0 0.0
    %801 = vmatpush1.msra.mxu0 0.0
    %802 = vmatprep.subr.mxu0 0.0
    %803 = vmatpush1.msra.mxu0 0.0
    %804 = vmatprep.subr.mxu0 0.0
    %805 = vmatpush1.msra.mxu0 0.0
    %806 = vmatprep.subr.mxu0 0.0
    %807 = vmatpush1.msra.mxu0 0.0
    %808 = vmatprep.subr.mxu0 0.0
    %809 = vmatpush1.msra.mxu0 0.0
    %810 = vmatprep.subr.mxu0 0.0
    %811 = vmatpush1.msra.mxu0 0.0
    %812 = vmatprep.subr.mxu0 0.0
    %813 = vmatpush1.msra.mxu0 0.0
    %814 = vmatprep.subr.mxu0 0.0
    %815 = vmatpush1.msra.mxu0 0.0
    %816 = vmatprep.subr.mxu0 0.0
    %817 = vmatpush1.msra.mxu0 0.0
    %818 = vmatprep.subr.mxu0 0.0
    %819 = vmatpush1.msra.mxu0 0.0
    %820 = vmatprep.subr.mxu0 0.0
    %821 = vmatpush1.msra.mxu0 0.0
    %822 = vmatprep.subr.mxu0 0.0
    %823 = vmatpush1.msra.mxu0 0.0
    %824 = vmatprep.subr.mxu0 0.0
    %825 = vmatpush1.msra.mxu0 0.0
    %826 = vmatprep.subr.mxu0 0.0
    %827 = vmatpush1.msra.mxu0 0.0
    %828 = vmatprep.mubr.f32.mxu0 0.0
    %829 = vmatmul.mubr.f32.gmra.mrb[0].mxu0 %v762
    %v830 = vpop.f32.mrb[0].mxu0
    %v831 = vadd.f32 %v479, %v830
    %v832 = vpop.f32.mrb[0].mxu0
    %833 = vdwg.mxu0
    %v834 = vadd.f32 %v831, %v652
    %v835 = vxor.u32 %v834, 2147483648
    %v836 = vmul.f32 %v835, 1.442695
    %v837 = vpow.pop %v836
    %v838 = vadd.f32 %v837, 1.0
    %v839 = vrcp.pop %v838
    %v840 = vmul.f32 1.0, %v839
    %842 = vrot.lane.b32.xlu0 %v652, 32
    %v843 = vpop.permute.xlu0 %842
    %v845 = vmul.f32 %v840, %v843
    %847 = vrot.lane.b32.xlu0 %v845, 96
    %v848 = vpop.permute.xlu0 %847
    %v850 = vadd.f32 %v831, %v848
    %v851 = vtanh.pop %v850
    %v852 = vsub.f32 %v581, %v851
    %854 = vrot.lane.b32.xlu0 %v852, 64
    %v855 = vpop.permute.xlu0 %854
    %v857 = vmul.f32 %v840, %v855
    %859 = vrot.lane.b32.xlu0 %v857, 64
    %v860 = vpop.permute.xlu0 %859
    %v862 = vadd.f32 %v851, %v860
    %v864 = vsel %vm208, %v862, 0
    %866 = vmatprep.subr.mxu0 0.0
    %867 = vmatpush1.msra.mxu0 %v52
    %868 = vmatprep.subr.mxu0 0.0
    %869 = vmatpush1.msra.mxu0 %v53
    %870 = vmatprep.subr.mxu0 0.0
    %871 = vmatpush1.msra.mxu0 %v54
    %872 = vmatprep.subr.mxu0 0.0
    %873 = vmatpush1.msra.mxu0 %v55
    %874 = vmatprep.subr.mxu0 0.0
    %875 = vmatpush1.msra.mxu0 0.0
    %876 = vmatprep.subr.mxu0 0.0
    %877 = vmatpush1.msra.mxu0 0.0
    %878 = vmatprep.subr.mxu0 0.0
    %879 = vmatpush1.msra.mxu0 0.0
    %880 = vmatprep.subr.mxu0 0.0
    %881 = vmatpush1.msra.mxu0 0.0
    %882 = vmatprep.subr.mxu0 0.0
    %883 = vmatpush1.msra.mxu0 0.0
    %884 = vmatprep.subr.mxu0 0.0
    %885 = vmatpush1.msra.mxu0 0.0
    %886 = vmatprep.subr.mxu0 0.0
    %887 = vmatpush1.msra.mxu0 0.0
    %888 = vmatprep.subr.mxu0 0.0
    %889 = vmatpush1.msra.mxu0 0.0
    %890 = vmatprep.subr.mxu0 0.0
    %891 = vmatpush1.msra.mxu0 0.0
    %892 = vmatprep.subr.mxu0 0.0
    %893 = vmatpush1.msra.mxu0 0.0
    %894 = vmatprep.subr.mxu0 0.0
    %895 = vmatpush1.msra.mxu0 0.0
    %896 = vmatprep.subr.mxu0 0.0
    %897 = vmatpush1.msra.mxu0 0.0
    %898 = vmatprep.subr.mxu0 0.0
    %899 = vmatpush1.msra.mxu0 0.0
    %900 = vmatprep.subr.mxu0 0.0
    %901 = vmatpush1.msra.mxu0 0.0
    %902 = vmatprep.subr.mxu0 0.0
    %903 = vmatpush1.msra.mxu0 0.0
    %904 = vmatprep.subr.mxu0 0.0
    %905 = vmatpush1.msra.mxu0 0.0
    %906 = vmatprep.subr.mxu0 0.0
    %907 = vmatpush1.msra.mxu0 0.0
    %908 = vmatprep.subr.mxu0 0.0
    %909 = vmatpush1.msra.mxu0 0.0
    %910 = vmatprep.subr.mxu0 0.0
    %911 = vmatpush1.msra.mxu0 0.0
    %912 = vmatprep.subr.mxu0 0.0
    %913 = vmatpush1.msra.mxu0 0.0
    %914 = vmatprep.subr.mxu0 0.0
    %915 = vmatpush1.msra.mxu0 0.0
    %916 = vmatprep.subr.mxu0 0.0
    %917 = vmatpush1.msra.mxu0 0.0
    %918 = vmatprep.subr.mxu0 0.0
    %919 = vmatpush1.msra.mxu0 0.0
    %920 = vmatprep.subr.mxu0 0.0
    %921 = vmatpush1.msra.mxu0 0.0
    %922 = vmatprep.subr.mxu0 0.0
    %923 = vmatpush1.msra.mxu0 0.0
    %924 = vmatprep.subr.mxu0 0.0
    %925 = vmatpush1.msra.mxu0 0.0
    %926 = vmatprep.subr.mxu0 0.0
    %927 = vmatpush1.msra.mxu0 0.0
    %928 = vmatprep.subr.mxu0 0.0
    %929 = vmatpush1.msra.mxu0 0.0
    %930 = vmatprep.mubr.f32.mxu0 0.0
    %931 = vmatmul.mubr.f32.gmra.mrb[0].mxu0 %v864
    %v932 = vpop.f32.mrb[0].mxu0
    %v933 = vadd.f32 %v296, %v932
    %v934 = vpop.f32.mrb[0].mxu0
    %935 = vdwg.mxu0
    %936 = vmatprep.subr.mxu0 0.0
    %937 = vmatpush1.msra.mxu0 %v42
    %938 = vmatprep.subr.mxu0 0.0
    %939 = vmatpush1.msra.mxu0 %v43
    %940 = vmatprep.subr.mxu0 0.0
    %941 = vmatpush1.msra.mxu0 %v44
    %942 = vmatprep.subr.mxu0 0.0
    %943 = vmatpush1.msra.mxu0 %v45
    %944 = vmatprep.subr.mxu0 0.0
    %945 = vmatpush1.msra.mxu0 0.0
    %946 = vmatprep.subr.mxu0 0.0
    %947 = vmatpush1.msra.mxu0 0.0
    %948 = vmatprep.subr.mxu0 0.0
    %949 = vmatpush1.msra.mxu0 0.0
    %950 = vmatprep.subr.mxu0 0.0
    %951 = vmatpush1.msra.mxu0 0.0
    %952 = vmatprep.subr.mxu0 0.0
    %953 = vmatpush1.msra.mxu0 0.0
    %954 = vmatprep.subr.mxu0 0.0
    %955 = vmatpush1.msra.mxu0 0.0
    %956 = vmatprep.subr.mxu0 0.0
    %957 = vmatpush1.msra.mxu0 0.0
    %958 = vmatprep.subr.mxu0 0.0
    %959 = vmatpush1.msra.mxu0 0.0
    %960 = vmatprep.subr.mxu0 0.0
    %961 = vmatpush1.msra.mxu0 0.0
    %962 = vmatprep.subr.mxu0 0.0
    %963 = vmatpush1.msra.mxu0 0.0
    %964 = vmatprep.subr.mxu0 0.0
    %965 = vmatpush1.msra.mxu0 0.0
    %966 = vmatprep.subr.mxu0 0.0
    %967 = vmatpush1.msra.mxu0 0.0
    %968 = vmatprep.subr.mxu0 0.0
    %969 = vmatpush1.msra.mxu0 0.0
    %970 = vmatprep.subr.mxu0 0.0
    %971 = vmatpush1.msra.mxu0 0.0
    %972 = vmatprep.subr.mxu0 0.0
    %973 = vmatpush1.msra.mxu0 0.0
    %974 = vmatprep.subr.mxu0 0.0
    %975 = vmatpush1.msra.mxu0 0.0
    %976 = vmatprep.subr.mxu0 0.0
    %977 = vmatpush1.msra.mxu0 0.0
    %978 = vmatprep.subr.mxu0 0.0
    %979 = vmatpush1.msra.mxu0 0.0
    %980 = vmatprep.subr.mxu0 0.0
    %981 = vmatpush1.msra.mxu0 0.0
    %982 = vmatprep.subr.mxu0 0.0
    %983 = vmatpush1.msra.mxu0 0.0
    %984 = vmatprep.subr.mxu0 0.0
    %985 = vmatpush1.msra.mxu0 0.0
    %986 = vmatprep.subr.mxu0 0.0
    %987 = vmatpush1.msra.mxu0 0.0
    %988 = vmatprep.subr.mxu0 0.0
    %989 = vmatpush1.msra.mxu0 0.0
    %990 = vmatprep.subr.mxu0 0.0
    %991 = vmatpush1.msra.mxu0 0.0
    %992 = vmatprep.subr.mxu0 0.0
    %993 = vmatpush1.msra.mxu0 0.0
    %994 = vmatprep.subr.mxu0 0.0
    %995 = vmatpush1.msra.mxu0 0.0
    %996 = vmatprep.subr.mxu0 0.0
    %997 = vmatpush1.msra.mxu0 0.0
    %998 = vmatprep.subr.mxu0 0.0
    %999 = vmatpush1.msra.mxu0 0.0
    %1000 = vmatprep.mubr.f32.mxu0 0.0
    %1001 = vmatmul.mubr.f32.gmra.mrb[0].mxu0 %v762
    %v1002 = vpop.f32.mrb[0].mxu0
    %v1003 = vadd.f32 %v373, %v1002
    %v1004 = vpop.f32.mrb[0].mxu0
    %1005 = vdwg.mxu0
    %v1006 = vadd.f32 %v287, %v1003
    %v1007 = vxor.u32 %v1006, 2147483648
    %v1008 = vmul.f32 %v1007, 1.442695
    %v1009 = vpow.pop %v1008
    %v1010 = vadd.f32 %v1009, 1.0
    %v1011 = vrcp.pop %v1010
    %v1012 = vmul.f32 1.0, %v1011
    %1014 = vrot.lane.b32.xlu0 %v1003, 32
    %v1015 = vpop.permute.xlu0 %1014
    %v1017 = vmul.f32 %v1012, %v1015
    %1019 = vrot.lane.b32.xlu0 %v1017, 96
    %v1020 = vpop.permute.xlu0 %1019
    %v1022 = vadd.f32 %v287, %v1020
    %v1023 = vtanh.pop %v1022
    %v1025 = vrot.slane %v1023, 4
    %v1027 = vsub.f32 %v759, %v1025
    %v1029 = vrot.slane %v1027, 4
    %1030 = vrot.lane.b32.xlu0 %v1029, 64
    %v1031 = vpop.permute.xlu0 %1030
    %v1033 = vmul.f32 %v1012, %v1031
    %1035 = vrot.lane.b32.xlu0 %v1033, 64
    %v1036 = vpop.permute.xlu0 %1035
    %v1038 = vadd.f32 %v1023, %v1036
    %v1040 = vsel %vm208, %v1038, 0
    %1042 = vmatprep.subr.mxu0 0.0
    %1043 = vmatpush1.msra.mxu0 %v47
    %1044 = vmatprep.subr.mxu0 0.0
    %1045 = vmatpush1.msra.mxu0 %v48
    %1046 = vmatprep.subr.mxu0 0.0
    %1047 = vmatpush1.msra.mxu0 %v49
    %1048 = vmatprep.subr.mxu0 0.0
    %1049 = vmatpush1.msra.mxu0 %v50
    %1050 = vmatprep.subr.mxu0 0.0
    %1051 = vmatpush1.msra.mxu0 0.0
    %1052 = vmatprep.subr.mxu0 0.0
    %1053 = vmatpush1.msra.mxu0 0.0
    %1054 = vmatprep.subr.mxu0 0.0
    %1055 = vmatpush1.msra.mxu0 0.0
    %1056 = vmatprep.subr.mxu0 0.0
    %1057 = vmatpush1.msra.mxu0 0.0
    %1058 = vmatprep.subr.mxu0 0.0
    %1059 = vmatpush1.msra.mxu0 0.0
    %1060 = vmatprep.subr.mxu0 0.0
    %1061 = vmatpush1.msra.mxu0 0.0
    %1062 = vmatprep.subr.mxu0 0.0
    %1063 = vmatpush1.msra.mxu0 0.0
    %1064 = vmatprep.subr.mxu0 0.0
    %1065 = vmatpush1.msra.mxu0 0.0
    %1066 = vmatprep.subr.mxu0 0.0
    %1067 = vmatpush1.msra.mxu0 0.0
    %1068 = vmatprep.subr.mxu0 0.0
    %1069 = vmatpush1.msra.mxu0 0.0
    %1070 = vmatprep.subr.mxu0 0.0
    %1071 = vmatpush1.msra.mxu0 0.0
    %1072 = vmatprep.subr.mxu0 0.0
    %1073 = vmatpush1.msra.mxu0 0.0
    %1074 = vmatprep.subr.mxu0 0.0
    %1075 = vmatpush1.msra.mxu0 0.0
    %1076 = vmatprep.subr.mxu0 0.0
    %1077 = vmatpush1.msra.mxu0 0.0
    %1078 = vmatprep.subr.mxu0 0.0
    %1079 = vmatpush1.msra.mxu0 0.0
    %1080 = vmatprep.subr.mxu0 0.0
    %1081 = vmatpush1.msra.mxu0 0.0
    %1082 = vmatprep.subr.mxu0 0.0
    %1083 = vmatpush1.msra.mxu0 0.0
    %1084 = vmatprep.subr.mxu0 0.0
    %1085 = vmatpush1.msra.mxu0 0.0
    %1086 = vmatprep.subr.mxu0 0.0
    %1087 = vmatpush1.msra.mxu0 0.0
    %1088 = vmatprep.subr.mxu0 0.0
    %1089 = vmatpush1.msra.mxu0 0.0
    %1090 = vmatprep.subr.mxu0 0.0
    %1091 = vmatpush1.msra.mxu0 0.0
    %1092 = vmatprep.subr.mxu0 0.0
    %1093 = vmatpush1.msra.mxu0 0.0
    %1094 = vmatprep.subr.mxu0 0.0
    %1095 = vmatpush1.msra.mxu0 0.0
    %1096 = vmatprep.subr.mxu0 0.0
    %1097 = vmatpush1.msra.mxu0 0.0
    %1098 = vmatprep.subr.mxu0 0.0
    %1099 = vmatpush1.msra.mxu0 0.0
    %1100 = vmatprep.subr.mxu0 0.0
    %1101 = vmatpush1.msra.mxu0 0.0
    %1102 = vmatprep.subr.mxu0 0.0
    %1103 = vmatpush1.msra.mxu0 0.0
    %1104 = vmatprep.subr.mxu0 0.0
    %1105 = vmatpush1.msra.mxu0 0.0
    %1106 = vmatprep.mubr.f32.mxu0 0.0
    %1107 = vmatmul.mubr.f32.gmra.mrb[0].mxu0 %v1040
    %v1108 = vpop.f32.mrb[0].mxu0
    %v1109 = vadd.f32 %v479, %v1108
    %v1110 = vpop.f32.mrb[0].mxu0
    %1111 = vdwg.mxu0
    %v1112 = vadd.f32 %v1109, %v933
    %v1113 = vxor.u32 %v1112, 2147483648
    %v1114 = vmul.f32 %v1113, 1.442695
    %v1115 = vpow.pop %v1114
    %v1116 = vadd.f32 %v1115, 1.0
    %v1117 = vrcp.pop %v1116
    %v1118 = vmul.f32 1.0, %v1117
    %1120 = vrot.lane.b32.xlu0 %v933, 32
    %v1121 = vpop.permute.xlu0 %1120
    %v1123 = vmul.f32 %v1118, %v1121
    %1125 = vrot.lane.b32.xlu0 %v1123, 96
    %v1126 = vpop.permute.xlu0 %1125
    %v1128 = vadd.f32 %v1109, %v1126
    %v1129 = vtanh.pop %v1128
    %v1130 = vsub.f32 %v862, %v1129
    %1132 = vrot.lane.b32.xlu0 %v1130, 64
    %v1133 = vpop.permute.xlu0 %1132
    %v1135 = vmul.f32 %v1118, %v1133
    %1137 = vrot.lane.b32.xlu0 %v1135, 64
    %v1138 = vpop.permute.xlu0 %1137
    %v1140 = vadd.f32 %v1129, %v1138
    %v1142 = vsel %vm208, %v1140, 0
    %1144 = vmatprep.subr.mxu0 0.0
    %1145 = vmatpush1.msra.mxu0 %v52
    %1146 = vmatprep.subr.mxu0 0.0
    %1147 = vmatpush1.msra.mxu0 %v53
    %1148 = vmatprep.subr.mxu0 0.0
    %1149 = vmatpush1.msra.mxu0 %v54
    %1150 = vmatprep.subr.mxu0 0.0
    %1151 = vmatpush1.msra.mxu0 %v55
    %1152 = vmatprep.subr.mxu0 0.0
    %1153 = vmatpush1.msra.mxu0 0.0
    %1154 = vmatprep.subr.mxu0 0.0
    %1155 = vmatpush1.msra.mxu0 0.0
    %1156 = vmatprep.subr.mxu0 0.0
    %1157 = vmatpush1.msra.mxu0 0.0
    %1158 = vmatprep.subr.mxu0 0.0
    %1159 = vmatpush1.msra.mxu0 0.0
    %1160 = vmatprep.subr.mxu0 0.0
    %1161 = vmatpush1.msra.mxu0 0.0
    %1162 = vmatprep.subr.mxu0 0.0
    %1163 = vmatpush1.msra.mxu0 0.0
    %1164 = vmatprep.subr.mxu0 0.0
    %1165 = vmatpush1.msra.mxu0 0.0
    %1166 = vmatprep.subr.mxu0 0.0
    %1167 = vmatpush1.msra.mxu0 0.0
    %1168 = vmatprep.subr.mxu0 0.0
    %1169 = vmatpush1.msra.mxu0 0.0
    %1170 = vmatprep.subr.mxu0 0.0
    %1171 = vmatpush1.msra.mxu0 0.0
    %1172 = vmatprep.subr.mxu0 0.0
    %1173 = vmatpush1.msra.mxu0 0.0
    %1174 = vmatprep.subr.mxu0 0.0
    %1175 = vmatpush1.msra.mxu0 0.0
    %1176 = vmatprep.subr.mxu0 0.0
    %1177 = vmatpush1.msra.mxu0 0.0
    %1178 = vmatprep.subr.mxu0 0.0
    %1179 = vmatpush1.msra.mxu0 0.0
    %1180 = vmatprep.subr.mxu0 0.0
    %1181 = vmatpush1.msra.mxu0 0.0
    %1182 = vmatprep.subr.mxu0 0.0
    %1183 = vmatpush1.msra.mxu0 0.0
    %1184 = vmatprep.subr.mxu0 0.0
    %1185 = vmatpush1.msra.mxu0 0.0
    %1186 = vmatprep.subr.mxu0 0.0
    %1187 = vmatpush1.msra.mxu0 0.0
    %1188 = vmatprep.subr.mxu0 0.0
    %1189 = vmatpush1.msra.mxu0 0.0
    %1190 = vmatprep.subr.mxu0 0.0
    %1191 = vmatpush1.msra.mxu0 0.0
    %1192 = vmatprep.subr.mxu0 0.0
    %1193 = vmatpush1.msra.mxu0 0.0
    %1194 = vmatprep.subr.mxu0 0.0
    %1195 = vmatpush1.msra.mxu0 0.0
    %1196 = vmatprep.subr.mxu0 0.0
    %1197 = vmatpush1.msra.mxu0 0.0
    %1198 = vmatprep.subr.mxu0 0.0
    %1199 = vmatpush1.msra.mxu0 0.0
    %1200 = vmatprep.subr.mxu0 0.0
    %1201 = vmatpush1.msra.mxu0 0.0
    %1202 = vmatprep.subr.mxu0 0.0
    %1203 = vmatpush1.msra.mxu0 0.0
    %1204 = vmatprep.subr.mxu0 0.0
    %1205 = vmatpush1.msra.mxu0 0.0
    %1206 = vmatprep.subr.mxu0 0.0
    %1207 = vmatpush1.msra.mxu0 0.0
    %1208 = vmatprep.mubr.f32.mxu0 0.0
    %1209 = vmatmul.mubr.f32.gmra.mrb[0].mxu0 %v1142
    %v1210 = vpop.f32.mrb[0].mxu0
    %v1211 = vadd.f32 %v296, %v1210
    %v1212 = vpop.f32.mrb[0].mxu0
    %1213 = vdwg.mxu0
    %1214 = vmatprep.subr.mxu0 0.0
    %1215 = vmatpush1.msra.mxu0 %v42
    %1216 = vmatprep.subr.mxu0 0.0
    %1217 = vmatpush1.msra.mxu0 %v43
    %1218 = vmatprep.subr.mxu0 0.0
    %1219 = vmatpush1.msra.mxu0 %v44
    %1220 = vmatprep.subr.mxu0 0.0
    %1221 = vmatpush1.msra.mxu0 %v45
    %1222 = vmatprep.subr.mxu0 0.0
    %1223 = vmatpush1.msra.mxu0 0.0
    %1224 = vmatprep.subr.mxu0 0.0
    %1225 = vmatpush1.msra.mxu0 0.0
    %1226 = vmatprep.subr.mxu0 0.0
    %1227 = vmatpush1.msra.mxu0 0.0
    %1228 = vmatprep.subr.mxu0 0.0
    %1229 = vmatpush1.msra.mxu0 0.0
    %1230 = vmatprep.subr.mxu0 0.0
    %1231 = vmatpush1.msra.mxu0 0.0
    %1232 = vmatprep.subr.mxu0 0.0
    %1233 = vmatpush1.msra.mxu0 0.0
    %1234 = vmatprep.subr.mxu0 0.0
    %1235 = vmatpush1.msra.mxu0 0.0
    %1236 = vmatprep.subr.mxu0 0.0
    %1237 = vmatpush1.msra.mxu0 0.0
    %1238 = vmatprep.subr.mxu0 0.0
    %1239 = vmatpush1.msra.mxu0 0.0
    %1240 = vmatprep.subr.mxu0 0.0
    %1241 = vmatpush1.msra.mxu0 0.0
    %1242 = vmatprep.subr.mxu0 0.0
    %1243 = vmatpush1.msra.mxu0 0.0
    %1244 = vmatprep.subr.mxu0 0.0
    %1245 = vmatpush1.msra.mxu0 0.0
    %1246 = vmatprep.subr.mxu0 0.0
    %1247 = vmatpush1.msra.mxu0 0.0
    %1248 = vmatprep.subr.mxu0 0.0
    %1249 = vmatpush1.msra.mxu0 0.0
    %1250 = vmatprep.subr.mxu0 0.0
    %1251 = vmatpush1.msra.mxu0 0.0
    %1252 = vmatprep.subr.mxu0 0.0
    %1253 = vmatpush1.msra.mxu0 0.0
    %1254 = vmatprep.subr.mxu0 0.0
    %1255 = vmatpush1.msra.mxu0 0.0
    %1256 = vmatprep.subr.mxu0 0.0
    %1257 = vmatpush1.msra.mxu0 0.0
    %1258 = vmatprep.subr.mxu0 0.0
    %1259 = vmatpush1.msra.mxu0 0.0
    %1260 = vmatprep.subr.mxu0 0.0
    %1261 = vmatpush1.msra.mxu0 0.0
    %1262 = vmatprep.subr.mxu0 0.0
    %1263 = vmatpush1.msra.mxu0 0.0
    %1264 = vmatprep.subr.mxu0 0.0
    %1265 = vmatpush1.msra.mxu0 0.0
    %1266 = vmatprep.subr.mxu0 0.0
    %1267 = vmatpush1.msra.mxu0 0.0
    %1268 = vmatprep.subr.mxu0 0.0
    %1269 = vmatpush1.msra.mxu0 0.0
    %1270 = vmatprep.subr.mxu0 0.0
    %1271 = vmatpush1.msra.mxu0 0.0
    %1272 = vmatprep.subr.mxu0 0.0
    %1273 = vmatpush1.msra.mxu0 0.0
    %1274 = vmatprep.subr.mxu0 0.0
    %1275 = vmatpush1.msra.mxu0 0.0
    %1276 = vmatprep.subr.mxu0 0.0
    %1277 = vmatpush1.msra.mxu0 0.0
    %1278 = vmatprep.mubr.f32.mxu0 0.0
    %1279 = vmatmul.mubr.f32.gmra.mrb[0].mxu0 %v1040
    %v1280 = vpop.f32.mrb[0].mxu0
    %v1281 = vadd.f32 %v373, %v1280
    %v1282 = vpop.f32.mrb[0].mxu0
    %1283 = vdwg.mxu0
    %v1285 = vrot.slane %v1281, 4
    %v1287 = vadd.f32 %v288, %v1285
    %v1288 = vxor.u32 %v1287, 2147483648
    %v1289 = vmul.f32 %v1288, 1.442695
    %v1290 = vpow.pop %v1289
    %v1291 = vadd.f32 %v1290, 1.0
    %v1292 = vrcp.pop %v1291
    %v1293 = vmul.f32 1.0, %v1292
    %1294 = vrot.lane.b32.xlu0 %v1285, 32
    %v1295 = vpop.permute.xlu0 %1294
    %v1297 = vmul.f32 %v1293, %v1295
    %1299 = vrot.lane.b32.xlu0 %v1297, 96
    %v1300 = vpop.permute.xlu0 %1299
    %v1302 = vadd.f32 %v288, %v1300
    %v1303 = vtanh.pop %v1302
    %v1305 = vrot.slane %v1303, 4
    %v1307 = vsub.f32 %v1038, %v1305
    %v1309 = vrot.slane %v1307, 4
    %1310 = vrot.lane.b32.xlu0 %v1309, 64
    %v1311 = vpop.permute.xlu0 %1310
    %v1313 = vmul.f32 %v1293, %v1311
    %1315 = vrot.lane.b32.xlu0 %v1313, 64
    %v1316 = vpop.permute.xlu0 %1315
    %v1318 = vadd.f32 %v1303, %v1316
    %v1320 = vrot.slane %v1318, 4
    %v1321 = vsel %vm208, %v1320, 0
    %1323 = vmatprep.subr.mxu0 0.0
    %1324 = vmatpush1.msra.mxu0 %v47
    %1325 = vmatprep.subr.mxu0 0.0
    %1326 = vmatpush1.msra.mxu0 %v48
    %1327 = vmatprep.subr.mxu0 0.0
    %1328 = vmatpush1.msra.mxu0 %v49
    %1329 = vmatprep.subr.mxu0 0.0
    %1330 = vmatpush1.msra.mxu0 %v50
    %1331 = vmatprep.subr.mxu0 0.0
    %1332 = vmatpush1.msra.mxu0 0.0
    %1333 = vmatprep.subr.mxu0 0.0
    %1334 = vmatpush1.msra.mxu0 0.0
    %1335 = vmatprep.subr.mxu0 0.0
    %1336 = vmatpush1.msra.mxu0 0.0
    %1337 = vmatprep.subr.mxu0 0.0
    %1338 = vmatpush1.msra.mxu0 0.0
    %1339 = vmatprep.subr.mxu0 0.0
    %1340 = vmatpush1.msra.mxu0 0.0
    %1341 = vmatprep.subr.mxu0 0.0
    %1342 = vmatpush1.msra.mxu0 0.0
    %1343 = vmatprep.subr.mxu0 0.0
    %1344 = vmatpush1.msra.mxu0 0.0
    %1345 = vmatprep.subr.mxu0 0.0
    %1346 = vmatpush1.msra.mxu0 0.0
    %1347 = vmatprep.subr.mxu0 0.0
    %1348 = vmatpush1.msra.mxu0 0.0
    %1349 = vmatprep.subr.mxu0 0.0
    %1350 = vmatpush1.msra.mxu0 0.0
    %1351 = vmatprep.subr.mxu0 0.0
    %1352 = vmatpush1.msra.mxu0 0.0
    %1353 = vmatprep.subr.mxu0 0.0
    %1354 = vmatpush1.msra.mxu0 0.0
    %1355 = vmatprep.subr.mxu0 0.0
    %1356 = vmatpush1.msra.mxu0 0.0
    %1357 = vmatprep.subr.mxu0 0.0
    %1358 = vmatpush1.msra.mxu0 0.0
    %1359 = vmatprep.subr.mxu0 0.0
    %1360 = vmatpush1.msra.mxu0 0.0
    %1361 = vmatprep.subr.mxu0 0.0
    %1362 = vmatpush1.msra.mxu0 0.0
    %1363 = vmatprep.subr.mxu0 0.0
    %1364 = vmatpush1.msra.mxu0 0.0
    %1365 = vmatprep.subr.mxu0 0.0
    %1366 = vmatpush1.msra.mxu0 0.0
    %1367 = vmatprep.subr.mxu0 0.0
    %1368 = vmatpush1.msra.mxu0 0.0
    %1369 = vmatprep.subr.mxu0 0.0
    %1370 = vmatpush1.msra.mxu0 0.0
    %1371 = vmatprep.subr.mxu0 0.0
    %1372 = vmatpush1.msra.mxu0 0.0
    %1373 = vmatprep.subr.mxu0 0.0
    %1374 = vmatpush1.msra.mxu0 0.0
    %1375 = vmatprep.subr.mxu0 0.0
    %1376 = vmatpush1.msra.mxu0 0.0
    %1377 = vmatprep.subr.mxu0 0.0
    %1378 = vmatpush1.msra.mxu0 0.0
    %1379 = vmatprep.subr.mxu0 0.0
    %1380 = vmatpush1.msra.mxu0 0.0
    %1381 = vmatprep.subr.mxu0 0.0
    %1382 = vmatpush1.msra.mxu0 0.0
    %1383 = vmatprep.subr.mxu0 0.0
    %1384 = vmatpush1.msra.mxu0 0.0
    %1385 = vmatprep.subr.mxu0 0.0
    %1386 = vmatpush1.msra.mxu0 0.0
    %1387 = vmatprep.mubr.f32.mxu0 0.0
    %1388 = vmatmul.mubr.f32.gmra.mrb[0].mxu0 %v1321
    %v1389 = vpop.f32.mrb[0].mxu0
    %v1390 = vadd.f32 %v479, %v1389
    %v1391 = vpop.f32.mrb[0].mxu0
    %1392 = vdwg.mxu0
    %v1393 = vadd.f32 %v1390, %v1211
    %v1394 = vxor.u32 %v1393, 2147483648
    %v1395 = vmul.f32 %v1394, 1.442695
    %v1396 = vpow.pop %v1395
    %v1397 = vadd.f32 %v1396, 1.0
    %v1398 = vrcp.pop %v1397
    %v1399 = vmul.f32 1.0, %v1398
    %1401 = vrot.lane.b32.xlu0 %v1211, 32
    %v1402 = vpop.permute.xlu0 %1401
    %v1404 = vmul.f32 %v1399, %v1402
    %1406 = vrot.lane.b32.xlu0 %v1404, 96
    %v1407 = vpop.permute.xlu0 %1406
    %v1409 = vadd.f32 %v1390, %v1407
    %v1410 = vtanh.pop %v1409
    %v1411 = vsub.f32 %v1140, %v1410
    %1413 = vrot.lane.b32.xlu0 %v1411, 64
    %v1414 = vpop.permute.xlu0 %1413
    %v1416 = vmul.f32 %v1399, %v1414
    %1418 = vrot.lane.b32.xlu0 %v1416, 64
    %v1419 = vpop.permute.xlu0 %1418
    %v1421 = vadd.f32 %v1410, %v1419
    %v1423 = vsel %vm208, %v1421, 0
    %1425 = vmatprep.subr.mxu0 0.0
    %1426 = vmatpush1.msra.mxu0 %v52
    %1427 = vmatprep.subr.mxu0 0.0
    %1428 = vmatpush1.msra.mxu0 %v53
    %1429 = vmatprep.subr.mxu0 0.0
    %1430 = vmatpush1.msra.mxu0 %v54
    %1431 = vmatprep.subr.mxu0 0.0
    %1432 = vmatpush1.msra.mxu0 %v55
    %1433 = vmatprep.subr.mxu0 0.0
    %1434 = vmatpush1.msra.mxu0 0.0
    %1435 = vmatprep.subr.mxu0 0.0
    %1436 = vmatpush1.msra.mxu0 0.0
    %1437 = vmatprep.subr.mxu0 0.0
    %1438 = vmatpush1.msra.mxu0 0.0
    %1439 = vmatprep.subr.mxu0 0.0
    %1440 = vmatpush1.msra.mxu0 0.0
    %1441 = vmatprep.subr.mxu0 0.0
    %1442 = vmatpush1.msra.mxu0 0.0
    %1443 = vmatprep.subr.mxu0 0.0
    %1444 = vmatpush1.msra.mxu0 0.0
    %1445 = vmatprep.subr.mxu0 0.0
    %1446 = vmatpush1.msra.mxu0 0.0
    %1447 = vmatprep.subr.mxu0 0.0
    %1448 = vmatpush1.msra.mxu0 0.0
    %1449 = vmatprep.subr.mxu0 0.0
    %1450 = vmatpush1.msra.mxu0 0.0
    %1451 = vmatprep.subr.mxu0 0.0
    %1452 = vmatpush1.msra.mxu0 0.0
    %1453 = vmatprep.subr.mxu0 0.0
    %1454 = vmatpush1.msra.mxu0 0.0
    %1455 = vmatprep.subr.mxu0 0.0
    %1456 = vmatpush1.msra.mxu0 0.0
    %1457 = vmatprep.subr.mxu0 0.0
    %1458 = vmatpush1.msra.mxu0 0.0
    %1459 = vmatprep.subr.mxu0 0.0
    %1460 = vmatpush1.msra.mxu0 0.0
    %1461 = vmatprep.subr.mxu0 0.0
    %1462 = vmatpush1.msra.mxu0 0.0
    %1463 = vmatprep.subr.mxu0 0.0
    %1464 = vmatpush1.msra.mxu0 0.0
    %1465 = vmatprep.subr.mxu0 0.0
    %1466 = vmatpush1.msra.mxu0 0.0
    %1467 = vmatprep.subr.mxu0 0.0
    %1468 = vmatpush1.msra.mxu0 0.0
    %1469 = vmatprep.subr.mxu0 0.0
    %1470 = vmatpush1.msra.mxu0 0.0
    %1471 = vmatprep.subr.mxu0 0.0
    %1472 = vmatpush1.msra.mxu0 0.0
    %1473 = vmatprep.subr.mxu0 0.0
    %1474 = vmatpush1.msra.mxu0 0.0
    %1475 = vmatprep.subr.mxu0 0.0
    %1476 = vmatpush1.msra.mxu0 0.0
    %1477 = vmatprep.subr.mxu0 0.0
    %1478 = vmatpush1.msra.mxu0 0.0
    %1479 = vmatprep.subr.mxu0 0.0
    %1480 = vmatpush1.msra.mxu0 0.0
    %1481 = vmatprep.subr.mxu0 0.0
    %1482 = vmatpush1.msra.mxu0 0.0
    %1483 = vmatprep.subr.mxu0 0.0
    %1484 = vmatpush1.msra.mxu0 0.0
    %1485 = vmatprep.subr.mxu0 0.0
    %1486 = vmatpush1.msra.mxu0 0.0
    %1487 = vmatprep.subr.mxu0 0.0
    %1488 = vmatpush1.msra.mxu0 0.0
    %1489 = vmatprep.mubr.f32.mxu0 0.0
    %1490 = vmatmul.mubr.f32.gmra.mrb[0].mxu0 %v1423
    %v1491 = vpop.f32.mrb[0].mxu0
    %v1492 = vadd.f32 %v296, %v1491
    %v1493 = vpop.f32.mrb[0].mxu0
    %1494 = vdwg.mxu0
    %1495 = vmatprep.subr.mxu0 0.0
    %1496 = vmatpush1.msra.mxu0 %v42
    %1497 = vmatprep.subr.mxu0 0.0
    %1498 = vmatpush1.msra.mxu0 %v43
    %1499 = vmatprep.subr.mxu0 0.0
    %1500 = vmatpush1.msra.mxu0 %v44
    %1501 = vmatprep.subr.mxu0 0.0
    %1502 = vmatpush1.msra.mxu0 %v45
    %1503 = vmatprep.subr.mxu0 0.0
    %1504 = vmatpush1.msra.mxu0 0.0
    %1505 = vmatprep.subr.mxu0 0.0
    %1506 = vmatpush1.msra.mxu0 0.0
    %1507 = vmatprep.subr.mxu0 0.0
    %1508 = vmatpush1.msra.mxu0 0.0
    %1509 = vmatprep.subr.mxu0 0.0
    %1510 = vmatpush1.msra.mxu0 0.0
    %1511 = vmatprep.subr.mxu0 0.0
    %1512 = vmatpush1.msra.mxu0 0.0
    %1513 = vmatprep.subr.mxu0 0.0
    %1514 = vmatpush1.msra.mxu0 0.0
    %1515 = vmatprep.subr.mxu0 0.0
    %1516 = vmatpush1.msra.mxu0 0.0
    %1517 = vmatprep.subr.mxu0 0.0
    %1518 = vmatpush1.msra.mxu0 0.0
    %1519 = vmatprep.subr.mxu0 0.0
    %1520 = vmatpush1.msra.mxu0 0.0
    %1521 = vmatprep.subr.mxu0 0.0
    %1522 = vmatpush1.msra.mxu0 0.0
    %1523 = vmatprep.subr.mxu0 0.0
    %1524 = vmatpush1.msra.mxu0 0.0
    %1525 = vmatprep.subr.mxu0 0.0
    %1526 = vmatpush1.msra.mxu0 0.0
    %1527 = vmatprep.subr.mxu0 0.0
    %1528 = vmatpush1.msra.mxu0 0.0
    %1529 = vmatprep.subr.mxu0 0.0
    %1530 = vmatpush1.msra.mxu0 0.0
    %1531 = vmatprep.subr.mxu0 0.0
    %1532 = vmatpush1.msra.mxu0 0.0
    %1533 = vmatprep.subr.mxu0 0.0
    %1534 = vmatpush1.msra.mxu0 0.0
    %1535 = vmatprep.subr.mxu0 0.0
    %1536 = vmatpush1.msra.mxu0 0.0
    %1537 = vmatprep.subr.mxu0 0.0
    %1538 = vmatpush1.msra.mxu0 0.0
    %1539 = vmatprep.subr.mxu0 0.0
    %1540 = vmatpush1.msra.mxu0 0.0
    %1541 = vmatprep.subr.mxu0 0.0
    %1542 = vmatpush1.msra.mxu0 0.0
    %1543 = vmatprep.subr.mxu0 0.0
    %1544 = vmatpush1.msra.mxu0 0.0
    %1545 = vmatprep.subr.mxu0 0.0
    %1546 = vmatpush1.msra.mxu0 0.0
    %1547 = vmatprep.subr.mxu0 0.0
    %1548 = vmatpush1.msra.mxu0 0.0
    %1549 = vmatprep.subr.mxu0 0.0
    %1550 = vmatpush1.msra.mxu0 0.0
    %1551 = vmatprep.subr.mxu0 0.0
    %1552 = vmatpush1.msra.mxu0 0.0
    %1553 = vmatprep.subr.mxu0 0.0
    %1554 = vmatpush1.msra.mxu0 0.0
    %1555 = vmatprep.subr.mxu0 0.0
    %1556 = vmatpush1.msra.mxu0 0.0
    %1557 = vmatprep.subr.mxu0 0.0
    %1558 = vmatpush1.msra.mxu0 0.0
    %1559 = vmatprep.mubr.f32.mxu0 0.0
    %1560 = vmatmul.mubr.f32.gmra.mrb[0].mxu0 %v1321
    %v1561 = vpop.f32.mrb[0].mxu0
    %v1562 = vadd.f32 %v373, %v1561
    %v1563 = vpop.f32.mrb[0].mxu0
    %1564 = vdwg.mxu0
    %v1565 = vadd.f32 %v289, %v1562
    %v1566 = vxor.u32 %v1565, 2147483648
    %v1567 = vmul.f32 %v1566, 1.442695
    %v1568 = vpow.pop %v1567
    %v1569 = vadd.f32 %v1568, 1.0
    %v1570 = vrcp.pop %v1569
    %v1571 = vmul.f32 1.0, %v1570
    %1573 = vrot.lane.b32.xlu0 %v1562, 32
    %v1574 = vpop.permute.xlu0 %1573
    %v1576 = vmul.f32 %v1571, %v1574
    %1578 = vrot.lane.b32.xlu0 %v1576, 96
    %v1579 = vpop.permute.xlu0 %1578
    %v1581 = vadd.f32 %v289, %v1579
    %v1582 = vtanh.pop %v1581
    %v1584 = vrot.slane %v1582, 4
    %v1586 = vsub.f32 %v1318, %v1584
    %v1588 = vrot.slane %v1586, 4
    %1589 = vrot.lane.b32.xlu0 %v1588, 64
    %v1590 = vpop.permute.xlu0 %1589
    %v1592 = vmul.f32 %v1571, %v1590
    %1594 = vrot.lane.b32.xlu0 %v1592, 64
    %v1595 = vpop.permute.xlu0 %1594
    %v1597 = vadd.f32 %v1582, %v1595
    %v1599 = vsel %vm208, %v1597, 0
    %1601 = vmatprep.subr.mxu0 0.0
    %1602 = vmatpush1.msra.mxu0 %v47
    %1603 = vmatprep.subr.mxu0 0.0
    %1604 = vmatpush1.msra.mxu0 %v48
    %1605 = vmatprep.subr.mxu0 0.0
    %1606 = vmatpush1.msra.mxu0 %v49
    %1607 = vmatprep.subr.mxu0 0.0
    %1608 = vmatpush1.msra.mxu0 %v50
    %1609 = vmatprep.subr.mxu0 0.0
    %1610 = vmatpush1.msra.mxu0 0.0
    %1611 = vmatprep.subr.mxu0 0.0
    %1612 = vmatpush1.msra.mxu0 0.0
    %1613 = vmatprep.subr.mxu0 0.0
    %1614 = vmatpush1.msra.mxu0 0.0
    %1615 = vmatprep.subr.mxu0 0.0
    %1616 = vmatpush1.msra.mxu0 0.0
    %1617 = vmatprep.subr.mxu0 0.0
    %1618 = vmatpush1.msra.mxu0 0.0
    %1619 = vmatprep.subr.mxu0 0.0
    %1620 = vmatpush1.msra.mxu0 0.0
    %1621 = vmatprep.subr.mxu0 0.0
    %1622 = vmatpush1.msra.mxu0 0.0
    %1623 = vmatprep.subr.mxu0 0.0
    %1624 = vmatpush1.msra.mxu0 0.0
    %1625 = vmatprep.subr.mxu0 0.0
    %1626 = vmatpush1.msra.mxu0 0.0
    %1627 = vmatprep.subr.mxu0 0.0
    %1628 = vmatpush1.msra.mxu0 0.0
    %1629 = vmatprep.subr.mxu0 0.0
    %1630 = vmatpush1.msra.mxu0 0.0
    %1631 = vmatprep.subr.mxu0 0.0
    %1632 = vmatpush1.msra.mxu0 0.0
    %1633 = vmatprep.subr.mxu0 0.0
    %1634 = vmatpush1.msra.mxu0 0.0
    %1635 = vmatprep.subr.mxu0 0.0
    %1636 = vmatpush1.msra.mxu0 0.0
    %1637 = vmatprep.subr.mxu0 0.0
    %1638 = vmatpush1.msra.mxu0 0.0
    %1639 = vmatprep.subr.mxu0 0.0
    %1640 = vmatpush1.msra.mxu0 0.0
    %1641 = vmatprep.subr.mxu0 0.0
    %1642 = vmatpush1.msra.mxu0 0.0
    %1643 = vmatprep.subr.mxu0 0.0
    %1644 = vmatpush1.msra.mxu0 0.0
    %1645 = vmatprep.subr.mxu0 0.0
    %1646 = vmatpush1.msra.mxu0 0.0
    %1647 = vmatprep.subr.mxu0 0.0
    %1648 = vmatpush1.msra.mxu0 0.0
    %1649 = vmatprep.subr.mxu0 0.0
    %1650 = vmatpush1.msra.mxu0 0.0
    %1651 = vmatprep.subr.mxu0 0.0
    %1652 = vmatpush1.msra.mxu0 0.0
    %1653 = vmatprep.subr.mxu0 0.0
    %1654 = vmatpush1.msra.mxu0 0.0
    %1655 = vmatprep.subr.mxu0 0.0
    %1656 = vmatpush1.msra.mxu0 0.0
    %1657 = vmatprep.subr.mxu0 0.0
    %1658 = vmatpush1.msra.mxu0 0.0
    %1659 = vmatprep.subr.mxu0 0.0
    %1660 = vmatpush1.msra.mxu0 0.0
    %1661 = vmatprep.subr.mxu0 0.0
    %1662 = vmatpush1.msra.mxu0 0.0
    %1663 = vmatprep.subr.mxu0 0.0
    %1664 = vmatpush1.msra.mxu0 0.0
    %1665 = vmatprep.mubr.f32.mxu0 0.0
    %1666 = vmatmul.mubr.f32.gmra.mrb[0].mxu0 %v1599
    %v1667 = vpop.f32.mrb[0].mxu0
    %v1668 = vadd.f32 %v479, %v1667
    %v1669 = vpop.f32.mrb[0].mxu0
    %1670 = vdwg.mxu0
    %v1671 = vadd.f32 %v1668, %v1492
    %v1672 = vxor.u32 %v1671, 2147483648
    %v1673 = vmul.f32 %v1672, 1.442695
    %v1674 = vpow.pop %v1673
    %v1675 = vadd.f32 %v1674, 1.0
    %v1676 = vrcp.pop %v1675
    %v1677 = vmul.f32 1.0, %v1676
    %1679 = vrot.lane.b32.xlu0 %v1492, 32
    %v1680 = vpop.permute.xlu0 %1679
    %v1682 = vmul.f32 %v1677, %v1680
    %1684 = vrot.lane.b32.xlu0 %v1682, 96
    %v1685 = vpop.permute.xlu0 %1684
    %v1687 = vadd.f32 %v1668, %v1685
    %v1688 = vtanh.pop %v1687
    %v1689 = vsub.f32 %v1421, %v1688
    %1691 = vrot.lane.b32.xlu0 %v1689, 64
    %v1692 = vpop.permute.xlu0 %1691
    %v1694 = vmul.f32 %v1677, %v1692
    %1696 = vrot.lane.b32.xlu0 %v1694, 64
    %v1697 = vpop.permute.xlu0 %1696
    %v1699 = vadd.f32 %v1688, %v1697
    %v1701 = vsel %vm208, %v1699, 0
    %1703 = vmatprep.subr.mxu0 0.0
    %1704 = vmatpush1.msra.mxu0 %v52
    %1705 = vmatprep.subr.mxu0 0.0
    %1706 = vmatpush1.msra.mxu0 %v53
    %1707 = vmatprep.subr.mxu0 0.0
    %1708 = vmatpush1.msra.mxu0 %v54
    %1709 = vmatprep.subr.mxu0 0.0
    %1710 = vmatpush1.msra.mxu0 %v55
    %1711 = vmatprep.subr.mxu0 0.0
    %1712 = vmatpush1.msra.mxu0 0.0
    %1713 = vmatprep.subr.mxu0 0.0
    %1714 = vmatpush1.msra.mxu0 0.0
    %1715 = vmatprep.subr.mxu0 0.0
    %1716 = vmatpush1.msra.mxu0 0.0
    %1717 = vmatprep.subr.mxu0 0.0
    %1718 = vmatpush1.msra.mxu0 0.0
    %1719 = vmatprep.subr.mxu0 0.0
    %1720 = vmatpush1.msra.mxu0 0.0
    %1721 = vmatprep.subr.mxu0 0.0
    %1722 = vmatpush1.msra.mxu0 0.0
    %1723 = vmatprep.subr.mxu0 0.0
    %1724 = vmatpush1.msra.mxu0 0.0
    %1725 = vmatprep.subr.mxu0 0.0
    %1726 = vmatpush1.msra.mxu0 0.0
    %1727 = vmatprep.subr.mxu0 0.0
    %1728 = vmatpush1.msra.mxu0 0.0
    %1729 = vmatprep.subr.mxu0 0.0
    %1730 = vmatpush1.msra.mxu0 0.0
    %1731 = vmatprep.subr.mxu0 0.0
    %1732 = vmatpush1.msra.mxu0 0.0
    %1733 = vmatprep.subr.mxu0 0.0
    %1734 = vmatpush1.msra.mxu0 0.0
    %1735 = vmatprep.subr.mxu0 0.0
    %1736 = vmatpush1.msra.mxu0 0.0
    %1737 = vmatprep.subr.mxu0 0.0
    %1738 = vmatpush1.msra.mxu0 0.0
    %1739 = vmatprep.subr.mxu0 0.0
    %1740 = vmatpush1.msra.mxu0 0.0
    %1741 = vmatprep.subr.mxu0 0.0
    %1742 = vmatpush1.msra.mxu0 0.0
    %1743 = vmatprep.subr.mxu0 0.0
    %1744 = vmatpush1.msra.mxu0 0.0
    %1745 = vmatprep.subr.mxu0 0.0
    %1746 = vmatpush1.msra.mxu0 0.0
    %1747 = vmatprep.subr.mxu0 0.0
    %1748 = vmatpush1.msra.mxu0 0.0
    %1749 = vmatprep.subr.mxu0 0.0
    %1750 = vmatpush1.msra.mxu0 0.0
    %1751 = vmatprep.subr.mxu0 0.0
    %1752 = vmatpush1.msra.mxu0 0.0
    %1753 = vmatprep.subr.mxu0 0.0
    %1754 = vmatpush1.msra.mxu0 0.0
    %1755 = vmatprep.subr.mxu0 0.0
    %1756 = vmatpush1.msra.mxu0 0.0
    %1757 = vmatprep.subr.mxu0 0.0
    %1758 = vmatpush1.msra.mxu0 0.0
    %1759 = vmatprep.subr.mxu0 0.0
    %1760 = vmatpush1.msra.mxu0 0.0
    %1761 = vmatprep.subr.mxu0 0.0
    %1762 = vmatpush1.msra.mxu0 0.0
    %1763 = vmatprep.subr.mxu0 0.0
    %1764 = vmatpush1.msra.mxu0 0.0
    %1765 = vmatprep.subr.mxu0 0.0
    %1766 = vmatpush1.msra.mxu0 0.0
    %1767 = vmatprep.mubr.f32.mxu0 0.0
    %1768 = vmatmul.mubr.f32.gmra.mrb[0].mxu0 %v1701
    %v1769 = vpop.f32.mrb[0].mxu0
    %v1770 = vadd.f32 %v296, %v1769
    %v1771 = vpop.f32.mrb[0].mxu0
    %1772 = vdwg.mxu0
    %1773 = vmatprep.subr.mxu0 0.0
    %1774 = vmatpush1.msra.mxu0 %v42
    %1775 = vmatprep.subr.mxu0 0.0
    %1776 = vmatpush1.msra.mxu0 %v43
    %1777 = vmatprep.subr.mxu0 0.0
    %1778 = vmatpush1.msra.mxu0 %v44
    %1779 = vmatprep.subr.mxu0 0.0
    %1780 = vmatpush1.msra.mxu0 %v45
    %1781 = vmatprep.subr.mxu0 0.0
    %1782 = vmatpush1.msra.mxu0 0.0
    %1783 = vmatprep.subr.mxu0 0.0
    %1784 = vmatpush1.msra.mxu0 0.0
    %1785 = vmatprep.subr.mxu0 0.0
    %1786 = vmatpush1.msra.mxu0 0.0
    %1787 = vmatprep.subr.mxu0 0.0
    %1788 = vmatpush1.msra.mxu0 0.0
    %1789 = vmatprep.subr.mxu0 0.0
    %1790 = vmatpush1.msra.mxu0 0.0
    %1791 = vmatprep.subr.mxu0 0.0
    %1792 = vmatpush1.msra.mxu0 0.0
    %1793 = vmatprep.subr.mxu0 0.0
    %1794 = vmatpush1.msra.mxu0 0.0
    %1795 = vmatprep.subr.mxu0 0.0
    %1796 = vmatpush1.msra.mxu0 0.0
    %1797 = vmatprep.subr.mxu0 0.0
    %1798 = vmatpush1.msra.mxu0 0.0
    %1799 = vmatprep.subr.mxu0 0.0
    %1800 = vmatpush1.msra.mxu0 0.0
    %1801 = vmatprep.subr.mxu0 0.0
    %1802 = vmatpush1.msra.mxu0 0.0
    %1803 = vmatprep.subr.mxu0 0.0
    %1804 = vmatpush1.msra.mxu0 0.0
    %1805 = vmatprep.subr.mxu0 0.0
    %1806 = vmatpush1.msra.mxu0 0.0
    %1807 = vmatprep.subr.mxu0 0.0
    %1808 = vmatpush1.msra.mxu0 0.0
    %1809 = vmatprep.subr.mxu0 0.0
    %1810 = vmatpush1.msra.mxu0 0.0
    %1811 = vmatprep.subr.mxu0 0.0
    %1812 = vmatpush1.msra.mxu0 0.0
    %1813 = vmatprep.subr.mxu0 0.0
    %1814 = vmatpush1.msra.mxu0 0.0
    %1815 = vmatprep.subr.mxu0 0.0
    %1816 = vmatpush1.msra.mxu0 0.0
    %1817 = vmatprep.subr.mxu0 0.0
    %1818 = vmatpush1.msra.mxu0 0.0
    %1819 = vmatprep.subr.mxu0 0.0
    %1820 = vmatpush1.msra.mxu0 0.0
    %1821 = vmatprep.subr.mxu0 0.0
    %1822 = vmatpush1.msra.mxu0 0.0
    %1823 = vmatprep.subr.mxu0 0.0
    %1824 = vmatpush1.msra.mxu0 0.0
    %1825 = vmatprep.subr.mxu0 0.0
    %1826 = vmatpush1.msra.mxu0 0.0
    %1827 = vmatprep.subr.mxu0 0.0
    %1828 = vmatpush1.msra.mxu0 0.0
    %1829 = vmatprep.subr.mxu0 0.0
    %1830 = vmatpush1.msra.mxu0 0.0
    %1831 = vmatprep.subr.mxu0 0.0
    %1832 = vmatpush1.msra.mxu0 0.0
    %1833 = vmatprep.subr.mxu0 0.0
    %1834 = vmatpush1.msra.mxu0 0.0
    %1835 = vmatprep.subr.mxu0 0.0
    %1836 = vmatpush1.msra.mxu0 0.0
    %1837 = vmatprep.mubr.f32.mxu0 0.0
    %1838 = vmatmul.mubr.f32.gmra.mrb[0].mxu0 %v1599
    %v1839 = vpop.f32.mrb[0].mxu0
    %v1840 = vadd.f32 %v373, %v1839
    %v1841 = vpop.f32.mrb[0].mxu0
    %1842 = vdwg.mxu0
    %v1844 = vrot.slane %v1840, 4
    %v1846 = vadd.f32 %v290, %v1844
    %v1847 = vxor.u32 %v1846, 2147483648
    %v1848 = vmul.f32 %v1847, 1.442695
    %v1849 = vpow.pop %v1848
    %v1850 = vadd.f32 %v1849, 1.0
    %v1851 = vrcp.pop %v1850
    %v1852 = vmul.f32 1.0, %v1851
    %1853 = vrot.lane.b32.xlu0 %v1844, 32
    %v1854 = vpop.permute.xlu0 %1853
    %v1856 = vmul.f32 %v1852, %v1854
    %1858 = vrot.lane.b32.xlu0 %v1856, 96
    %v1859 = vpop.permute.xlu0 %1858
    %v1861 = vadd.f32 %v290, %v1859
    %v1862 = vtanh.pop %v1861
    %v1864 = vrot.slane %v1862, 4
    %v1866 = vsub.f32 %v1597, %v1864
    %v1868 = vrot.slane %v1866, 4
    %1869 = vrot.lane.b32.xlu0 %v1868, 64
    %v1870 = vpop.permute.xlu0 %1869
    %v1872 = vmul.f32 %v1852, %v1870
    %1874 = vrot.lane.b32.xlu0 %v1872, 64
    %v1875 = vpop.permute.xlu0 %1874
    %v1877 = vadd.f32 %v1862, %v1875
    %v1879 = vrot.slane %v1877, 4
    %v1880 = vsel %vm208, %v1879, 0
    %1882 = vmatprep.subr.mxu0 0.0
    %1883 = vmatpush1.msra.mxu0 %v47
    %1884 = vmatprep.subr.mxu0 0.0
    %1885 = vmatpush1.msra.mxu0 %v48
    %1886 = vmatprep.subr.mxu0 0.0
    %1887 = vmatpush1.msra.mxu0 %v49
    %1888 = vmatprep.subr.mxu0 0.0
    %1889 = vmatpush1.msra.mxu0 %v50
    %1890 = vmatprep.subr.mxu0 0.0
    %1891 = vmatpush1.msra.mxu0 0.0
    %1892 = vmatprep.subr.mxu0 0.0
    %1893 = vmatpush1.msra.mxu0 0.0
    %1894 = vmatprep.subr.mxu0 0.0
    %1895 = vmatpush1.msra.mxu0 0.0
    %1896 = vmatprep.subr.mxu0 0.0
    %1897 = vmatpush1.msra.mxu0 0.0
    %1898 = vmatprep.subr.mxu0 0.0
    %1899 = vmatpush1.msra.mxu0 0.0
    %1900 = vmatprep.subr.mxu0 0.0
    %1901 = vmatpush1.msra.mxu0 0.0
    %1902 = vmatprep.subr.mxu0 0.0
    %1903 = vmatpush1.msra.mxu0 0.0
    %1904 = vmatprep.subr.mxu0 0.0
    %1905 = vmatpush1.msra.mxu0 0.0
    %1906 = vmatprep.subr.mxu0 0.0
    %1907 = vmatpush1.msra.mxu0 0.0
    %1908 = vmatprep.subr.mxu0 0.0
    %1909 = vmatpush1.msra.mxu0 0.0
    %1910 = vmatprep.subr.mxu0 0.0
    %1911 = vmatpush1.msra.mxu0 0.0
    %1912 = vmatprep.subr.mxu0 0.0
    %1913 = vmatpush1.msra.mxu0 0.0
    %1914 = vmatprep.subr.mxu0 0.0
    %1915 = vmatpush1.msra.mxu0 0.0
    %1916 = vmatprep.subr.mxu0 0.0
    %1917 = vmatpush1.msra.mxu0 0.0
    %1918 = vmatprep.subr.mxu0 0.0
    %1919 = vmatpush1.msra.mxu0 0.0
    %1920 = vmatprep.subr.mxu0 0.0
    %1921 = vmatpush1.msra.mxu0 0.0
    %1922 = vmatprep.subr.mxu0 0.0
    %1923 = vmatpush1.msra.mxu0 0.0
    %1924 = vmatprep.subr.mxu0 0.0
    %1925 = vmatpush1.msra.mxu0 0.0
    %1926 = vmatprep.subr.mxu0 0.0
    %1927 = vmatpush1.msra.mxu0 0.0
    %1928 = vmatprep.subr.mxu0 0.0
    %1929 = vmatpush1.msra.mxu0 0.0
    %1930 = vmatprep.subr.mxu0 0.0
    %1931 = vmatpush1.msra.mxu0 0.0
    %1932 = vmatprep.subr.mxu0 0.0
    %1933 = vmatpush1.msra.mxu0 0.0
    %1934 = vmatprep.subr.mxu0 0.0
    %1935 = vmatpush1.msra.mxu0 0.0
    %1936 = vmatprep.subr.mxu0 0.0
    %1937 = vmatpush1.msra.mxu0 0.0
    %1938 = vmatprep.subr.mxu0 0.0
    %1939 = vmatpush1.msra.mxu0 0.0
    %1940 = vmatprep.subr.mxu0 0.0
    %1941 = vmatpush1.msra.mxu0 0.0
    %1942 = vmatprep.subr.mxu0 0.0
    %1943 = vmatpush1.msra.mxu0 0.0
    %1944 = vmatprep.subr.mxu0 0.0
    %1945 = vmatpush1.msra.mxu0 0.0
    %1946 = vmatprep.mubr.f32.mxu0 0.0
    %1947 = vmatmul.mubr.f32.gmra.mrb[0].mxu0 %v1880
    %v1948 = vpop.f32.mrb[0].mxu0
    %v1949 = vadd.f32 %v479, %v1948
    %v1950 = vpop.f32.mrb[0].mxu0
    %1951 = vdwg.mxu0
    %v1952 = vadd.f32 %v1949, %v1770
    %v1953 = vxor.u32 %v1952, 2147483648
    %v1954 = vmul.f32 %v1953, 1.442695
    %v1955 = vpow.pop %v1954
    %v1956 = vadd.f32 %v1955, 1.0
    %v1957 = vrcp.pop %v1956
    %v1958 = vmul.f32 1.0, %v1957
    %1960 = vrot.lane.b32.xlu0 %v1770, 32
    %v1961 = vpop.permute.xlu0 %1960
    %v1963 = vmul.f32 %v1958, %v1961
    %1965 = vrot.lane.b32.xlu0 %v1963, 96
    %v1966 = vpop.permute.xlu0 %1965
    %v1968 = vadd.f32 %v1949, %v1966
    %v1969 = vtanh.pop %v1968
    %v1970 = vsub.f32 %v1699, %v1969
    %1972 = vrot.lane.b32.xlu0 %v1970, 64
    %v1973 = vpop.permute.xlu0 %1972
    %v1975 = vmul.f32 %v1958, %v1973
    %1977 = vrot.lane.b32.xlu0 %v1975, 64
    %v1978 = vpop.permute.xlu0 %1977
    %v1980 = vadd.f32 %v1969, %v1978
    %v1982 = vsel %vm208, %v1980, 0
    %1984 = vmatprep.subr.mxu0 0.0
    %1985 = vmatpush1.msra.mxu0 %v52
    %1986 = vmatprep.subr.mxu0 0.0
    %1987 = vmatpush1.msra.mxu0 %v53
    %1988 = vmatprep.subr.mxu0 0.0
    %1989 = vmatpush1.msra.mxu0 %v54
    %1990 = vmatprep.subr.mxu0 0.0
    %1991 = vmatpush1.msra.mxu0 %v55
    %1992 = vmatprep.subr.mxu0 0.0
    %1993 = vmatpush1.msra.mxu0 0.0
    %1994 = vmatprep.subr.mxu0 0.0
    %1995 = vmatpush1.msra.mxu0 0.0
    %1996 = vmatprep.subr.mxu0 0.0
    %1997 = vmatpush1.msra.mxu0 0.0
    %1998 = vmatprep.subr.mxu0 0.0
    %1999 = vmatpush1.msra.mxu0 0.0
    %2000 = vmatprep.subr.mxu0 0.0
    %2001 = vmatpush1.msra.mxu0 0.0
    %2002 = vmatprep.subr.mxu0 0.0
    %2003 = vmatpush1.msra.mxu0 0.0
    %2004 = vmatprep.subr.mxu0 0.0
    %2005 = vmatpush1.msra.mxu0 0.0
    %2006 = vmatprep.subr.mxu0 0.0
    %2007 = vmatpush1.msra.mxu0 0.0
    %2008 = vmatprep.subr.mxu0 0.0
    %2009 = vmatpush1.msra.mxu0 0.0
    %2010 = vmatprep.subr.mxu0 0.0
    %2011 = vmatpush1.msra.mxu0 0.0
    %2012 = vmatprep.subr.mxu0 0.0
    %2013 = vmatpush1.msra.mxu0 0.0
    %2014 = vmatprep.subr.mxu0 0.0
    %2015 = vmatpush1.msra.mxu0 0.0
    %2016 = vmatprep.subr.mxu0 0.0
    %2017 = vmatpush1.msra.mxu0 0.0
    %2018 = vmatprep.subr.mxu0 0.0
    %2019 = vmatpush1.msra.mxu0 0.0
    %2020 = vmatprep.subr.mxu0 0.0
    %2021 = vmatpush1.msra.mxu0 0.0
    %2022 = vmatprep.subr.mxu0 0.0
    %2023 = vmatpush1.msra.mxu0 0.0
    %2024 = vmatprep.subr.mxu0 0.0
    %2025 = vmatpush1.msra.mxu0 0.0
    %2026 = vmatprep.subr.mxu0 0.0
    %2027 = vmatpush1.msra.mxu0 0.0
    %2028 = vmatprep.subr.mxu0 0.0
    %2029 = vmatpush1.msra.mxu0 0.0
    %2030 = vmatprep.subr.mxu0 0.0
    %2031 = vmatpush1.msra.mxu0 0.0
    %2032 = vmatprep.subr.mxu0 0.0
    %2033 = vmatpush1.msra.mxu0 0.0
    %2034 = vmatprep.subr.mxu0 0.0
    %2035 = vmatpush1.msra.mxu0 0.0
    %2036 = vmatprep.subr.mxu0 0.0
    %2037 = vmatpush1.msra.mxu0 0.0
    %2038 = vmatprep.subr.mxu0 0.0
    %2039 = vmatpush1.msra.mxu0 0.0
    %2040 = vmatprep.subr.mxu0 0.0
    %2041 = vmatpush1.msra.mxu0 0.0
    %2042 = vmatprep.subr.mxu0 0.0
    %2043 = vmatpush1.msra.mxu0 0.0
    %2044 = vmatprep.subr.mxu0 0.0
    %2045 = vmatpush1.msra.mxu0 0.0
    %2046 = vmatprep.subr.mxu0 0.0
    %2047 = vmatpush1.msra.mxu0 0.0
    %2048 = vmatprep.mubr.f32.mxu0 0.0
    %2049 = vmatmul.mubr.f32.gmra.mrb[0].mxu0 %v1982
    %v2050 = vpop.f32.mrb[0].mxu0
    %v2051 = vadd.f32 %v296, %v2050
    %v2052 = vpop.f32.mrb[0].mxu0
    %2053 = vdwg.mxu0
    %2054 = vmatprep.subr.mxu0 0.0
    %2055 = vmatpush1.msra.mxu0 %v42
    %2056 = vmatprep.subr.mxu0 0.0
    %2057 = vmatpush1.msra.mxu0 %v43
    %2058 = vmatprep.subr.mxu0 0.0
    %2059 = vmatpush1.msra.mxu0 %v44
    %2060 = vmatprep.subr.mxu0 0.0
    %2061 = vmatpush1.msra.mxu0 %v45
    %2062 = vmatprep.subr.mxu0 0.0
    %2063 = vmatpush1.msra.mxu0 0.0
    %2064 = vmatprep.subr.mxu0 0.0
    %2065 = vmatpush1.msra.mxu0 0.0
    %2066 = vmatprep.subr.mxu0 0.0
    %2067 = vmatpush1.msra.mxu0 0.0
    %2068 = vmatprep.subr.mxu0 0.0
    %2069 = vmatpush1.msra.mxu0 0.0
    %2070 = vmatprep.subr.mxu0 0.0
    %2071 = vmatpush1.msra.mxu0 0.0
    %2072 = vmatprep.subr.mxu0 0.0
    %2073 = vmatpush1.msra.mxu0 0.0
    %2074 = vmatprep.subr.mxu0 0.0
    %2075 = vmatpush1.msra.mxu0 0.0
    %2076 = vmatprep.subr.mxu0 0.0
    %2077 = vmatpush1.msra.mxu0 0.0
    %2078 = vmatprep.subr.mxu0 0.0
    %2079 = vmatpush1.msra.mxu0 0.0
    %2080 = vmatprep.subr.mxu0 0.0
    %2081 = vmatpush1.msra.mxu0 0.0
    %2082 = vmatprep.subr.mxu0 0.0
    %2083 = vmatpush1.msra.mxu0 0.0
    %2084 = vmatprep.subr.mxu0 0.0
    %2085 = vmatpush1.msra.mxu0 0.0
    %2086 = vmatprep.subr.mxu0 0.0
    %2087 = vmatpush1.msra.mxu0 0.0
    %2088 = vmatprep.subr.mxu0 0.0
    %2089 = vmatpush1.msra.mxu0 0.0
    %2090 = vmatprep.subr.mxu0 0.0
    %2091 = vmatpush1.msra.mxu0 0.0
    %2092 = vmatprep.subr.mxu0 0.0
    %2093 = vmatpush1.msra.mxu0 0.0
    %2094 = vmatprep.subr.mxu0 0.0
    %2095 = vmatpush1.msra.mxu0 0.0
    %2096 = vmatprep.subr.mxu0 0.0
    %2097 = vmatpush1.msra.mxu0 0.0
    %2098 = vmatprep.subr.mxu0 0.0
    %2099 = vmatpush1.msra.mxu0 0.0
    %2100 = vmatprep.subr.mxu0 0.0
    %2101 = vmatpush1.msra.mxu0 0.0
    %2102 = vmatprep.subr.mxu0 0.0
    %2103 = vmatpush1.msra.mxu0 0.0
    %2104 = vmatprep.subr.mxu0 0.0
    %2105 = vmatpush1.msra.mxu0 0.0
    %2106 = vmatprep.subr.mxu0 0.0
    %2107 = vmatpush1.msra.mxu0 0.0
    %2108 = vmatprep.subr.mxu0 0.0
    %2109 = vmatpush1.msra.mxu0 0.0
    %2110 = vmatprep.subr.mxu0 0.0
    %2111 = vmatpush1.msra.mxu0 0.0
    %2112 = vmatprep.subr.mxu0 0.0
    %2113 = vmatpush1.msra.mxu0 0.0
    %2114 = vmatprep.subr.mxu0 0.0
    %2115 = vmatpush1.msra.mxu0 0.0
    %2116 = vmatprep.subr.mxu0 0.0
    %2117 = vmatpush1.msra.mxu0 0.0
    %2118 = vmatprep.mubr.f32.mxu0 0.0
    %2119 = vmatmul.mubr.f32.gmra.mrb[0].mxu0 %v1880
    %v2120 = vpop.f32.mrb[0].mxu0
    %v2121 = vadd.f32 %v373, %v2120
    %v2122 = vpop.f32.mrb[0].mxu0
    %2123 = vdwg.mxu0
    %v2124 = vadd.f32 %v291, %v2121
    %v2125 = vxor.u32 %v2124, 2147483648
    %v2126 = vmul.f32 %v2125, 1.442695
    %v2127 = vpow.pop %v2126
    %v2128 = vadd.f32 %v2127, 1.0
    %v2129 = vrcp.pop %v2128
    %v2130 = vmul.f32 1.0, %v2129
    %2132 = vrot.lane.b32.xlu0 %v2121, 32
    %v2133 = vpop.permute.xlu0 %2132
    %v2135 = vmul.f32 %v2130, %v2133
    %2137 = vrot.lane.b32.xlu0 %v2135, 96
    %v2138 = vpop.permute.xlu0 %2137
    %v2140 = vadd.f32 %v291, %v2138
    %v2141 = vtanh.pop %v2140
    %v2143 = vrot.slane %v2141, 4
    %v2145 = vsub.f32 %v1877, %v2143
    %v2147 = vrot.slane %v2145, 4
    %2148 = vrot.lane.b32.xlu0 %v2147, 64
    %v2149 = vpop.permute.xlu0 %2148
    %v2151 = vmul.f32 %v2130, %v2149
    %2153 = vrot.lane.b32.xlu0 %v2151, 64
    %v2154 = vpop.permute.xlu0 %2153
    %v2156 = vadd.f32 %v2141, %v2154
    %v2158 = vsel %vm208, %v2156, 0
    %2160 = vmatprep.subr.mxu0 0.0
    %2161 = vmatpush1.msra.mxu0 %v47
    %2162 = vmatprep.subr.mxu0 0.0
    %2163 = vmatpush1.msra.mxu0 %v48
    %2164 = vmatprep.subr.mxu0 0.0
    %2165 = vmatpush1.msra.mxu0 %v49
    %2166 = vmatprep.subr.mxu0 0.0
    %2167 = vmatpush1.msra.mxu0 %v50
    %2168 = vmatprep.subr.mxu0 0.0
    %2169 = vmatpush1.msra.mxu0 0.0
    %2170 = vmatprep.subr.mxu0 0.0
    %2171 = vmatpush1.msra.mxu0 0.0
    %2172 = vmatprep.subr.mxu0 0.0
    %2173 = vmatpush1.msra.mxu0 0.0
    %2174 = vmatprep.subr.mxu0 0.0
    %2175 = vmatpush1.msra.mxu0 0.0
    %2176 = vmatprep.subr.mxu0 0.0
    %2177 = vmatpush1.msra.mxu0 0.0
    %2178 = vmatprep.subr.mxu0 0.0
    %2179 = vmatpush1.msra.mxu0 0.0
    %2180 = vmatprep.subr.mxu0 0.0
    %2181 = vmatpush1.msra.mxu0 0.0
    %2182 = vmatprep.subr.mxu0 0.0
    %2183 = vmatpush1.msra.mxu0 0.0
    %2184 = vmatprep.subr.mxu0 0.0
    %2185 = vmatpush1.msra.mxu0 0.0
    %2186 = vmatprep.subr.mxu0 0.0
    %2187 = vmatpush1.msra.mxu0 0.0
    %2188 = vmatprep.subr.mxu0 0.0
    %2189 = vmatpush1.msra.mxu0 0.0
    %2190 = vmatprep.subr.mxu0 0.0
    %2191 = vmatpush1.msra.mxu0 0.0
    %2192 = vmatprep.subr.mxu0 0.0
    %2193 = vmatpush1.msra.mxu0 0.0
    %2194 = vmatprep.subr.mxu0 0.0
    %2195 = vmatpush1.msra.mxu0 0.0
    %2196 = vmatprep.subr.mxu0 0.0
    %2197 = vmatpush1.msra.mxu0 0.0
    %2198 = vmatprep.subr.mxu0 0.0
    %2199 = vmatpush1.msra.mxu0 0.0
    %2200 = vmatprep.subr.mxu0 0.0
    %2201 = vmatpush1.msra.mxu0 0.0
    %2202 = vmatprep.subr.mxu0 0.0
    %2203 = vmatpush1.msra.mxu0 0.0
    %2204 = vmatprep.subr.mxu0 0.0
    %2205 = vmatpush1.msra.mxu0 0.0
    %2206 = vmatprep.subr.mxu0 0.0
    %2207 = vmatpush1.msra.mxu0 0.0
    %2208 = vmatprep.subr.mxu0 0.0
    %2209 = vmatpush1.msra.mxu0 0.0
    %2210 = vmatprep.subr.mxu0 0.0
    %2211 = vmatpush1.msra.mxu0 0.0
    %2212 = vmatprep.subr.mxu0 0.0
    %2213 = vmatpush1.msra.mxu0 0.0
    %2214 = vmatprep.subr.mxu0 0.0
    %2215 = vmatpush1.msra.mxu0 0.0
    %2216 = vmatprep.subr.mxu0 0.0
    %2217 = vmatpush1.msra.mxu0 0.0
    %2218 = vmatprep.subr.mxu0 0.0
    %2219 = vmatpush1.msra.mxu0 0.0
    %2220 = vmatprep.subr.mxu0 0.0
    %2221 = vmatpush1.msra.mxu0 0.0
    %2222 = vmatprep.subr.mxu0 0.0
    %2223 = vmatpush1.msra.mxu0 0.0
    %2224 = vmatprep.mubr.f32.mxu0 0.0
    %2225 = vmatmul.mubr.f32.gmra.mrb[0].mxu0 %v2158
    %v2226 = vpop.f32.mrb[0].mxu0
    %v2227 = vadd.f32 %v479, %v2226
    %v2228 = vpop.f32.mrb[0].mxu0
    %2229 = vdwg.mxu0
    %v2230 = vadd.f32 %v2227, %v2051
    %v2231 = vxor.u32 %v2230, 2147483648
    %v2232 = vmul.f32 %v2231, 1.442695
    %v2233 = vpow.pop %v2232
    %v2234 = vadd.f32 %v2233, 1.0
    %v2235 = vrcp.pop %v2234
    %v2236 = vmul.f32 1.0, %v2235
    %2238 = vrot.lane.b32.xlu0 %v2051, 32
    %v2239 = vpop.permute.xlu0 %2238
    %v2241 = vmul.f32 %v2236, %v2239
    %2243 = vrot.lane.b32.xlu0 %v2241, 96
    %v2244 = vpop.permute.xlu0 %2243
    %v2246 = vadd.f32 %v2227, %v2244
    %v2247 = vtanh.pop %v2246
    %v2248 = vsub.f32 %v1980, %v2247
    %2250 = vrot.lane.b32.xlu0 %v2248, 64
    %v2251 = vpop.permute.xlu0 %2250
    %v2253 = vmul.f32 %v2236, %v2251
    %2255 = vrot.lane.b32.xlu0 %v2253, 64
    %v2256 = vpop.permute.xlu0 %2255
    %v2258 = vadd.f32 %v2247, %v2256
    %v2260 = vsel %vm208, %v2258, 0
    %2262 = vmatprep.subr.mxu0 0.0
    %2263 = vmatpush1.msra.mxu0 %v52
    %2264 = vmatprep.subr.mxu0 0.0
    %2265 = vmatpush1.msra.mxu0 %v53
    %2266 = vmatprep.subr.mxu0 0.0
    %2267 = vmatpush1.msra.mxu0 %v54
    %2268 = vmatprep.subr.mxu0 0.0
    %2269 = vmatpush1.msra.mxu0 %v55
    %2270 = vmatprep.subr.mxu0 0.0
    %2271 = vmatpush1.msra.mxu0 0.0
    %2272 = vmatprep.subr.mxu0 0.0
    %2273 = vmatpush1.msra.mxu0 0.0
    %2274 = vmatprep.subr.mxu0 0.0
    %2275 = vmatpush1.msra.mxu0 0.0
    %2276 = vmatprep.subr.mxu0 0.0
    %2277 = vmatpush1.msra.mxu0 0.0
    %2278 = vmatprep.subr.mxu0 0.0
    %2279 = vmatpush1.msra.mxu0 0.0
    %2280 = vmatprep.subr.mxu0 0.0
    %2281 = vmatpush1.msra.mxu0 0.0
    %2282 = vmatprep.subr.mxu0 0.0
    %2283 = vmatpush1.msra.mxu0 0.0
    %2284 = vmatprep.subr.mxu0 0.0
    %2285 = vmatpush1.msra.mxu0 0.0
    %2286 = vmatprep.subr.mxu0 0.0
    %2287 = vmatpush1.msra.mxu0 0.0
    %2288 = vmatprep.subr.mxu0 0.0
    %2289 = vmatpush1.msra.mxu0 0.0
    %2290 = vmatprep.subr.mxu0 0.0
    %2291 = vmatpush1.msra.mxu0 0.0
    %2292 = vmatprep.subr.mxu0 0.0
    %2293 = vmatpush1.msra.mxu0 0.0
    %2294 = vmatprep.subr.mxu0 0.0
    %2295 = vmatpush1.msra.mxu0 0.0
    %2296 = vmatprep.subr.mxu0 0.0
    %2297 = vmatpush1.msra.mxu0 0.0
    %2298 = vmatprep.subr.mxu0 0.0
    %2299 = vmatpush1.msra.mxu0 0.0
    %2300 = vmatprep.subr.mxu0 0.0
    %2301 = vmatpush1.msra.mxu0 0.0
    %2302 = vmatprep.subr.mxu0 0.0
    %2303 = vmatpush1.msra.mxu0 0.0
    %2304 = vmatprep.subr.mxu0 0.0
    %2305 = vmatpush1.msra.mxu0 0.0
    %2306 = vmatprep.subr.mxu0 0.0
    %2307 = vmatpush1.msra.mxu0 0.0
    %2308 = vmatprep.subr.mxu0 0.0
    %2309 = vmatpush1.msra.mxu0 0.0
    %2310 = vmatprep.subr.mxu0 0.0
    %2311 = vmatpush1.msra.mxu0 0.0
    %2312 = vmatprep.subr.mxu0 0.0
    %2313 = vmatpush1.msra.mxu0 0.0
    %2314 = vmatprep.subr.mxu0 0.0
    %2315 = vmatpush1.msra.mxu0 0.0
    %2316 = vmatprep.subr.mxu0 0.0
    %2317 = vmatpush1.msra.mxu0 0.0
    %2318 = vmatprep.subr.mxu0 0.0
    %2319 = vmatpush1.msra.mxu0 0.0
    %2320 = vmatprep.subr.mxu0 0.0
    %2321 = vmatpush1.msra.mxu0 0.0
    %2322 = vmatprep.subr.mxu0 0.0
    %2323 = vmatpush1.msra.mxu0 0.0
    %2324 = vmatprep.subr.mxu0 0.0
    %2325 = vmatpush1.msra.mxu0 0.0
    %2326 = vmatprep.mubr.f32.mxu0 0.0
    %2327 = vmatmul.mubr.f32.gmra.mrb[0].mxu0 %v2260
    %v2328 = vpop.f32.mrb[0].mxu0
    %v2329 = vadd.f32 %v296, %v2328
    %v2330 = vpop.f32.mrb[0].mxu0
    %2331 = vdwg.mxu0
    %2332 = vmatprep.subr.mxu0 0.0
    %2333 = vmatpush1.msra.mxu0 %v42
    %2334 = vmatprep.subr.mxu0 0.0
    %2335 = vmatpush1.msra.mxu0 %v43
    %2336 = vmatprep.subr.mxu0 0.0
    %2337 = vmatpush1.msra.mxu0 %v44
    %2338 = vmatprep.subr.mxu0 0.0
    %2339 = vmatpush1.msra.mxu0 %v45
    %2340 = vmatprep.subr.mxu0 0.0
    %2341 = vmatpush1.msra.mxu0 0.0
    %2342 = vmatprep.subr.mxu0 0.0
    %2343 = vmatpush1.msra.mxu0 0.0
    %2344 = vmatprep.subr.mxu0 0.0
    %2345 = vmatpush1.msra.mxu0 0.0
    %2346 = vmatprep.subr.mxu0 0.0
    %2347 = vmatpush1.msra.mxu0 0.0
    %2348 = vmatprep.subr.mxu0 0.0
    %2349 = vmatpush1.msra.mxu0 0.0
    %2350 = vmatprep.subr.mxu0 0.0
    %2351 = vmatpush1.msra.mxu0 0.0
    %2352 = vmatprep.subr.mxu0 0.0
    %2353 = vmatpush1.msra.mxu0 0.0
    %2354 = vmatprep.subr.mxu0 0.0
    %2355 = vmatpush1.msra.mxu0 0.0
    %2356 = vmatprep.subr.mxu0 0.0
    %2357 = vmatpush1.msra.mxu0 0.0
    %2358 = vmatprep.subr.mxu0 0.0
    %2359 = vmatpush1.msra.mxu0 0.0
    %2360 = vmatprep.subr.mxu0 0.0
    %2361 = vmatpush1.msra.mxu0 0.0
    %2362 = vmatprep.subr.mxu0 0.0
    %2363 = vmatpush1.msra.mxu0 0.0
    %2364 = vmatprep.subr.mxu0 0.0
    %2365 = vmatpush1.msra.mxu0 0.0
    %2366 = vmatprep.subr.mxu0 0.0
    %2367 = vmatpush1.msra.mxu0 0.0
    %2368 = vmatprep.subr.mxu0 0.0
    %2369 = vmatpush1.msra.mxu0 0.0
    %2370 = vmatprep.subr.mxu0 0.0
    %2371 = vmatpush1.msra.mxu0 0.0
    %2372 = vmatprep.subr.mxu0 0.0
    %2373 = vmatpush1.msra.mxu0 0.0
    %2374 = vmatprep.subr.mxu0 0.0
    %2375 = vmatpush1.msra.mxu0 0.0
    %2376 = vmatprep.subr.mxu0 0.0
    %2377 = vmatpush1.msra.mxu0 0.0
    %2378 = vmatprep.subr.mxu0 0.0
    %2379 = vmatpush1.msra.mxu0 0.0
    %2380 = vmatprep.subr.mxu0 0.0
    %2381 = vmatpush1.msra.mxu0 0.0
    %2382 = vmatprep.subr.mxu0 0.0
    %2383 = vmatpush1.msra.mxu0 0.0
    %2384 = vmatprep.subr.mxu0 0.0
    %2385 = vmatpush1.msra.mxu0 0.0
    %2386 = vmatprep.subr.mxu0 0.0
    %2387 = vmatpush1.msra.mxu0 0.0
    %2388 = vmatprep.subr.mxu0 0.0
    %2389 = vmatpush1.msra.mxu0 0.0
    %2390 = vmatprep.subr.mxu0 0.0
    %2391 = vmatpush1.msra.mxu0 0.0
    %2392 = vmatprep.subr.mxu0 0.0
    %2393 = vmatpush1.msra.mxu0 0.0
    %2394 = vmatprep.subr.mxu0 0.0
    %2395 = vmatpush1.msra.mxu0 0.0
    %2396 = vmatprep.mubr.f32.mxu0 0.0
    %2397 = vmatmul.mubr.f32.gmra.mrb[0].mxu0 %v2158
    %v2398 = vpop.f32.mrb[0].mxu0
    %v2399 = vadd.f32 %v373, %v2398
    %v2400 = vpop.f32.mrb[0].mxu0
    %2401 = vdwg.mxu0
    %v2403 = vrot.slane %v2399, 4
    %v2405 = vadd.f32 %v292, %v2403
    %v2406 = vxor.u32 %v2405, 2147483648
    %v2407 = vmul.f32 %v2406, 1.442695
    %v2408 = vpow.pop %v2407
    %v2409 = vadd.f32 %v2408, 1.0
    %v2410 = vrcp.pop %v2409
    %v2411 = vmul.f32 1.0, %v2410
    %2412 = vrot.lane.b32.xlu0 %v2403, 32
    %v2413 = vpop.permute.xlu0 %2412
    %v2415 = vmul.f32 %v2411, %v2413
    %2417 = vrot.lane.b32.xlu0 %v2415, 96
    %v2418 = vpop.permute.xlu0 %2417
    %v2420 = vadd.f32 %v292, %v2418
    %v2421 = vtanh.pop %v2420
    %v2423 = vrot.slane %v2421, 4
    %v2425 = vsub.f32 %v2156, %v2423
    %v2427 = vrot.slane %v2425, 4
    %2428 = vrot.lane.b32.xlu0 %v2427, 64
    %v2429 = vpop.permute.xlu0 %2428
    %v2431 = vmul.f32 %v2411, %v2429
    %2433 = vrot.lane.b32.xlu0 %v2431, 64
    %v2434 = vpop.permute.xlu0 %2433
    %v2436 = vadd.f32 %v2421, %v2434
    %v2438 = vrot.slane %v2436, 4
    %v2439 = vsel %vm208, %v2438, 0
    %2441 = vmatprep.subr.mxu0 0.0
    %2442 = vmatpush1.msra.mxu0 %v47
    %2443 = vmatprep.subr.mxu0 0.0
    %2444 = vmatpush1.msra.mxu0 %v48
    %2445 = vmatprep.subr.mxu0 0.0
    %2446 = vmatpush1.msra.mxu0 %v49
    %2447 = vmatprep.subr.mxu0 0.0
    %2448 = vmatpush1.msra.mxu0 %v50
    %2449 = vmatprep.subr.mxu0 0.0
    %2450 = vmatpush1.msra.mxu0 0.0
    %2451 = vmatprep.subr.mxu0 0.0
    %2452 = vmatpush1.msra.mxu0 0.0
    %2453 = vmatprep.subr.mxu0 0.0
    %2454 = vmatpush1.msra.mxu0 0.0
    %2455 = vmatprep.subr.mxu0 0.0
    %2456 = vmatpush1.msra.mxu0 0.0
    %2457 = vmatprep.subr.mxu0 0.0
    %2458 = vmatpush1.msra.mxu0 0.0
    %2459 = vmatprep.subr.mxu0 0.0
    %2460 = vmatpush1.msra.mxu0 0.0
    %2461 = vmatprep.subr.mxu0 0.0
    %2462 = vmatpush1.msra.mxu0 0.0
    %2463 = vmatprep.subr.mxu0 0.0
    %2464 = vmatpush1.msra.mxu0 0.0
    %2465 = vmatprep.subr.mxu0 0.0
    %2466 = vmatpush1.msra.mxu0 0.0
    %2467 = vmatprep.subr.mxu0 0.0
    %2468 = vmatpush1.msra.mxu0 0.0
    %2469 = vmatprep.subr.mxu0 0.0
    %2470 = vmatpush1.msra.mxu0 0.0
    %2471 = vmatprep.subr.mxu0 0.0
    %2472 = vmatpush1.msra.mxu0 0.0
    %2473 = vmatprep.subr.mxu0 0.0
    %2474 = vmatpush1.msra.mxu0 0.0
    %2475 = vmatprep.subr.mxu0 0.0
    %2476 = vmatpush1.msra.mxu0 0.0
    %2477 = vmatprep.subr.mxu0 0.0
    %2478 = vmatpush1.msra.mxu0 0.0
    %2479 = vmatprep.subr.mxu0 0.0
    %2480 = vmatpush1.msra.mxu0 0.0
    %2481 = vmatprep.subr.mxu0 0.0
    %2482 = vmatpush1.msra.mxu0 0.0
    %2483 = vmatprep.subr.mxu0 0.0
    %2484 = vmatpush1.msra.mxu0 0.0
    %2485 = vmatprep.subr.mxu0 0.0
    %2486 = vmatpush1.msra.mxu0 0.0
    %2487 = vmatprep.subr.mxu0 0.0
    %2488 = vmatpush1.msra.mxu0 0.0
    %2489 = vmatprep.subr.mxu0 0.0
    %2490 = vmatpush1.msra.mxu0 0.0
    %2491 = vmatprep.subr.mxu0 0.0
    %2492 = vmatpush1.msra.mxu0 0.0
    %2493 = vmatprep.subr.mxu0 0.0
    %2494 = vmatpush1.msra.mxu0 0.0
    %2495 = vmatprep.subr.mxu0 0.0
    %2496 = vmatpush1.msra.mxu0 0.0
    %2497 = vmatprep.subr.mxu0 0.0
    %2498 = vmatpush1.msra.mxu0 0.0
    %2499 = vmatprep.subr.mxu0 0.0
    %2500 = vmatpush1.msra.mxu0 0.0
    %2501 = vmatprep.subr.mxu0 0.0
    %2502 = vmatpush1.msra.mxu0 0.0
    %2503 = vmatprep.subr.mxu0 0.0
    %2504 = vmatpush1.msra.mxu0 0.0
    %2505 = vmatprep.mubr.f32.mxu0 0.0
    %2506 = vmatmul.mubr.f32.gmra.mrb[0].mxu0 %v2439
    %v2507 = vpop.f32.mrb[0].mxu0
    %v2508 = vadd.f32 %v479, %v2507
    %v2509 = vpop.f32.mrb[0].mxu0
    %2510 = vdwg.mxu0
    %v2511 = vadd.f32 %v2508, %v2329
    %v2512 = vxor.u32 %v2511, 2147483648
    %v2513 = vmul.f32 %v2512, 1.442695
    %v2514 = vpow.pop %v2513
    %v2515 = vadd.f32 %v2514, 1.0
    %v2516 = vrcp.pop %v2515
    %v2517 = vmul.f32 1.0, %v2516
    %2519 = vrot.lane.b32.xlu0 %v2329, 32
    %v2520 = vpop.permute.xlu0 %2519
    %v2522 = vmul.f32 %v2517, %v2520
    %2524 = vrot.lane.b32.xlu0 %v2522, 96
    %v2525 = vpop.permute.xlu0 %2524
    %v2527 = vadd.f32 %v2508, %v2525
    %v2528 = vtanh.pop %v2527
    %v2529 = vsub.f32 %v2258, %v2528
    %2531 = vrot.lane.b32.xlu0 %v2529, 64
    %v2532 = vpop.permute.xlu0 %2531
    %v2534 = vmul.f32 %v2517, %v2532
    %2536 = vrot.lane.b32.xlu0 %v2534, 64
    %v2537 = vpop.permute.xlu0 %2536
    %v2539 = vadd.f32 %v2528, %v2537
    %vm2540 = vcmask 261124
    %2541 = vst.msk [vmem:[#allocation5 - $0x4] sm:$0xf0] %vm2540, %v2436
    %s2542 = scalar_lea.vmem [#allocation5], 4
    %vm2543 = vcmask 257024
    %2544 = vst.msk [vmem:[%s2542] sm:$0xf] %vm2543, %v2539
    %v2545 = vrot.slane %v862, 4
    %v2547 = vrot.slane %v1421, 4
    %v2549 = vrot.slane %v1980, 4
    %v2552 = vrot.slane %v2539, 4
    %vm2554 = vcmask 1043456
    %v2555 = vsel %vm2554, %v581, %v2545
    %v2556 = vsel %vm2554, %v1140, %v2547
    %v2557 = vsel %vm2554, %v1699, %v2549
    %v2558 = vsel %vm2554, %v2258, %v2552
    %v2559 = vlaneseq
    %v2560 = vshrl.u32 %v2559, 7
    %v2561 = vsub.s32 0, %v2560
    %v2562 = vrot.slane %v65, %v2561
    %v2564 = vsel %vm208, %v2555, 0
    %v2567 = vsel %vm208, %v2556, 0
    %v2570 = vsel %vm208, %v2557, 0
    %v2573 = vsel %vm208, %v2558, 0
    %2575 = vmatprep.subr.mxu0 0.0
    %2576 = vmatpush1.msra.mxu0 %v57
    %2577 = vmatprep.subr.mxu0 0.0
    %2578 = vmatpush1.msra.mxu0 %v58
    %2579 = vmatprep.subr.mxu0 0.0
    %2580 = vmatpush1.msra.mxu0 %v59
    %2581 = vmatprep.subr.mxu0 0.0
    %2582 = vmatpush1.msra.mxu0 %v60
    %2583 = vmatprep.subr.mxu0 0.0
    %2584 = vmatpush1.msra.mxu0 0.0
    %2585 = vmatprep.subr.mxu0 0.0
    %2586 = vmatpush1.msra.mxu0 0.0
    %2587 = vmatprep.subr.mxu0 0.0
    %2588 = vmatpush1.msra.mxu0 0.0
    %2589 = vmatprep.subr.mxu0 0.0
    %2590 = vmatpush1.msra.mxu0 0.0
    %2591 = vmatprep.subr.mxu0 0.0
    %2592 = vmatpush1.msra.mxu0 0.0
    %2593 = vmatprep.subr.mxu0 0.0
    %2594 = vmatpush1.msra.mxu0 0.0
    %2595 = vmatprep.subr.mxu0 0.0
    %2596 = vmatpush1.msra.mxu0 0.0
    %2597 = vmatprep.subr.mxu0 0.0
    %2598 = vmatpush1.msra.mxu0 0.0
    %2599 = vmatprep.subr.mxu0 0.0
    %2600 = vmatpush1.msra.mxu0 0.0
    %2601 = vmatprep.subr.mxu0 0.0
    %2602 = vmatpush1.msra.mxu0 0.0
    %2603 = vmatprep.subr.mxu0 0.0
    %2604 = vmatpush1.msra.mxu0 0.0
    %2605 = vmatprep.subr.mxu0 0.0
    %2606 = vmatpush1.msra.mxu0 0.0
    %2607 = vmatprep.subr.mxu0 0.0
    %2608 = vmatpush1.msra.mxu0 0.0
    %2609 = vmatprep.subr.mxu0 0.0
    %2610 = vmatpush1.msra.mxu0 0.0
    %2611 = vmatprep.subr.mxu0 0.0
    %2612 = vmatpush1.msra.mxu0 0.0
    %2613 = vmatprep.subr.mxu0 0.0
    %2614 = vmatpush1.msra.mxu0 0.0
    %2615 = vmatprep.subr.mxu0 0.0
    %2616 = vmatpush1.msra.mxu0 0.0
    %2617 = vmatprep.subr.mxu0 0.0
    %2618 = vmatpush1.msra.mxu0 0.0
    %2619 = vmatprep.subr.mxu0 0.0
    %2620 = vmatpush1.msra.mxu0 0.0
    %2621 = vmatprep.subr.mxu0 0.0
    %2622 = vmatpush1.msra.mxu0 0.0
    %2623 = vmatprep.subr.mxu0 0.0
    %2624 = vmatpush1.msra.mxu0 0.0
    %2625 = vmatprep.subr.mxu0 0.0
    %2626 = vmatpush1.msra.mxu0 0.0
    %2627 = vmatprep.subr.mxu0 0.0
    %2628 = vmatpush1.msra.mxu0 0.0
    %2629 = vmatprep.subr.mxu0 0.0
    %2630 = vmatpush1.msra.mxu0 0.0
    %2631 = vmatprep.subr.mxu0 0.0
    %2632 = vmatpush1.msra.mxu0 0.0
    %2633 = vmatprep.subr.mxu0 0.0
    %2634 = vmatpush1.msra.mxu0 0.0
    %2635 = vmatprep.subr.mxu0 0.0
    %2636 = vmatpush1.msra.mxu0 0.0
    %2637 = vmatprep.subr.mxu0 0.0
    %2638 = vmatpush1.msra.mxu0 0.0
    %2639 = vmatprep.mubr.f32.mxu0 0.0
    %2640 = vmatmul.mubr.f32.gmra.mrb[0].mxu0 %v2564
    %v2641 = vpop.f32.mrb[0].mxu0
    %v2642 = vadd.f32 %v2562, %v2641
    %v2643 = vpop.f32.mrb[0].mxu0
    %2644 = vmatprep.mubr.f32.mxu0 0.0
    %2645 = vmatmul.mubr.f32.gmra.mrb[0].mxu0 %v2567
    %v2646 = vpop.f32.mrb[0].mxu0
    %v2647 = vadd.f32 %v2562, %v2646
    %v2648 = vpop.f32.mrb[0].mxu0
    %2649 = vmatprep.mubr.f32.mxu0 0.0
    %2650 = vmatmul.mubr.f32.gmra.mrb[0].mxu0 %v2570
    %v2651 = vpop.f32.mrb[0].mxu0
    %v2652 = vadd.f32 %v2562, %v2651
    %v2653 = vpop.f32.mrb[0].mxu0
    %2654 = vmatprep.mubr.f32.mxu0 0.0
    %2655 = vmatmul.mubr.f32.gmra.mrb[0].mxu0 %v2573
    %v2656 = vpop.f32.mrb[0].mxu0
    %v2657 = vadd.f32 %v2562, %v2656
    %v2658 = vpop.f32.mrb[0].mxu0
    %2659 = vdwg.mxu0
    %2660 = vst.msk [vmem:[%s5] sm:$0xff] %vm106, %v2642
    %2661 = vst.msk [vmem:[%s5 + $0x8] sm:$0xff] %vm106, %v2647
    %2662 = vst.msk [vmem:[%s5 + $0x10] sm:$0xff] %vm106, %v2652
    %2663 = vst.msk [vmem:[%s5 + $0x18] sm:$0xff] %vm106, %v2657
    // Predicated region
    $region26: #{seq2seq_decoder_forward.1} parent=1 // pred_check
      _
    $region27: #{seq2seq_decoder_forward.1} parent=1 // pred_check_branch
      %2665 = sbr.rel (0) target = $region29
    $region28: #{seq2seq_decoder_forward.1} parent=1 // pred_region
      _
    $region29: #{seq2seq_decoder_forward.1} parent=1 // pred_fallthru
      _
    // Predicated region
    $region30: #{seq2seq_decoder_forward.1} parent=1 // pred_check
      _
    $region31: #{seq2seq_decoder_forward.1} parent=1 // pred_check_branch
      %2667 = sbr.rel (0) target = $region33
    $region32: #{seq2seq_decoder_forward.1} parent=1 // pred_region
      %s2669 = ssub.s32 128, 128
      %2670 = vsyncadd [#allocation4], %s2669
      %s2671 = sshll.u32 [#allocation5], 4
      %s2672 = int_to_ptr.vmem [resolvable:$true] %s2671
      %2677 = dma.vmem_to_hbm [thread:$0]  %s2672, 128, %s6, [#allocation4], 64, 64, 4
    $region33: #{seq2seq_decoder_forward.1} parent=1 // pred_fallthru
      _
    // Predicated region
    $region34: #{seq2seq_decoder_forward.1} parent=1 // pred_check
      _
    $region35: #{seq2seq_decoder_forward.1} parent=1 // pred_check_branch
      %2679 = sbr.rel (0) target = $region37
    $region36: #{seq2seq_decoder_forward.1} parent=1 // pred_region
      _
    $region37: #{seq2seq_decoder_forward.1} parent=1 // pred_fallthru
      _
    // Predicated region
    $region38: #{seq2seq_decoder_forward.1} parent=1 // pred_check
      _
    $region39: #{seq2seq_decoder_forward.1} parent=1 // pred_check_branch
      %2681 = sbr.rel (0) target = $region41
    $region40: #{seq2seq_decoder_forward.1} parent=1 // pred_region
      %2682 = dma.done [#allocation4], 128
    $region41: #{seq2seq_decoder_forward.1} parent=1 // pred_fallthru
      _
    %2683 = vsyncpa [#allocation3], 1
    %2684 = vsyncpa [#allocation4], 1

</llo_original>
